<compile_context>
chip_gen: v6e
topology: v6e:2x2x1
jax: 0.10.0
libtpu: 0.0.40
codegen_flags: <defaults>
</compile_context>

<pallas_src>
import jax
import jax.numpy as jnp
from jax.experimental import pallas as pl
from jax.experimental.pallas import tpu as pltpu


_GELU_C = 0.7978845608028654  # sqrt(2/pi)


def _gelu_tanh(x):
    # ACT2FN["gelu_pytorch_tanh"]
    return 0.5 * x * (1.0 + jnp.tanh(_GELU_C * (x + 0.044715 * x * x * x)))


def _layer_norm(x, g, b, eps):
    mu = jnp.mean(x, axis=-1, keepdims=True)
    xc = x - mu
    var = jnp.mean(xc * xc, axis=-1, keepdims=True)
    return xc * jax.lax.rsqrt(var + eps) * g + b


# ----------------------------------------------------------------------------
# Fused encoder layer kernel: LN1 + MHA + residual + LN2 + MLP + residual.
# ----------------------------------------------------------------------------
def _make_encoder_layer_kernel(Bb, T, E, H, D, scale, eps, mxu_dtype):
    def mdot(a, b):
        return jnp.dot(a.astype(mxu_dtype), b.astype(mxu_dtype),
                       preferred_element_type=jnp.float32)

    def kernel(x_ref, g1_ref, b1_ref,
               wq_ref, bq_ref, wk_ref, bk_ref, wv_ref, bv_ref, wo_ref, bo_ref,
               g2_ref, b2_ref, w1_ref, bf1_ref, w2_ref, bf2_ref,
               out_ref):
        # (Bb, T, E) -> (Bb*T, E): fold batch into the matmul M dimension.
        x2d = x_ref[...].reshape(Bb * T, E).astype(jnp.float32)

        # ---- LayerNorm 1 ----
        h = _layer_norm(x2d, g1_ref[...], b1_ref[...], eps)

        # ---- q/k/v projections (M = Bb*T rows feeding the MXU) ----
        q = (mdot(h, wq_ref[...]) + bq_ref[...]) * scale
        k = mdot(h, wk_ref[...]) + bk_ref[...]
        v = mdot(h, wv_ref[...]) + bv_ref[...]

        # ---- multi-head attention, batched over Bb inside each head ----
        ctx_parts = []
        for hd in range(H):                       # static unroll (H small)
            lo = hd * D
            qh = q[:, lo:lo + D].reshape(Bb, T, D)
            kh = k[:, lo:lo + D].reshape(Bb, T, D)
            vh = v[:, lo:lo + D].reshape(Bb, T, D)
            # contract last dims directly (no kh.T / XLU transpose)
            s = jnp.einsum('btd,bsd->bts',
                           qh.astype(mxu_dtype), kh.astype(mxu_dtype),
                           preferred_element_type=jnp.float32)
            s = s - jnp.max(s, axis=-1, keepdims=True)
            p = jnp.exp(s)
            p = p * pl.reciprocal(jnp.sum(p, axis=-1, keepdims=True),
                                  approx=True)
            oh = jnp.einsum('bts,bsd->btd',
                            p.astype(mxu_dtype), vh.astype(mxu_dtype),
                            preferred_element_type=jnp.float32)
            ctx_parts.append(oh.reshape(Bb * T, D))
        # single lane-axis concat instead of H full-tile .at[].set copies
        ctx = jnp.concatenate(ctx_parts, axis=-1)            # (Bb*T, E)

        # ---- output projection + residual ----
        x2d = x2d + (mdot(ctx, wo_ref[...]) + bo_ref[...])

        # ---- LayerNorm 2 + MLP (gelu_pytorch_tanh) + residual ----
        h2 = _layer_norm(x2d, g2_ref[...], b2_ref[...], eps)
        m = _gelu_tanh(mdot(h2, w1_ref[...]) + bf1_ref[...])
        m = mdot(m, w2_ref[...]) + bf2_ref[...]
        y = x2d + m

        out_ref[...] = y.reshape(Bb, T, E).astype(out_ref.dtype)

    return kernel


def _pick_block_batch(B, T, target_rows=256):
    """Largest divisor of B with Bb*T <= target_rows, keeping >= 2 grid steps
    (megacore) when possible."""
    if B == 1:
        return 1
    cap = max(1, min(target_rows // max(T, 1), B // 2))
    best = 1
    for d in range(1, B + 1):
        if B % d == 0 and d <= cap:
            best = d
    return best


def siglip_encoder_layer(x, lp, num_heads, eps, mxu_dtype=jnp.float32,
                         block_batch=None):
    """x: [B, T, E] float32.  lp: dict of torch-layout (out, in) weights and
    (dim,) biases for ln1 / q / k / v / out_proj / ln2 / fc1 / fc2."""
    B, T, E = x.shape
    H = num_heads
    D = E // H
    assert H * D == E
    scale = D ** (-0.5)
    Bb = block_batch if block_batch is not None else _pick_block_batch(B, T)
    assert B % Bb == 0
    I = lp["fc1_w"].shape[0]

    cast = (lambda a: a.astype(mxu_dtype)) if mxu_dtype != jnp.float32 else (lambda a: a)
    row = lambda a: a.reshape(1, -1)

    # Glue: torch layout (out, in) -> (in, out); biases / LN params -> (1, dim).
    wq, wk, wv, wo = cast(lp["wq"].T), cast(lp["wk"].T), cast(lp["wv"].T), cast(lp["wo"].T)
    w1, w2 = cast(lp["fc1_w"].T), cast(lp["fc2_w"].T)
    bq, bk, bv, bo = row(lp["bq"]), row(lp["bk"]), row(lp["bv"]), row(lp["bo"])
    bf1, bf2 = row(lp["fc1_b"]), row(lp["fc2_b"])
    g1, b1 = row(lp["ln1_g"]), row(lp["ln1_b"])
    g2, b2 = row(lp["ln2_g"]), row(lp["ln2_b"])

    kernel = _make_encoder_layer_kernel(Bb, T, E, H, D, scale, eps, mxu_dtype)

    full = lambda shape: pl.BlockSpec(shape, lambda b: (0, 0))

    return pl.pallas_call(
        kernel,
        out_shape=jax.ShapeDtypeStruct((B, T, E), x.dtype),
        grid_spec=pltpu.PrefetchScalarGridSpec(
            num_scalar_prefetch=0,
            grid=(B // Bb,),
            in_specs=[
                pl.BlockSpec((Bb, T, E), lambda b: (b, 0, 0)),  # x
                full((1, E)), full((1, E)),                     # ln1 g/b
                full((E, E)), full((1, E)),                     # q
                full((E, E)), full((1, E)),                     # k
                full((E, E)), full((1, E)),                     # v
                full((E, E)), full((1, E)),                     # out proj
                full((1, E)), full((1, E)),                     # ln2 g/b
                full((E, I)), full((1, I)),                     # fc1
                full((I, E)), full((1, E)),                     # fc2
            ],
            out_specs=pl.BlockSpec((Bb, T, E), lambda b: (b, 0, 0)),
        ),
        compiler_params=pltpu.CompilerParams(
            dimension_semantics=("parallel",),
            vmem_limit_bytes=48 * 1024 * 1024),
    )(x, g1, b1, wq, bq, wk, bk, wv, bv, wo, bo, g2, b2, w1, bf1, w2, bf2)


# ----------------------------------------------------------------------------
# Final LayerNorm + last-token pooled head projection (fused).
# ----------------------------------------------------------------------------
def _make_final_kernel(B, T, E, eps):
    def kernel(x_ref, g_ref, b_ref, wh_ref, bh_ref, lh_ref, pool_ref):
        x2d = x_ref[...].reshape(B * T, E).astype(jnp.float32)
        ln = _layer_norm(x2d, g_ref[...], b_ref[...], eps)
        lh_ref[...] = ln.reshape(B, T, E).astype(lh_ref.dtype)

        # pooled_output = last_hidden_state[:, -1, :] @ W_head.T + b_head
        pooled_in = ln.reshape(B, T, E)[:, T - 1:T, :].reshape(B, E)
        pooled = jnp.dot(pooled_in, wh_ref[...],
                         preferred_element_type=jnp.float32) + bh_ref[...]
        pool_ref[...] = pooled.astype(pool_ref.dtype)

    return kernel


def siglip_final_ln_head(x, g, b, head_w, head_b, eps):
    B, T, E = x.shape
    kernel = _make_final_kernel(B, T, E, eps)
    full2 = lambda shape: pl.BlockSpec(shape, lambda i: (0, 0))
    return pl.pallas_call(
        kernel,
        out_shape=(jax.ShapeDtypeStruct((B, T, E), x.dtype),
                   jax.ShapeDtypeStruct((B, E), x.dtype)),
        grid_spec=pltpu.PrefetchScalarGridSpec(
            num_scalar_prefetch=0,
            grid=(1,),
            in_specs=[
                pl.BlockSpec((B, T, E), lambda i: (0, 0, 0)),
                full2((1, E)), full2((1, E)),      # final LN g/b
                full2((E, E)), full2((1, E)),      # head W/b
            ],
            out_specs=[pl.BlockSpec((B, T, E), lambda i: (0, 0, 0)),
                       pl.BlockSpec((B, E), lambda i: (0, 0))],
        ),
    )(x, g.reshape(1, E), b.reshape(1, E), head_w.T, head_b.reshape(1, E))


# ----------------------------------------------------------------------------
# Full SiglipTextTransformer forward.
# ----------------------------------------------------------------------------
def siglip_text_transformer(input_ids, params, *, num_heads, eps=1e-6,
                            mxu_dtype=jnp.float32, block_batch=None):
    B, T = input_ids.shape
    # Embedding gather is data-dependent; done with jnp.take in the wrapper.
    # TODO(synk): move the embedding gather into a scalar-prefetch Pallas kernel.
    tok = jnp.take(params["token_embedding"], input_ids, axis=0)
    pos = params["position_embedding"][:T]
    x = (tok + pos[None, :, :]).astype(jnp.float32)

    for lp in params["layers"]:
        x = siglip_encoder_layer(x, lp, num_heads, eps,
                                 mxu_dtype=mxu_dtype, block_batch=block_batch)

    last_hidden, pooled = siglip_final_ln_head(
        x, params["final_ln_g"], params["final_ln_b"],
        params["head_w"], params["head_b"], eps)
    return last_hidden, pooled


# ----------------------------------------------------------------------------
# Pure-JAX reference mirroring the PyTorch forward (masks=None, eval mode).
# ----------------------------------------------------------------------------
def siglip_text_transformer_ref(input_ids, params, *, num_heads, eps=1e-6):
    B, T = input_ids.shape
    E = params["token_embedding"].shape[1]
    H = num_heads
    D = E // H
    scale = D ** (-0.5)

    tok = jnp.take(params["token_embedding"], input_ids, axis=0)
    pos = params["position_embedding"][:T]
    x = tok + pos[None, :, :]

    def ln(v, g, b):
        mu = jnp.mean(v, -1, keepdims=True)
        var = jnp.mean((v - mu) ** 2, -1, keepdims=True)
        return (v - mu) / jnp.sqrt(var + eps) * g + b

    def lin(v, w, b):  # torch layout (out, in)
        return jnp.einsum('...i,oi->...o', v, w) + b

    for lp in params["layers"]:
        h = ln(x, lp["ln1_g"], lp["ln1_b"])
        q = lin(h, lp["wq"], lp["bq"]) * scale
        k = lin(h, lp["wk"], lp["bk"])
        v = lin(h, lp["wv"], lp["bv"])
        shape = lambda t: t.reshape(B, T, H, D).transpose(0, 2, 1, 3)
        q, k, v = shape(q), shape(k), shape(v)
        s = jnp.einsum('bhtd,bhsd->bhts', q, k)
        p = jax.nn.softmax(s, axis=-1)
        o = jnp.einsum('bhts,bhsd->bhtd', p, v)
        o = o.transpose(0, 2, 1, 3).reshape(B, T, E)
        x = x + lin(o, lp["wo"], lp["bo"])
        h = ln(x, lp["ln2_g"], lp["ln2_b"])
        m = _gelu_tanh(lin(h, lp["fc1_w"], lp["fc1_b"]))
        x = x + lin(m, lp["fc2_w"], lp["fc2_b"])

    lh = ln(x, params["final_ln_g"], params["final_ln_b"])
    pooled = lin(lh[:, -1, :], params["head_w"], params["head_b"])
    return lh, pooled


if __name__ == "__main__":
    # Small config consistent with Siglip text: hidden=32, heads=4, mlp=64,
    # 2 layers, seq=8, batch=4 (exercises both batch-folding and a 2-step grid).
    B, T, E, H, I, L = 4, 8, 32, 4, 64, 2
    VOCAB, MAX_POS = 64, 16
    eps = 1e-6

    key = jax.random.PRNGKey(0)
    keys = iter(jax.random.split(key, 64))
    init = lambda k, shape, s=0.02: (s * jax.random.normal(k, shape)).astype(jnp.float32)

    params = {
        "token_embedding": init(next(keys), (VOCAB, E), 1.0),
        "position_embedding": init(next(keys), (MAX_POS, E), 1.0),
        "final_ln_g": jnp.ones((E,), jnp.float32) + init(next(keys), (E,)),
        "final_ln_b": init(next(keys), (E,)),
        "head_w": init(next(keys), (E, E)),
        "head_b": init(next(keys), (E,)),
        "layers": [],
    }
    for _ in range(L):
        params["layers"].append({
            "ln1_g": jnp.ones((E,), jnp.float32) + init(next(keys), (E,)),
            "ln1_b": init(next(keys), (E,)),
            "wq": init(next(keys), (E, E)), "bq": init(next(keys), (E,)),
            "wk": init(next(keys), (E, E)), "bk": init(next(keys), (E,)),
            "wv": init(next(keys), (E, E)), "bv": init(next(keys), (E,)),
            "wo": init(next(keys), (E, E)), "bo": init(next(keys), (E,)),
            "ln2_g": jnp.ones((E,), jnp.float32) + init(next(keys), (E,)),
            "ln2_b": init(next(keys), (E,)),
            "fc1_w": init(next(keys), (I, E)), "fc1_b": init(next(keys), (I,)),
            "fc2_w": init(next(keys), (E, I)), "fc2_b": init(next(keys), (E,)),
        })

    input_ids = jax.random.randint(next(keys), (B, T), 0, VOCAB)

    lh, pooled = siglip_text_transformer(input_ids, params, num_heads=H, eps=eps)
    lh, pooled = jax.block_until_ready((lh, pooled))

    lh_ref, pooled_ref = siglip_text_transformer_ref(
        input_ids, params, num_heads=H, eps=eps)

    assert lh.shape == (B, T, E) and pooled.shape == (B, E)
    # approx reciprocal in softmax -> allow ~1e-3-level tolerance
    assert jnp.allclose(lh, lh_ref, atol=2e-3, rtol=2e-3), "last_hidden mismatch"
    assert jnp.allclose(pooled, pooled_ref, atol=2e-3, rtol=2e-3), "pooled mismatch"

    print("KERNEL_OK")
</pallas_src>

<mosaic_0001>
module attributes {stable_mosaic.version = 11 : i64} {
  func.func @kernel(%arg0: i32, %arg1: memref<2x8x32xf32, #tpu.memory_space<vmem>>, %arg2: memref<1x32xf32, #tpu.memory_space<vmem>>, %arg3: memref<1x32xf32, #tpu.memory_space<vmem>>, %arg4: memref<32x32xf32, #tpu.memory_space<vmem>>, %arg5: memref<1x32xf32, #tpu.memory_space<vmem>>, %arg6: memref<32x32xf32, #tpu.memory_space<vmem>>, %arg7: memref<1x32xf32, #tpu.memory_space<vmem>>, %arg8: memref<32x32xf32, #tpu.memory_space<vmem>>, %arg9: memref<1x32xf32, #tpu.memory_space<vmem>>, %arg10: memref<32x32xf32, #tpu.memory_space<vmem>>, %arg11: memref<1x32xf32, #tpu.memory_space<vmem>>, %arg12: memref<1x32xf32, #tpu.memory_space<vmem>>, %arg13: memref<1x32xf32, #tpu.memory_space<vmem>>, %arg14: memref<32x64xf32, #tpu.memory_space<vmem>>, %arg15: memref<1x64xf32, #tpu.memory_space<vmem>>, %arg16: memref<64x32xf32, #tpu.memory_space<vmem>>, %arg17: memref<1x32xf32, #tpu.memory_space<vmem>>, %arg18: memref<2x8x32xf32, #tpu.memory_space<vmem>>) attributes {dimension_semantics = [#tpu.dimension_semantics<parallel>], iteration_bounds = array<i64: 2>, scalar_prefetch = 0 : i64, scratch_operands = 0 : i64, tpu.core_type = #tpu.core_type<tc>, window_params = [{transform_indices = @transform_0, window_bounds = array<i64: 2, 8, 32>}, {pipeline_mode = #tpu.pipeline_mode<synchronous>, transform_indices = @transform_1, window_bounds = array<i64: 1, 32>}, {pipeline_mode = #tpu.pipeline_mode<synchronous>, transform_indices = @transform_2, window_bounds = array<i64: 1, 32>}, {pipeline_mode = #tpu.pipeline_mode<synchronous>, transform_indices = @transform_3, window_bounds = array<i64: 32, 32>}, {pipeline_mode = #tpu.pipeline_mode<synchronous>, transform_indices = @transform_4, window_bounds = array<i64: 1, 32>}, {pipeline_mode = #tpu.pipeline_mode<synchronous>, transform_indices = @transform_5, window_bounds = array<i64: 32, 32>}, {pipeline_mode = #tpu.pipeline_mode<synchronous>, transform_indices = @transform_6, window_bounds = array<i64: 1, 32>}, {pipeline_mode = #tpu.pipeline_mode<synchronous>, transform_indices = @transform_7, window_bounds = array<i64: 32, 32>}, {pipeline_mode = #tpu.pipeline_mode<synchronous>, transform_indices = @transform_8, window_bounds = array<i64: 1, 32>}, {pipeline_mode = #tpu.pipeline_mode<synchronous>, transform_indices = @transform_9, window_bounds = array<i64: 32, 32>}, {pipeline_mode = #tpu.pipeline_mode<synchronous>, transform_indices = @transform_10, window_bounds = array<i64: 1, 32>}, {pipeline_mode = #tpu.pipeline_mode<synchronous>, transform_indices = @transform_11, window_bounds = array<i64: 1, 32>}, {pipeline_mode = #tpu.pipeline_mode<synchronous>, transform_indices = @transform_12, window_bounds = array<i64: 1, 32>}, {pipeline_mode = #tpu.pipeline_mode<synchronous>, transform_indices = @transform_13, window_bounds = array<i64: 32, 64>}, {pipeline_mode = #tpu.pipeline_mode<synchronous>, transform_indices = @transform_14, window_bounds = array<i64: 1, 64>}, {pipeline_mode = #tpu.pipeline_mode<synchronous>, transform_indices = @transform_15, window_bounds = array<i64: 64, 32>}, {pipeline_mode = #tpu.pipeline_mode<synchronous>, transform_indices = @transform_16, window_bounds = array<i64: 1, 32>}, {transform_indices = @transform_17, window_bounds = array<i64: 2, 8, 32>}]} {
    %c0 = arith.constant 0 : index
    %c0_0 = arith.constant 0 : index
    %c0_1 = arith.constant 0 : index
    %0 = vector.load %arg1[%c0, %c0_0, %c0_1] : memref<2x8x32xf32, #tpu.memory_space<vmem>>, vector<2x8x32xf32>
    %1 = vector.shape_cast %0 : vector<2x8x32xf32> to vector<16x32xf32>
    %c0_2 = arith.constant 0 : index
    %c0_3 = arith.constant 0 : index
    %2 = vector.load %arg2[%c0_2, %c0_3] : memref<1x32xf32, #tpu.memory_space<vmem>>, vector<1x32xf32>
    %c0_4 = arith.constant 0 : index
    %c0_5 = arith.constant 0 : index
    %3 = vector.load %arg3[%c0_4, %c0_5] : memref<1x32xf32, #tpu.memory_space<vmem>>, vector<1x32xf32>
    %cst = arith.constant dense<0.000000e+00> : vector<16xf32>
    %4 = vector.multi_reduction <add>, %1, %cst [1] : vector<16x32xf32> to vector<16xf32>
    %5 = vector.shape_cast %4 : vector<16xf32> to vector<16x1xf32>
    %cst_6 = arith.constant 3.200000e+01 : f32
    %6 = vector.broadcast %cst_6 : f32 to vector<16x1xf32>
    %7 = arith.divf %5, %6 : vector<16x1xf32>
    %8 = vector.broadcast %7 : vector<16x1xf32> to vector<16x32xf32>
    %9 = arith.subf %1, %8 : vector<16x32xf32>
    %10 = arith.mulf %9, %9 : vector<16x32xf32>
    %cst_7 = arith.constant dense<0.000000e+00> : vector<16xf32>
    %11 = vector.multi_reduction <add>, %10, %cst_7 [1] : vector<16x32xf32> to vector<16xf32>
    %12 = vector.shape_cast %11 : vector<16xf32> to vector<16x1xf32>
    %cst_8 = arith.constant 3.200000e+01 : f32
    %13 = vector.broadcast %cst_8 : f32 to vector<16x1xf32>
    %14 = arith.divf %12, %13 : vector<16x1xf32>
    %cst_9 = arith.constant 9.99999997E-7 : f32
    %15 = vector.broadcast %cst_9 : f32 to vector<16x1xf32>
    %16 = arith.addf %14, %15 : vector<16x1xf32>
    %17 = math.rsqrt %16 : vector<16x1xf32>
    %18 = vector.broadcast %17 : vector<16x1xf32> to vector<16x32xf32>
    %19 = arith.mulf %9, %18 : vector<16x32xf32>
    %20 = vector.broadcast %2 : vector<1x32xf32> to vector<16x32xf32>
    %21 = arith.mulf %19, %20 : vector<16x32xf32>
    %22 = vector.broadcast %3 : vector<1x32xf32> to vector<16x32xf32>
    %23 = arith.addf %21, %22 : vector<16x32xf32>
    %c0_10 = arith.constant 0 : index
    %c0_11 = arith.constant 0 : index
    %24 = vector.load %arg4[%c0_10, %c0_11] : memref<32x32xf32, #tpu.memory_space<vmem>>, vector<32x32xf32>
    %cst_12 = arith.constant dense<0.000000e+00> : vector<16x32xf32>
    %25 = tpu.matmul %23, %24, %cst_12 {dimension_numbers = #tpu.dot_dimension_numbers<[1], [0], [0], [1], [0, 0, 1, 1], [], []>} : vector<16x32xf32>, vector<32x32xf32>, vector<16x32xf32> -> vector<16x32xf32>
    %c0_13 = arith.constant 0 : index
    %c0_14 = arith.constant 0 : index
    %26 = vector.load %arg5[%c0_13, %c0_14] : memref<1x32xf32, #tpu.memory_space<vmem>>, vector<1x32xf32>
    %27 = vector.broadcast %26 : vector<1x32xf32> to vector<16x32xf32>
    %28 = arith.addf %25, %27 : vector<16x32xf32>
    %cst_15 = arith.constant 0.353553385 : f32
    %29 = vector.broadcast %cst_15 : f32 to vector<16x32xf32>
    %30 = arith.mulf %28, %29 : vector<16x32xf32>
    %c0_16 = arith.constant 0 : index
    %c0_17 = arith.constant 0 : index
    %31 = vector.load %arg6[%c0_16, %c0_17] : memref<32x32xf32, #tpu.memory_space<vmem>>, vector<32x32xf32>
    %cst_18 = arith.constant dense<0.000000e+00> : vector<16x32xf32>
    %32 = tpu.matmul %23, %31, %cst_18 {dimension_numbers = #tpu.dot_dimension_numbers<[1], [0], [0], [1], [0, 0, 1, 1], [], []>} : vector<16x32xf32>, vector<32x32xf32>, vector<16x32xf32> -> vector<16x32xf32>
    %c0_19 = arith.constant 0 : index
    %c0_20 = arith.constant 0 : index
    %33 = vector.load %arg7[%c0_19, %c0_20] : memref<1x32xf32, #tpu.memory_space<vmem>>, vector<1x32xf32>
    %34 = vector.broadcast %33 : vector<1x32xf32> to vector<16x32xf32>
    %35 = arith.addf %32, %34 : vector<16x32xf32>
    %c0_21 = arith.constant 0 : index
    %c0_22 = arith.constant 0 : index
    %36 = vector.load %arg8[%c0_21, %c0_22] : memref<32x32xf32, #tpu.memory_space<vmem>>, vector<32x32xf32>
    %cst_23 = arith.constant dense<0.000000e+00> : vector<16x32xf32>
    %37 = tpu.matmul %23, %36, %cst_23 {dimension_numbers = #tpu.dot_dimension_numbers<[1], [0], [0], [1], [0, 0, 1, 1], [], []>} : vector<16x32xf32>, vector<32x32xf32>, vector<16x32xf32> -> vector<16x32xf32>
    %c0_24 = arith.constant 0 : index
    %c0_25 = arith.constant 0 : index
    %38 = vector.load %arg9[%c0_24, %c0_25] : memref<1x32xf32, #tpu.memory_space<vmem>>, vector<1x32xf32>
    %39 = vector.broadcast %38 : vector<1x32xf32> to vector<16x32xf32>
    %40 = arith.addf %37, %39 : vector<16x32xf32>
    %41 = vector.extract_strided_slice %30 {offsets = [0, 0], sizes = [16, 8], strides = [1, 1]} : vector<16x32xf32> to vector<16x8xf32>
    %42 = vector.shape_cast %41 : vector<16x8xf32> to vector<2x8x8xf32>
    %43 = vector.extract_strided_slice %35 {offsets = [0, 0], sizes = [16, 8], strides = [1, 1]} : vector<16x32xf32> to vector<16x8xf32>
    %44 = vector.shape_cast %43 : vector<16x8xf32> to vector<2x8x8xf32>
    %45 = vector.extract_strided_slice %40 {offsets = [0, 0], sizes = [16, 8], strides = [1, 1]} : vector<16x32xf32> to vector<16x8xf32>
    %46 = vector.shape_cast %45 : vector<16x8xf32> to vector<2x8x8xf32>
    "tpu.trace_start"() <{level = 10 : i32, message = "btd,bsd->bts"}> : () -> ()
    %cst_26 = arith.constant dense<0.000000e+00> : vector<2x8x8xf32>
    %47 = tpu.matmul %42, %44, %cst_26 {dimension_numbers = #tpu.dot_dimension_numbers<[2], [2], [1], [1], [0, 0, 0, 1, 1, 1], [0], [0]>} : vector<2x8x8xf32>, vector<2x8x8xf32>, vector<2x8x8xf32> -> vector<2x8x8xf32>
    "tpu.trace_stop"() : () -> ()
    %cst_27 = arith.constant dense<0xFF800000> : vector<2x8xf32>
    %48 = vector.multi_reduction <maximumf>, %47, %cst_27 [2] : vector<2x8x8xf32> to vector<2x8xf32>
    %49 = vector.shape_cast %48 : vector<2x8xf32> to vector<2x8x1xf32>
    %50 = vector.broadcast %49 : vector<2x8x1xf32> to vector<2x8x8xf32>
    %51 = arith.subf %47, %50 : vector<2x8x8xf32>
    %52 = math.exp %51 : vector<2x8x8xf32>
    %cst_28 = arith.constant dense<0.000000e+00> : vector<2x8xf32>
    %53 = vector.multi_reduction <add>, %52, %cst_28 [2] : vector<2x8x8xf32> to vector<2x8xf32>
    %54 = vector.shape_cast %53 : vector<2x8xf32> to vector<2x8x1xf32>
    %55 = tpu.reciprocal %54 {approx = true} : vector<2x8x1xf32> -> vector<2x8x1xf32>
    %56 = vector.broadcast %55 : vector<2x8x1xf32> to vector<2x8x8xf32>
    %57 = arith.mulf %52, %56 : vector<2x8x8xf32>
    "tpu.trace_start"() <{level = 10 : i32, message = "bts,bsd->btd"}> : () -> ()
    %cst_29 = arith.constant dense<0.000000e+00> : vector<2x8x8xf32>
    %58 = tpu.matmul %57, %46, %cst_29 {dimension_numbers = #tpu.dot_dimension_numbers<[2], [1], [1], [2], [0, 0, 0, 1, 1, 2], [0], [0]>} : vector<2x8x8xf32>, vector<2x8x8xf32>, vector<2x8x8xf32> -> vector<2x8x8xf32>
    "tpu.trace_stop"() : () -> ()
    %59 = vector.shape_cast %58 : vector<2x8x8xf32> to vector<16x8xf32>
    %60 = vector.extract_strided_slice %30 {offsets = [0, 8], sizes = [16, 8], strides = [1, 1]} : vector<16x32xf32> to vector<16x8xf32>
    %61 = vector.shape_cast %60 : vector<16x8xf32> to vector<2x8x8xf32>
    %62 = vector.extract_strided_slice %35 {offsets = [0, 8], sizes = [16, 8], strides = [1, 1]} : vector<16x32xf32> to vector<16x8xf32>
    %63 = vector.shape_cast %62 : vector<16x8xf32> to vector<2x8x8xf32>
    %64 = vector.extract_strided_slice %40 {offsets = [0, 8], sizes = [16, 8], strides = [1, 1]} : vector<16x32xf32> to vector<16x8xf32>
    %65 = vector.shape_cast %64 : vector<16x8xf32> to vector<2x8x8xf32>
    "tpu.trace_start"() <{level = 10 : i32, message = "btd,bsd->bts"}> : () -> ()
    %cst_30 = arith.constant dense<0.000000e+00> : vector<2x8x8xf32>
    %66 = tpu.matmul %61, %63, %cst_30 {dimension_numbers = #tpu.dot_dimension_numbers<[2], [2], [1], [1], [0, 0, 0, 1, 1, 1], [0], [0]>} : vector<2x8x8xf32>, vector<2x8x8xf32>, vector<2x8x8xf32> -> vector<2x8x8xf32>
    "tpu.trace_stop"() : () -> ()
    %cst_31 = arith.constant dense<0xFF800000> : vector<2x8xf32>
    %67 = vector.multi_reduction <maximumf>, %66, %cst_31 [2] : vector<2x8x8xf32> to vector<2x8xf32>
    %68 = vector.shape_cast %67 : vector<2x8xf32> to vector<2x8x1xf32>
    %69 = vector.broadcast %68 : vector<2x8x1xf32> to vector<2x8x8xf32>
    %70 = arith.subf %66, %69 : vector<2x8x8xf32>
    %71 = math.exp %70 : vector<2x8x8xf32>
    %cst_32 = arith.constant dense<0.000000e+00> : vector<2x8xf32>
    %72 = vector.multi_reduction <add>, %71, %cst_32 [2] : vector<2x8x8xf32> to vector<2x8xf32>
    %73 = vector.shape_cast %72 : vector<2x8xf32> to vector<2x8x1xf32>
    %74 = tpu.reciprocal %73 {approx = true} : vector<2x8x1xf32> -> vector<2x8x1xf32>
    %75 = vector.broadcast %74 : vector<2x8x1xf32> to vector<2x8x8xf32>
    %76 = arith.mulf %71, %75 : vector<2x8x8xf32>
    "tpu.trace_start"() <{level = 10 : i32, message = "bts,bsd->btd"}> : () -> ()
    %cst_33 = arith.constant dense<0.000000e+00> : vector<2x8x8xf32>
    %77 = tpu.matmul %76, %65, %cst_33 {dimension_numbers = #tpu.dot_dimension_numbers<[2], [1], [1], [2], [0, 0, 0, 1, 1, 2], [0], [0]>} : vector<2x8x8xf32>, vector<2x8x8xf32>, vector<2x8x8xf32> -> vector<2x8x8xf32>
    "tpu.trace_stop"() : () -> ()
    %78 = vector.shape_cast %77 : vector<2x8x8xf32> to vector<16x8xf32>
    %79 = vector.extract_strided_slice %30 {offsets = [0, 16], sizes = [16, 8], strides = [1, 1]} : vector<16x32xf32> to vector<16x8xf32>
    %80 = vector.shape_cast %79 : vector<16x8xf32> to vector<2x8x8xf32>
    %81 = vector.extract_strided_slice %35 {offsets = [0, 16], sizes = [16, 8], strides = [1, 1]} : vector<16x32xf32> to vector<16x8xf32>
    %82 = vector.shape_cast %81 : vector<16x8xf32> to vector<2x8x8xf32>
    %83 = vector.extract_strided_slice %40 {offsets = [0, 16], sizes = [16, 8], strides = [1, 1]} : vector<16x32xf32> to vector<16x8xf32>
    %84 = vector.shape_cast %83 : vector<16x8xf32> to vector<2x8x8xf32>
    "tpu.trace_start"() <{level = 10 : i32, message = "btd,bsd->bts"}> : () -> ()
    %cst_34 = arith.constant dense<0.000000e+00> : vector<2x8x8xf32>
    %85 = tpu.matmul %80, %82, %cst_34 {dimension_numbers = #tpu.dot_dimension_numbers<[2], [2], [1], [1], [0, 0, 0, 1, 1, 1], [0], [0]>} : vector<2x8x8xf32>, vector<2x8x8xf32>, vector<2x8x8xf32> -> vector<2x8x8xf32>
    "tpu.trace_stop"() : () -> ()
    %cst_35 = arith.constant dense<0xFF800000> : vector<2x8xf32>
    %86 = vector.multi_reduction <maximumf>, %85, %cst_35 [2] : vector<2x8x8xf32> to vector<2x8xf32>
    %87 = vector.shape_cast %86 : vector<2x8xf32> to vector<2x8x1xf32>
    %88 = vector.broadcast %87 : vector<2x8x1xf32> to vector<2x8x8xf32>
    %89 = arith.subf %85, %88 : vector<2x8x8xf32>
    %90 = math.exp %89 : vector<2x8x8xf32>
    %cst_36 = arith.constant dense<0.000000e+00> : vector<2x8xf32>
    %91 = vector.multi_reduction <add>, %90, %cst_36 [2] : vector<2x8x8xf32> to vector<2x8xf32>
    %92 = vector.shape_cast %91 : vector<2x8xf32> to vector<2x8x1xf32>
    %93 = tpu.reciprocal %92 {approx = true} : vector<2x8x1xf32> -> vector<2x8x1xf32>
    %94 = vector.broadcast %93 : vector<2x8x1xf32> to vector<2x8x8xf32>
    %95 = arith.mulf %90, %94 : vector<2x8x8xf32>
    "tpu.trace_start"() <{level = 10 : i32, message = "bts,bsd->btd"}> : () -> ()
    %cst_37 = arith.constant dense<0.000000e+00> : vector<2x8x8xf32>
    %96 = tpu.matmul %95, %84, %cst_37 {dimension_numbers = #tpu.dot_dimension_numbers<[2], [1], [1], [2], [0, 0, 0, 1, 1, 2], [0], [0]>} : vector<2x8x8xf32>, vector<2x8x8xf32>, vector<2x8x8xf32> -> vector<2x8x8xf32>
    "tpu.trace_stop"() : () -> ()
    %97 = vector.shape_cast %96 : vector<2x8x8xf32> to vector<16x8xf32>
    %98 = vector.extract_strided_slice %30 {offsets = [0, 24], sizes = [16, 8], strides = [1, 1]} : vector<16x32xf32> to vector<16x8xf32>
    %99 = vector.shape_cast %98 : vector<16x8xf32> to vector<2x8x8xf32>
    %100 = vector.extract_strided_slice %35 {offsets = [0, 24], sizes = [16, 8], strides = [1, 1]} : vector<16x32xf32> to vector<16x8xf32>
    %101 = vector.shape_cast %100 : vector<16x8xf32> to vector<2x8x8xf32>
    %102 = vector.extract_strided_slice %40 {offsets = [0, 24], sizes = [16, 8], strides = [1, 1]} : vector<16x32xf32> to vector<16x8xf32>
    %103 = vector.shape_cast %102 : vector<16x8xf32> to vector<2x8x8xf32>
    "tpu.trace_start"() <{level = 10 : i32, message = "btd,bsd->bts"}> : () -> ()
    %cst_38 = arith.constant dense<0.000000e+00> : vector<2x8x8xf32>
    %104 = tpu.matmul %99, %101, %cst_38 {dimension_numbers = #tpu.dot_dimension_numbers<[2], [2], [1], [1], [0, 0, 0, 1, 1, 1], [0], [0]>} : vector<2x8x8xf32>, vector<2x8x8xf32>, vector<2x8x8xf32> -> vector<2x8x8xf32>
    "tpu.trace_stop"() : () -> ()
    %cst_39 = arith.constant dense<0xFF800000> : vector<2x8xf32>
    %105 = vector.multi_reduction <maximumf>, %104, %cst_39 [2] : vector<2x8x8xf32> to vector<2x8xf32>
    %106 = vector.shape_cast %105 : vector<2x8xf32> to vector<2x8x1xf32>
    %107 = vector.broadcast %106 : vector<2x8x1xf32> to vector<2x8x8xf32>
    %108 = arith.subf %104, %107 : vector<2x8x8xf32>
    %109 = math.exp %108 : vector<2x8x8xf32>
    %cst_40 = arith.constant dense<0.000000e+00> : vector<2x8xf32>
    %110 = vector.multi_reduction <add>, %109, %cst_40 [2] : vector<2x8x8xf32> to vector<2x8xf32>
    %111 = vector.shape_cast %110 : vector<2x8xf32> to vector<2x8x1xf32>
    %112 = tpu.reciprocal %111 {approx = true} : vector<2x8x1xf32> -> vector<2x8x1xf32>
    %113 = vector.broadcast %112 : vector<2x8x1xf32> to vector<2x8x8xf32>
    %114 = arith.mulf %109, %113 : vector<2x8x8xf32>
    "tpu.trace_start"() <{level = 10 : i32, message = "bts,bsd->btd"}> : () -> ()
    %cst_41 = arith.constant dense<0.000000e+00> : vector<2x8x8xf32>
    %115 = tpu.matmul %114, %103, %cst_41 {dimension_numbers = #tpu.dot_dimension_numbers<[2], [1], [1], [2], [0, 0, 0, 1, 1, 2], [0], [0]>} : vector<2x8x8xf32>, vector<2x8x8xf32>, vector<2x8x8xf32> -> vector<2x8x8xf32>
    "tpu.trace_stop"() : () -> ()
    %116 = vector.shape_cast %115 : vector<2x8x8xf32> to vector<16x8xf32>
    %117 = tpu.concatenate %59, %78, %97, %116 in 1 : vector<16x8xf32>, vector<16x8xf32>, vector<16x8xf32>, vector<16x8xf32> -> vector<16x32xf32>
    %c0_42 = arith.constant 0 : index
    %c0_43 = arith.constant 0 : index
    %118 = vector.load %arg10[%c0_42, %c0_43] : memref<32x32xf32, #tpu.memory_space<vmem>>, vector<32x32xf32>
    %cst_44 = arith.constant dense<0.000000e+00> : vector<16x32xf32>
    %119 = tpu.matmul %117, %118, %cst_44 {dimension_numbers = #tpu.dot_dimension_numbers<[1], [0], [0], [1], [0, 0, 1, 1], [], []>} : vector<16x32xf32>, vector<32x32xf32>, vector<16x32xf32> -> vector<16x32xf32>
    %c0_45 = arith.constant 0 : index
    %c0_46 = arith.constant 0 : index
    %120 = vector.load %arg11[%c0_45, %c0_46] : memref<1x32xf32, #tpu.memory_space<vmem>>, vector<1x32xf32>
    %121 = vector.broadcast %120 : vector<1x32xf32> to vector<16x32xf32>
    %122 = arith.addf %119, %121 : vector<16x32xf32>
    %123 = arith.addf %1, %122 : vector<16x32xf32>
    %c0_47 = arith.constant 0 : index
    %c0_48 = arith.constant 0 : index
    %124 = vector.load %arg12[%c0_47, %c0_48] : memref<1x32xf32, #tpu.memory_space<vmem>>, vector<1x32xf32>
    %c0_49 = arith.constant 0 : index
    %c0_50 = arith.constant 0 : index
    %125 = vector.load %arg13[%c0_49, %c0_50] : memref<1x32xf32, #tpu.memory_space<vmem>>, vector<1x32xf32>
    %cst_51 = arith.constant dense<0.000000e+00> : vector<16xf32>
    %126 = vector.multi_reduction <add>, %123, %cst_51 [1] : vector<16x32xf32> to vector<16xf32>
    %127 = vector.shape_cast %126 : vector<16xf32> to vector<16x1xf32>
    %cst_52 = arith.constant 3.200000e+01 : f32
    %128 = vector.broadcast %cst_52 : f32 to vector<16x1xf32>
    %129 = arith.divf %127, %128 : vector<16x1xf32>
    %130 = vector.broadcast %129 : vector<16x1xf32> to vector<16x32xf32>
    %131 = arith.subf %123, %130 : vector<16x32xf32>
    %132 = arith.mulf %131, %131 : vector<16x32xf32>
    %cst_53 = arith.constant dense<0.000000e+00> : vector<16xf32>
    %133 = vector.multi_reduction <add>, %132, %cst_53 [1] : vector<16x32xf32> to vector<16xf32>
    %134 = vector.shape_cast %133 : vector<16xf32> to vector<16x1xf32>
    %cst_54 = arith.constant 3.200000e+01 : f32
    %135 = vector.broadcast %cst_54 : f32 to vector<16x1xf32>
    %136 = arith.divf %134, %135 : vector<16x1xf32>
    %cst_55 = arith.constant 9.99999997E-7 : f32
    %137 = vector.broadcast %cst_55 : f32 to vector<16x1xf32>
    %138 = arith.addf %136, %137 : vector<16x1xf32>
    %139 = math.rsqrt %138 : vector<16x1xf32>
    %140 = vector.broadcast %139 : vector<16x1xf32> to vector<16x32xf32>
    %141 = arith.mulf %131, %140 : vector<16x32xf32>
    %142 = vector.broadcast %124 : vector<1x32xf32> to vector<16x32xf32>
    %143 = arith.mulf %141, %142 : vector<16x32xf32>
    %144 = vector.broadcast %125 : vector<1x32xf32> to vector<16x32xf32>
    %145 = arith.addf %143, %144 : vector<16x32xf32>
    %c0_56 = arith.constant 0 : index
    %c0_57 = arith.constant 0 : index
    %146 = vector.load %arg14[%c0_56, %c0_57] : memref<32x64xf32, #tpu.memory_space<vmem>>, vector<32x64xf32>
    %cst_58 = arith.constant dense<0.000000e+00> : vector<16x64xf32>
    %147 = tpu.matmul %145, %146, %cst_58 {dimension_numbers = #tpu.dot_dimension_numbers<[1], [0], [0], [1], [0, 0, 1, 1], [], []>} : vector<16x32xf32>, vector<32x64xf32>, vector<16x64xf32> -> vector<16x64xf32>
    %c0_59 = arith.constant 0 : index
    %c0_60 = arith.constant 0 : index
    %148 = vector.load %arg15[%c0_59, %c0_60] : memref<1x64xf32, #tpu.memory_space<vmem>>, vector<1x64xf32>
    %149 = vector.broadcast %148 : vector<1x64xf32> to vector<16x64xf32>
    %150 = arith.addf %147, %149 : vector<16x64xf32>
    %cst_61 = arith.constant 5.000000e-01 : f32
    %151 = vector.broadcast %cst_61 : f32 to vector<16x64xf32>
    %152 = arith.mulf %151, %150 : vector<16x64xf32>
    %cst_62 = arith.constant 4.471500e-02 : f32
    %153 = vector.broadcast %cst_62 : f32 to vector<16x64xf32>
    %154 = arith.mulf %153, %150 : vector<16x64xf32>
    %155 = arith.mulf %154, %150 : vector<16x64xf32>
    %156 = arith.mulf %155, %150 : vector<16x64xf32>
    %157 = arith.addf %150, %156 : vector<16x64xf32>
    %cst_63 = arith.constant 0.797884583 : f32
    %158 = vector.broadcast %cst_63 : f32 to vector<16x64xf32>
    %159 = arith.mulf %158, %157 : vector<16x64xf32>
    %160 = math.tanh %159 : vector<16x64xf32>
    %cst_64 = arith.constant 1.000000e+00 : f32
    %161 = vector.broadcast %cst_64 : f32 to vector<16x64xf32>
    %162 = arith.addf %161, %160 : vector<16x64xf32>
    %163 = arith.mulf %152, %162 : vector<16x64xf32>
    %c0_65 = arith.constant 0 : index
    %c0_66 = arith.constant 0 : index
    %164 = vector.load %arg16[%c0_65, %c0_66] : memref<64x32xf32, #tpu.memory_space<vmem>>, vector<64x32xf32>
    %cst_67 = arith.constant dense<0.000000e+00> : vector<16x32xf32>
    %165 = tpu.matmul %163, %164, %cst_67 {dimension_numbers = #tpu.dot_dimension_numbers<[1], [0], [0], [1], [0, 0, 1, 1], [], []>} : vector<16x64xf32>, vector<64x32xf32>, vector<16x32xf32> -> vector<16x32xf32>
    %c0_68 = arith.constant 0 : index
    %c0_69 = arith.constant 0 : index
    %166 = vector.load %arg17[%c0_68, %c0_69] : memref<1x32xf32, #tpu.memory_space<vmem>>, vector<1x32xf32>
    %167 = vector.broadcast %166 : vector<1x32xf32> to vector<16x32xf32>
    %168 = arith.addf %165, %167 : vector<16x32xf32>
    %169 = arith.addf %123, %168 : vector<16x32xf32>
    %170 = vector.shape_cast %169 : vector<16x32xf32> to vector<2x8x32xf32>
    %c0_70 = arith.constant 0 : index
    %c0_71 = arith.constant 0 : index
    %c0_72 = arith.constant 0 : index
    %171 = vector.load %arg18[%c0_70, %c0_71, %c0_72] : memref<2x8x32xf32, #tpu.memory_space<vmem>>, vector<2x8x32xf32>
    tpu.vector_store %arg18[%c0_70, %c0_71, %c0_72], %170 {strides = array<i32>} : memref<2x8x32xf32, #tpu.memory_space<vmem>>, vector<2x8x32xf32>,
    return
  }
  func.func @transform_0(%arg0: i32) -> (i32, i32, i32) {
    %c0_i32 = arith.constant 0 : i32
    %c0_i32_0 = arith.constant 0 : i32
    %c0_i32_1 = arith.constant 0 : i32
    return %arg0, %c0_i32, %c0_i32_0 : i32, i32, i32
  }
  func.func @transform_1(%arg0: i32) -> (i32, i32) {
    %c0_i32 = arith.constant 0 : i32
    %c0_i32_0 = arith.constant 0 : i32
    %c0_i32_1 = arith.constant 0 : i32
    return %c0_i32, %c0_i32_0 : i32, i32
  }
  func.func @transform_2(%arg0: i32) -> (i32, i32) {
    %c0_i32 = arith.constant 0 : i32
    %c0_i32_0 = arith.constant 0 : i32
    %c0_i32_1 = arith.constant 0 : i32
    return %c0_i32, %c0_i32_0 : i32, i32
  }
  func.func @transform_3(%arg0: i32) -> (i32, i32) {
    %c0_i32 = arith.constant 0 : i32
    %c0_i32_0 = arith.constant 0 : i32
    %c0_i32_1 = arith.constant 0 : i32
    return %c0_i32, %c0_i32_0 : i32, i32
  }
  func.func @transform_4(%arg0: i32) -> (i32, i32) {
    %c0_i32 = arith.constant 0 : i32
    %c0_i32_0 = arith.constant 0 : i32
    %c0_i32_1 = arith.constant 0 : i32
    return %c0_i32, %c0_i32_0 : i32, i32
  }
  func.func @transform_5(%arg0: i32) -> (i32, i32) {
    %c0_i32 = arith.constant 0 : i32
    %c0_i32_0 = arith.constant 0 : i32
    %c0_i32_1 = arith.constant 0 : i32
    return %c0_i32, %c0_i32_0 : i32, i32
  }
  func.func @transform_6(%arg0: i32) -> (i32, i32) {
    %c0_i32 = arith.constant 0 : i32
    %c0_i32_0 = arith.constant 0 : i32
    %c0_i32_1 = arith.constant 0 : i32
    return %c0_i32, %c0_i32_0 : i32, i32
  }
  func.func @transform_7(%arg0: i32) -> (i32, i32) {
    %c0_i32 = arith.constant 0 : i32
    %c0_i32_0 = arith.constant 0 : i32
    %c0_i32_1 = arith.constant 0 : i32
    return %c0_i32, %c0_i32_0 : i32, i32
  }
  func.func @transform_8(%arg0: i32) -> (i32, i32) {
    %c0_i32 = arith.constant 0 : i32
    %c0_i32_0 = arith.constant 0 : i32
    %c0_i32_1 = arith.constant 0 : i32
    return %c0_i32, %c0_i32_0 : i32, i32
  }
  func.func @transform_9(%arg0: i32) -> (i32, i32) {
    %c0_i32 = arith.constant 0 : i32
    %c0_i32_0 = arith.constant 0 : i32
    %c0_i32_1 = arith.constant 0 : i32
    return %c0_i32, %c0_i32_0 : i32, i32
  }
  func.func @transform_10(%arg0: i32) -> (i32, i32) {
    %c0_i32 = arith.constant 0 : i32
    %c0_i32_0 = arith.constant 0 : i32
    %c0_i32_1 = arith.constant 0 : i32
    return %c0_i32, %c0_i32_0 : i32, i32
  }
  func.func @transform_11(%arg0: i32) -> (i32, i32) {
    %c0_i32 = arith.constant 0 : i32
    %c0_i32_0 = arith.constant 0 : i32
    %c0_i32_1 = arith.constant 0 : i32
    return %c0_i32, %c0_i32_0 : i32, i32
  }
  func.func @transform_12(%arg0: i32) -> (i32, i32) {
    %c0_i32 = arith.constant 0 : i32
    %c0_i32_0 = arith.constant 0 : i32
    %c0_i32_1 = arith.constant 0 : i32
    return %c0_i32, %c0_i32_0 : i32, i32
  }
  func.func @transform_13(%arg0: i32) -> (i32, i32) {
    %c0_i32 = arith.constant 0 : i32
    %c0_i32_0 = arith.constant 0 : i32
    %c0_i32_1 = arith.constant 0 : i32
    return %c0_i32, %c0_i32_0 : i32, i32
  }
  func.func @transform_14(%arg0: i32) -> (i32, i32) {
    %c0_i32 = arith.constant 0 : i32
    %c0_i32_0 = arith.constant 0 : i32
    %c0_i32_1 = arith.constant 0 : i32
    return %c0_i32, %c0_i32_0 : i32, i32
  }
  func.func @transform_15(%arg0: i32) -> (i32, i32) {
    %c0_i32 = arith.constant 0 : i32
    %c0_i32_0 = arith.constant 0 : i32
    %c0_i32_1 = arith.constant 0 : i32
    return %c0_i32, %c0_i32_0 : i32, i32
  }
  func.func @transform_16(%arg0: i32) -> (i32, i32) {
    %c0_i32 = arith.constant 0 : i32
    %c0_i32_0 = arith.constant 0 : i32
    %c0_i32_1 = arith.constant 0 : i32
    return %c0_i32, %c0_i32_0 : i32, i32
  }
  func.func @transform_17(%arg0: i32) -> (i32, i32, i32) {
    %c0_i32 = arith.constant 0 : i32
    %c0_i32_0 = arith.constant 0 : i32
    %c0_i32_1 = arith.constant 0 : i32
    return %arg0, %c0_i32, %c0_i32_0 : i32, i32, i32
  }
}

</mosaic_0001>

<llo_original>
// kernel: tpu_custom_call.1
$region0: #{tpu_custom_call.1}
  #allocation0 [shape = 'u32[]', space=smem, size = 0x4, offset = 0x4, fixed_abs, tag = 'smem constant byte address 0x4 - core index']
  #allocation1 [shape = 'u32[144,128]{1,0:T(1,128)}', space=vmem, size = 0x12000, scoped, tag = 'internal scratch']
  %s0 = inlined_call_operand.vmem [shape: f32[4,8,32], index: 0, kind: input, shape index: {}]
  %s1 = inlined_call_operand.vmem [shape: f32[1,32], index: 1, kind: input, shape index: {}]
  %s2 = inlined_call_operand.vmem [shape: f32[1,32], index: 2, kind: input, shape index: {}]
  %s3 = inlined_call_operand.vmem [shape: f32[32,32], index: 3, kind: input, shape index: {}]
  %s4 = inlined_call_operand.vmem [shape: f32[1,32], index: 4, kind: input, shape index: {}]
  %s5 = inlined_call_operand.vmem [shape: f32[32,32], index: 5, kind: input, shape index: {}]
  %s6 = inlined_call_operand.vmem [shape: f32[1,32], index: 6, kind: input, shape index: {}]
  %s7 = inlined_call_operand.hbm [shape: f32[32,32], index: 7, kind: input, shape index: {}]
  %s8 = inlined_call_operand.vmem [shape: f32[1,32], index: 8, kind: input, shape index: {}]
  %s9 = inlined_call_operand.hbm [shape: f32[32,32], index: 9, kind: input, shape index: {}]
  %s10 = inlined_call_operand.vmem [shape: f32[1,32], index: 10, kind: input, shape index: {}]
  %s11 = inlined_call_operand.vmem [shape: f32[1,32], index: 11, kind: input, shape index: {}]
  %s12 = inlined_call_operand.vmem [shape: f32[1,32], index: 12, kind: input, shape index: {}]
  %s13 = inlined_call_operand.hbm [shape: f32[32,64], index: 13, kind: input, shape index: {}]
  %s14 = inlined_call_operand.vmem [shape: f32[1,64], index: 14, kind: input, shape index: {}]
  %s15 = inlined_call_operand.vmem [shape: f32[64,32], index: 15, kind: input, shape index: {}]
  %s16 = inlined_call_operand.vmem [shape: f32[1,32], index: 16, kind: input, shape index: {}]
  %s17 = inlined_call_operand.hbm [shape: f32[4,8,32], index: 17, kind: output, shape index: {}]
  %s18 = sld [smem:[#allocation0]]
  $region113: #{tpu_custom_call.1} parent=0
    _
  %s20 = ssub.s32 1, %s18
  %s21 = scalar_select 0, %s20, %s18
  $region1: #{tpu_custom_call.1} parent=0
    #allocation2 [shape = 'u8[16384]{0}', space=vmem, size = 0x4000, scoped, tag = 'input window, operand 7, single buffered']
    #allocation3 [shape = 's32[2]{0}', space=sflag, size = 0x8, scoped, tag = 'scoped memory for tpu_custom_call.1']
    #allocation4 [shape = 's32[2]{0}', space=sflag, size = 0x8, scoped, tag = 'scoped memory for tpu_custom_call.1']
    #allocation5 [shape = 'u8[16384]{0}', space=vmem, size = 0x4000, scoped, tag = 'input window, operand 9, single buffered']
    #allocation6 [shape = 's32[1]{0}', space=sflag, size = 0x4, scoped, tag = 'scoped memory for tpu_custom_call.1']
    #allocation7 [shape = 'u8[16384]{0}', space=vmem, size = 0x4000, scoped, tag = 'input window, operand 13, single buffered']
    #allocation8 [shape = 'u8[16384]{0}', space=vmem, size = 0x4000, scoped, tag = 'output window, operand 0']
    %22 = vsyncpa [#allocation3], 0
    %23 = vsyncpa [#allocation6], 0
    %24 = vsyncpa [#allocation4], 0
    %s25 = scalar_lea.sflag [#allocation4], 1
    %26 = vsyncpa %s25, 0
    loop: start=0, step=1, limit=4
    $region2: #{tpu_custom_call.1} parent=1 // loop_pre_header
      _
    $region3: #{tpu_custom_call.1} parent=1 // loop_header
      %s28 = sphi 0, %s32
      %p29 = scmp.ge.s32.totalorder %s28, 4
      %s38 = sphi 0, %s40
      %s41 = sphi 0, %s38
      %s42 = sphi 0, %s41
      %s58 = sphi 0, %s42
      %s62 = sphi 0, %s62
      %s64 = sphi 0, %s62
      %s65 = sphi 0, %s64
      %s79 = sphi 0, %s65
      %s83 = sphi 0, %s83
      %s85 = sphi 0, %s83
      %s86 = sphi 0, %s85
      %s100 = sphi 0, %s86
      %s104 = sphi 0, %s104
      %s106 = sphi 0, %s104
      %s107 = sphi 0, %s106
      %s121 = sphi 0, %s107
      %s125 = sphi 0, %s125
      %s127 = sphi 0, %s125
      %s128 = sphi 0, %s127
      %s142 = sphi 0, %s128
      %s146 = sphi 0, %s146
      %s148 = sphi 0, %s146
      %s149 = sphi 0, %s148
      %s163 = sphi 0, %s149
      %s167 = sphi 0, %s167
      %s169 = sphi 0, %s167
      %s170 = sphi 0, %s169
      %s184 = sphi 0, %s170
      %s188 = sphi 0, %s188
      %s190 = sphi 0, %s188
      %s191 = sphi 0, %s190
      %s205 = sphi 0, %s191
      %s209 = sphi 0, %s209
      %s211 = sphi 0, %s209
      %s212 = sphi 0, %s211
      %s226 = sphi 0, %s212
      %s230 = sphi 0, %s230
      %s232 = sphi 0, %s230
      %s233 = sphi 0, %s232
      %s247 = sphi 0, %s233
      %s251 = sphi 0, %s251
      %s253 = sphi 0, %s251
      %s254 = sphi 0, %s253
      %s268 = sphi 0, %s254
      %s272 = sphi 0, %s272
      %s274 = sphi 0, %s272
      %s275 = sphi 0, %s274
      %s289 = sphi 0, %s275
      %s293 = sphi 0, %s293
      %s295 = sphi 0, %s293
      %s296 = sphi 0, %s295
      %s310 = sphi 0, %s296
      %s314 = sphi 0, %s314
      %s316 = sphi 0, %s314
      %s317 = sphi 0, %s316
      %s331 = sphi 0, %s317
      %s335 = sphi 0, %s335
      %s337 = sphi 0, %s335
      %s338 = sphi 0, %s337
      %s352 = sphi 0, %s338
      %s356 = sphi 0, %s356
      %s358 = sphi 0, %s356
      %s359 = sphi 0, %s358
      %s373 = sphi 0, %s359
      %s377 = sphi 0, %s377
      %s379 = sphi 0, %s377
      %s380 = sphi 0, %s379
      %s394 = sphi 0, %s380
      %s400 = sphi 0, %s402
      %s403 = sphi 0, %s400
      %s404 = sphi 0, %s403
      %s420 = sphi 0, %s404
    $region4: #{tpu_custom_call.1} parent=1 // loop_header_branch
      %31 = sbr.rel (%p29) target = $region8
    $region5: #{tpu_custom_call.1} parent=1 // loop_body
      %s33 = ssub.s32 %s28, 1
      %s34 = ssub.s32 %s28, 2
      %s35 = sadd.s32 %s28, 1
      %s36 = ssub.s32 %s28, %s35
      %p37 = scmp.eq.s32.totalorder %s36, 0
      %s39 = sadd.s32 %s38, 1
      %s40 = scalar_select %p37, %s38, %s39
      %p43 = pneg %p37
      %p44 = scmp.eq.s32.totalorder %s28, 1
      %p45 = por %p43, %p44
      %p46 = scmp.ne.s32.totalorder %s38, %s41
      %p47 = scmp.eq.s32.totalorder %s28, 0
      %p48 = por %p46, %p47
      %p49 = scmp.ne.s32.totalorder %s38, %s41
      %p50 = scmp.eq.s32.totalorder %s33, 1
      %p51 = por %p49, %p50
      %p52 = scmp.ne.s32.totalorder %s41, %s42
      %p53 = scmp.eq.s32.totalorder %s33, 0
      %p54 = por %p52, %p53
      %p55 = scmp.ne.s32.totalorder %s41, %s42
      %p56 = scmp.eq.s32.totalorder %s34, 1
      %p57 = por %p55, %p56
      %p59 = scmp.ne.s32.totalorder %s42, %s58
      %p60 = scmp.eq.s32.totalorder %s34, 0
      %p61 = por %p59, %p60
      %s63 = sadd.s32 %s62, 1
      %p66 = scmp.eq.s32.totalorder %s28, 1
      %p67 = scmp.ne.s32.totalorder %s62, %s64
      %p68 = scmp.eq.s32.totalorder %s28, 0
      %p69 = por %p67, %p68
      %p70 = scmp.ne.s32.totalorder %s62, %s64
      %p71 = scmp.eq.s32.totalorder %s33, 1
      %p72 = por %p70, %p71
      %p73 = scmp.ne.s32.totalorder %s64, %s65
      %p74 = scmp.eq.s32.totalorder %s33, 0
      %p75 = por %p73, %p74
      %p76 = scmp.ne.s32.totalorder %s64, %s65
      %p77 = scmp.eq.s32.totalorder %s34, 1
      %p78 = por %p76, %p77
      %p80 = scmp.ne.s32.totalorder %s65, %s79
      %p81 = scmp.eq.s32.totalorder %s34, 0
      %p82 = por %p80, %p81
      %s84 = sadd.s32 %s83, 1
      %p87 = scmp.eq.s32.totalorder %s28, 1
      %p88 = scmp.ne.s32.totalorder %s83, %s85
      %p89 = scmp.eq.s32.totalorder %s28, 0
      %p90 = por %p88, %p89
      %p91 = scmp.ne.s32.totalorder %s83, %s85
      %p92 = scmp.eq.s32.totalorder %s33, 1
      %p93 = por %p91, %p92
      %p94 = scmp.ne.s32.totalorder %s85, %s86
      %p95 = scmp.eq.s32.totalorder %s33, 0
      %p96 = por %p94, %p95
      %p97 = scmp.ne.s32.totalorder %s85, %s86
      %p98 = scmp.eq.s32.totalorder %s34, 1
      %p99 = por %p97, %p98
      %p101 = scmp.ne.s32.totalorder %s86, %s100
      %p102 = scmp.eq.s32.totalorder %s34, 0
      %p103 = por %p101, %p102
      %s105 = sadd.s32 %s104, 1
      %p108 = scmp.eq.s32.totalorder %s28, 1
      %p109 = scmp.ne.s32.totalorder %s104, %s106
      %p110 = scmp.eq.s32.totalorder %s28, 0
      %p111 = por %p109, %p110
      %p112 = scmp.ne.s32.totalorder %s104, %s106
      %p113 = scmp.eq.s32.totalorder %s33, 1
      %p114 = por %p112, %p113
      %p115 = scmp.ne.s32.totalorder %s106, %s107
      %p116 = scmp.eq.s32.totalorder %s33, 0
      %p117 = por %p115, %p116
      %p118 = scmp.ne.s32.totalorder %s106, %s107
      %p119 = scmp.eq.s32.totalorder %s34, 1
      %p120 = por %p118, %p119
      %p122 = scmp.ne.s32.totalorder %s107, %s121
      %p123 = scmp.eq.s32.totalorder %s34, 0
      %p124 = por %p122, %p123
      %s126 = sadd.s32 %s125, 1
      %p129 = scmp.eq.s32.totalorder %s28, 1
      %p130 = scmp.ne.s32.totalorder %s125, %s127
      %p131 = scmp.eq.s32.totalorder %s28, 0
      %p132 = por %p130, %p131
      %p133 = scmp.ne.s32.totalorder %s125, %s127
      %p134 = scmp.eq.s32.totalorder %s33, 1
      %p135 = por %p133, %p134
      %p136 = scmp.ne.s32.totalorder %s127, %s128
      %p137 = scmp.eq.s32.totalorder %s33, 0
      %p138 = por %p136, %p137
      %p139 = scmp.ne.s32.totalorder %s127, %s128
      %p140 = scmp.eq.s32.totalorder %s34, 1
      %p141 = por %p139, %p140
      %p143 = scmp.ne.s32.totalorder %s128, %s142
      %p144 = scmp.eq.s32.totalorder %s34, 0
      %p145 = por %p143, %p144
      %s147 = sadd.s32 %s146, 1
      %p150 = scmp.eq.s32.totalorder %s28, 1
      %p151 = scmp.ne.s32.totalorder %s146, %s148
      %p152 = scmp.eq.s32.totalorder %s28, 0
      %p153 = por %p151, %p152
      %p154 = scmp.ne.s32.totalorder %s146, %s148
      %p155 = scmp.eq.s32.totalorder %s33, 1
      %p156 = por %p154, %p155
      %p157 = scmp.ne.s32.totalorder %s148, %s149
      %p158 = scmp.eq.s32.totalorder %s33, 0
      %p159 = por %p157, %p158
      %p160 = scmp.ne.s32.totalorder %s148, %s149
      %p161 = scmp.eq.s32.totalorder %s34, 1
      %p162 = por %p160, %p161
      %p164 = scmp.ne.s32.totalorder %s149, %s163
      %p165 = scmp.eq.s32.totalorder %s34, 0
      %p166 = por %p164, %p165
      %s168 = sadd.s32 %s167, 1
      %p171 = scmp.eq.s32.totalorder %s28, 1
      %p172 = scmp.ne.s32.totalorder %s167, %s169
      %p173 = scmp.eq.s32.totalorder %s28, 0
      %p174 = por %p172, %p173
      %p175 = scmp.ne.s32.totalorder %s167, %s169
      %p176 = scmp.eq.s32.totalorder %s33, 1
      %p177 = por %p175, %p176
      %p178 = scmp.ne.s32.totalorder %s169, %s170
      %p179 = scmp.eq.s32.totalorder %s33, 0
      %p180 = por %p178, %p179
      %p181 = scmp.ne.s32.totalorder %s169, %s170
      %p182 = scmp.eq.s32.totalorder %s34, 1
      %p183 = por %p181, %p182
      %p185 = scmp.ne.s32.totalorder %s170, %s184
      %p186 = scmp.eq.s32.totalorder %s34, 0
      %p187 = por %p185, %p186
      %s189 = sadd.s32 %s188, 1
      %p192 = scmp.eq.s32.totalorder %s28, 1
      %p193 = scmp.ne.s32.totalorder %s188, %s190
      %p194 = scmp.eq.s32.totalorder %s28, 0
      %p195 = por %p193, %p194
      %p196 = scmp.ne.s32.totalorder %s188, %s190
      %p197 = scmp.eq.s32.totalorder %s33, 1
      %p198 = por %p196, %p197
      %p199 = scmp.ne.s32.totalorder %s190, %s191
      %p200 = scmp.eq.s32.totalorder %s33, 0
      %p201 = por %p199, %p200
      %p202 = scmp.ne.s32.totalorder %s190, %s191
      %p203 = scmp.eq.s32.totalorder %s34, 1
      %p204 = por %p202, %p203
      %p206 = scmp.ne.s32.totalorder %s191, %s205
      %p207 = scmp.eq.s32.totalorder %s34, 0
      %p208 = por %p206, %p207
      %s210 = sadd.s32 %s209, 1
      %p213 = scmp.eq.s32.totalorder %s28, 1
      %p214 = scmp.ne.s32.totalorder %s209, %s211
      %p215 = scmp.eq.s32.totalorder %s28, 0
      %p216 = por %p214, %p215
      %p217 = scmp.ne.s32.totalorder %s209, %s211
      %p218 = scmp.eq.s32.totalorder %s33, 1
      %p219 = por %p217, %p218
      %p220 = scmp.ne.s32.totalorder %s211, %s212
      %p221 = scmp.eq.s32.totalorder %s33, 0
      %p222 = por %p220, %p221
      %p223 = scmp.ne.s32.totalorder %s211, %s212
      %p224 = scmp.eq.s32.totalorder %s34, 1
      %p225 = por %p223, %p224
      %p227 = scmp.ne.s32.totalorder %s212, %s226
      %p228 = scmp.eq.s32.totalorder %s34, 0
      %p229 = por %p227, %p228
      %s231 = sadd.s32 %s230, 1
      %p234 = scmp.eq.s32.totalorder %s28, 1
      %p235 = scmp.ne.s32.totalorder %s230, %s232
      %p236 = scmp.eq.s32.totalorder %s28, 0
      %p237 = por %p235, %p236
      %p238 = scmp.ne.s32.totalorder %s230, %s232
      %p239 = scmp.eq.s32.totalorder %s33, 1
      %p240 = por %p238, %p239
      %p241 = scmp.ne.s32.totalorder %s232, %s233
      %p242 = scmp.eq.s32.totalorder %s33, 0
      %p243 = por %p241, %p242
      %p244 = scmp.ne.s32.totalorder %s232, %s233
      %p245 = scmp.eq.s32.totalorder %s34, 1
      %p246 = por %p244, %p245
      %p248 = scmp.ne.s32.totalorder %s233, %s247
      %p249 = scmp.eq.s32.totalorder %s34, 0
      %p250 = por %p248, %p249
      %s252 = sadd.s32 %s251, 1
      %p255 = scmp.eq.s32.totalorder %s28, 1
      %p256 = scmp.ne.s32.totalorder %s251, %s253
      %p257 = scmp.eq.s32.totalorder %s28, 0
      %p258 = por %p256, %p257
      %p259 = scmp.ne.s32.totalorder %s251, %s253
      %p260 = scmp.eq.s32.totalorder %s33, 1
      %p261 = por %p259, %p260
      %p262 = scmp.ne.s32.totalorder %s253, %s254
      %p263 = scmp.eq.s32.totalorder %s33, 0
      %p264 = por %p262, %p263
      %p265 = scmp.ne.s32.totalorder %s253, %s254
      %p266 = scmp.eq.s32.totalorder %s34, 1
      %p267 = por %p265, %p266
      %p269 = scmp.ne.s32.totalorder %s254, %s268
      %p270 = scmp.eq.s32.totalorder %s34, 0
      %p271 = por %p269, %p270
      %s273 = sadd.s32 %s272, 1
      %p276 = scmp.eq.s32.totalorder %s28, 1
      %p277 = scmp.ne.s32.totalorder %s272, %s274
      %p278 = scmp.eq.s32.totalorder %s28, 0
      %p279 = por %p277, %p278
      %p280 = scmp.ne.s32.totalorder %s272, %s274
      %p281 = scmp.eq.s32.totalorder %s33, 1
      %p282 = por %p280, %p281
      %p283 = scmp.ne.s32.totalorder %s274, %s275
      %p284 = scmp.eq.s32.totalorder %s33, 0
      %p285 = por %p283, %p284
      %p286 = scmp.ne.s32.totalorder %s274, %s275
      %p287 = scmp.eq.s32.totalorder %s34, 1
      %p288 = por %p286, %p287
      %p290 = scmp.ne.s32.totalorder %s275, %s289
      %p291 = scmp.eq.s32.totalorder %s34, 0
      %p292 = por %p290, %p291
      %s294 = sadd.s32 %s293, 1
      %p297 = scmp.eq.s32.totalorder %s28, 1
      %p298 = scmp.ne.s32.totalorder %s293, %s295
      %p299 = scmp.eq.s32.totalorder %s28, 0
      %p300 = por %p298, %p299
      %p301 = scmp.ne.s32.totalorder %s293, %s295
      %p302 = scmp.eq.s32.totalorder %s33, 1
      %p303 = por %p301, %p302
      %p304 = scmp.ne.s32.totalorder %s295, %s296
      %p305 = scmp.eq.s32.totalorder %s33, 0
      %p306 = por %p304, %p305
      %p307 = scmp.ne.s32.totalorder %s295, %s296
      %p308 = scmp.eq.s32.totalorder %s34, 1
      %p309 = por %p307, %p308
      %p311 = scmp.ne.s32.totalorder %s296, %s310
      %p312 = scmp.eq.s32.totalorder %s34, 0
      %p313 = por %p311, %p312
      %s315 = sadd.s32 %s314, 1
      %p318 = scmp.eq.s32.totalorder %s28, 1
      %p319 = scmp.ne.s32.totalorder %s314, %s316
      %p320 = scmp.eq.s32.totalorder %s28, 0
      %p321 = por %p319, %p320
      %p322 = scmp.ne.s32.totalorder %s314, %s316
      %p323 = scmp.eq.s32.totalorder %s33, 1
      %p324 = por %p322, %p323
      %p325 = scmp.ne.s32.totalorder %s316, %s317
      %p326 = scmp.eq.s32.totalorder %s33, 0
      %p327 = por %p325, %p326
      %p328 = scmp.ne.s32.totalorder %s316, %s317
      %p329 = scmp.eq.s32.totalorder %s34, 1
      %p330 = por %p328, %p329
      %p332 = scmp.ne.s32.totalorder %s317, %s331
      %p333 = scmp.eq.s32.totalorder %s34, 0
      %p334 = por %p332, %p333
      %s336 = sadd.s32 %s335, 1
      %p339 = scmp.eq.s32.totalorder %s28, 1
      %p340 = scmp.ne.s32.totalorder %s335, %s337
      %p341 = scmp.eq.s32.totalorder %s28, 0
      %p342 = por %p340, %p341
      %p343 = scmp.ne.s32.totalorder %s335, %s337
      %p344 = scmp.eq.s32.totalorder %s33, 1
      %p345 = por %p343, %p344
      %p346 = scmp.ne.s32.totalorder %s337, %s338
      %p347 = scmp.eq.s32.totalorder %s33, 0
      %p348 = por %p346, %p347
      %p349 = scmp.ne.s32.totalorder %s337, %s338
      %p350 = scmp.eq.s32.totalorder %s34, 1
      %p351 = por %p349, %p350
      %p353 = scmp.ne.s32.totalorder %s338, %s352
      %p354 = scmp.eq.s32.totalorder %s34, 0
      %p355 = por %p353, %p354
      %s357 = sadd.s32 %s356, 1
      %p360 = scmp.eq.s32.totalorder %s28, 1
      %p361 = scmp.ne.s32.totalorder %s356, %s358
      %p362 = scmp.eq.s32.totalorder %s28, 0
      %p363 = por %p361, %p362
      %p364 = scmp.ne.s32.totalorder %s356, %s358
      %p365 = scmp.eq.s32.totalorder %s33, 1
      %p366 = por %p364, %p365
      %p367 = scmp.ne.s32.totalorder %s358, %s359
      %p368 = scmp.eq.s32.totalorder %s33, 0
      %p369 = por %p367, %p368
      %p370 = scmp.ne.s32.totalorder %s358, %s359
      %p371 = scmp.eq.s32.totalorder %s34, 1
      %p372 = por %p370, %p371
      %p374 = scmp.ne.s32.totalorder %s359, %s373
      %p375 = scmp.eq.s32.totalorder %s34, 0
      %p376 = por %p374, %p375
      %s378 = sadd.s32 %s377, 1
      %p381 = scmp.eq.s32.totalorder %s28, 1
      %p382 = scmp.ne.s32.totalorder %s377, %s379
      %p383 = scmp.eq.s32.totalorder %s28, 0
      %p384 = por %p382, %p383
      %p385 = scmp.ne.s32.totalorder %s377, %s379
      %p386 = scmp.eq.s32.totalorder %s33, 1
      %p387 = por %p385, %p386
      %p388 = scmp.ne.s32.totalorder %s379, %s380
      %p389 = scmp.eq.s32.totalorder %s33, 0
      %p390 = por %p388, %p389
      %p391 = scmp.ne.s32.totalorder %s379, %s380
      %p392 = scmp.eq.s32.totalorder %s34, 1
      %p393 = por %p391, %p392
      %p395 = scmp.ne.s32.totalorder %s380, %s394
      %p396 = scmp.eq.s32.totalorder %s34, 0
      %p397 = por %p395, %p396
      %s398 = ssub.s32 %s28, %s35
      %p399 = scmp.eq.s32.totalorder %s398, 0
      %s401 = sadd.s32 %s400, 1
      %s402 = scalar_select %p399, %s400, %s401
      %p405 = pneg %p399
      %p406 = scmp.eq.s32.totalorder %s28, 1
      %p407 = por %p405, %p406
      %p408 = scmp.ne.s32.totalorder %s400, %s403
      %p409 = scmp.eq.s32.totalorder %s28, 0
      %p410 = por %p408, %p409
      %p411 = scmp.ne.s32.totalorder %s400, %s403
      %p412 = scmp.eq.s32.totalorder %s33, 1
      %p413 = por %p411, %p412
      %p414 = scmp.ne.s32.totalorder %s403, %s404
      %p415 = scmp.eq.s32.totalorder %s33, 0
      %p416 = por %p414, %p415
      %p417 = scmp.ne.s32.totalorder %s403, %s404
      %p418 = scmp.eq.s32.totalorder %s34, 1
      %p419 = por %p417, %p418
      %p421 = scmp.ne.s32.totalorder %s404, %s420
      %p422 = scmp.eq.s32.totalorder %s34, 0
      %p423 = por %p421, %p422
      %p424 = scmp.le.s32.totalorder 1, %s28
      %p425 = scmp.lt.s32.totalorder %s28, 3
      %p426 = pnand %p424, %p425
      %p427 = pneg %p426
      // Predicated region
      $region9: #{tpu_custom_call.1} parent=5 // pred_check
        _
      $region10: #{tpu_custom_call.1} parent=5 // pred_check_branch
        %429 = sbr.rel (%p426) target = $region12
      $region11: #{tpu_custom_call.1} parent=5 // pred_region
        %s430 = ssub.s32 %s28, 1
        // Predicated region
        $region13: #{tpu_custom_call.1} parent=11 // pred_check
          %p431 = pneg %p75
        $region14: #{tpu_custom_call.1} parent=11 // pred_check_branch
          %433 = sbr.rel (%p431) target = $region16
        $region15: #{tpu_custom_call.1} parent=11 // pred_region
          _
        $region16: #{tpu_custom_call.1} parent=11 // pred_fallthru
          _
        // Predicated region
        $region17: #{tpu_custom_call.1} parent=11 // pred_check
          %p434 = pneg %p96
        $region18: #{tpu_custom_call.1} parent=11 // pred_check_branch
          %436 = sbr.rel (%p434) target = $region20
        $region19: #{tpu_custom_call.1} parent=11 // pred_region
          _
        $region20: #{tpu_custom_call.1} parent=11 // pred_fallthru
          _
        // Predicated region
        $region21: #{tpu_custom_call.1} parent=11 // pred_check
          %p437 = pneg %p117
        $region22: #{tpu_custom_call.1} parent=11 // pred_check_branch
          %439 = sbr.rel (%p437) target = $region24
        $region23: #{tpu_custom_call.1} parent=11 // pred_region
          _
        $region24: #{tpu_custom_call.1} parent=11 // pred_fallthru
          _
        // Predicated region
        $region25: #{tpu_custom_call.1} parent=11 // pred_check
          %p440 = pneg %p138
        $region26: #{tpu_custom_call.1} parent=11 // pred_check_branch
          %442 = sbr.rel (%p440) target = $region28
        $region27: #{tpu_custom_call.1} parent=11 // pred_region
          _
        $region28: #{tpu_custom_call.1} parent=11 // pred_fallthru
          _
        // Predicated region
        $region29: #{tpu_custom_call.1} parent=11 // pred_check
          %p443 = pneg %p159
        $region30: #{tpu_custom_call.1} parent=11 // pred_check_branch
          %445 = sbr.rel (%p443) target = $region32
        $region31: #{tpu_custom_call.1} parent=11 // pred_region
          _
        $region32: #{tpu_custom_call.1} parent=11 // pred_fallthru
          _
        // Predicated region
        $region33: #{tpu_custom_call.1} parent=11 // pred_check
          %p446 = pneg %p180
        $region34: #{tpu_custom_call.1} parent=11 // pred_check_branch
          %448 = sbr.rel (%p446) target = $region36
        $region35: #{tpu_custom_call.1} parent=11 // pred_region
          _
        $region36: #{tpu_custom_call.1} parent=11 // pred_fallthru
          _
        // Predicated region
        $region37: #{tpu_custom_call.1} parent=11 // pred_check
          %p449 = pneg %p201
        $region38: #{tpu_custom_call.1} parent=11 // pred_check_branch
          %451 = sbr.rel (%p449) target = $region40
        $region39: #{tpu_custom_call.1} parent=11 // pred_region
          %s453 = ssub.s32 512, 512
          %454 = vsyncadd [#allocation3], %s453
          %s455 = sshll.u32 [#allocation2], 4
          %s456 = int_to_ptr.vmem [resolvable:$true] %s455
          %461 = dma.hbm_to_vmem [thread:$0]  %s7, 512, %s456, [#allocation3], 128, 128, 8
        $region40: #{tpu_custom_call.1} parent=11 // pred_fallthru
          _
        // Predicated region
        $region41: #{tpu_custom_call.1} parent=11 // pred_check
          %p462 = pneg %p222
        $region42: #{tpu_custom_call.1} parent=11 // pred_check_branch
          %464 = sbr.rel (%p462) target = $region44
        $region43: #{tpu_custom_call.1} parent=11 // pred_region
          _
        $region44: #{tpu_custom_call.1} parent=11 // pred_fallthru
          _
        // Predicated region
        $region45: #{tpu_custom_call.1} parent=11 // pred_check
          %p465 = pneg %p243
        $region46: #{tpu_custom_call.1} parent=11 // pred_check_branch
          %467 = sbr.rel (%p465) target = $region48
        $region47: #{tpu_custom_call.1} parent=11 // pred_region
          %s469 = ssub.s32 512, 512
          %470 = vsyncadd [#allocation6], %s469
          %s471 = sshll.u32 [#allocation5], 4
          %s472 = int_to_ptr.vmem [resolvable:$true] %s471
          %477 = dma.hbm_to_vmem [thread:$0]  %s9, 512, %s472, [#allocation6], 128, 128, 8
        $region48: #{tpu_custom_call.1} parent=11 // pred_fallthru
          _
        // Predicated region
        $region49: #{tpu_custom_call.1} parent=11 // pred_check
          %p478 = pneg %p264
        $region50: #{tpu_custom_call.1} parent=11 // pred_check_branch
          %480 = sbr.rel (%p478) target = $region52
        $region51: #{tpu_custom_call.1} parent=11 // pred_region
          _
        $region52: #{tpu_custom_call.1} parent=11 // pred_fallthru
          _
        // Predicated region
        $region53: #{tpu_custom_call.1} parent=11 // pred_check
          %p481 = pneg %p285
        $region54: #{tpu_custom_call.1} parent=11 // pred_check_branch
          %483 = sbr.rel (%p481) target = $region56
        $region55: #{tpu_custom_call.1} parent=11 // pred_region
          _
        $region56: #{tpu_custom_call.1} parent=11 // pred_fallthru
          _
        // Predicated region
        $region57: #{tpu_custom_call.1} parent=11 // pred_check
          %p484 = pneg %p306
        $region58: #{tpu_custom_call.1} parent=11 // pred_check_branch
          %486 = sbr.rel (%p484) target = $region60
        $region59: #{tpu_custom_call.1} parent=11 // pred_region
          _
        $region60: #{tpu_custom_call.1} parent=11 // pred_fallthru
          _
        // Predicated region
        $region61: #{tpu_custom_call.1} parent=11 // pred_check
          %p487 = pneg %p327
        $region62: #{tpu_custom_call.1} parent=11 // pred_check_branch
          %489 = sbr.rel (%p487) target = $region64
        $region63: #{tpu_custom_call.1} parent=11 // pred_region
          %s491 = ssub.s32 512, 512
          %492 = vsyncadd [#allocation6], %s491
          %s493 = sshll.u32 [#allocation7], 4
          %s494 = int_to_ptr.vmem [resolvable:$true] %s493
          %499 = dma.hbm_to_vmem [thread:$0]  %s13, 512, %s494, [#allocation6], 128, 128, 8
        $region64: #{tpu_custom_call.1} parent=11 // pred_fallthru
          _
        // Predicated region
        $region65: #{tpu_custom_call.1} parent=11 // pred_check
          %p500 = pneg %p348
        $region66: #{tpu_custom_call.1} parent=11 // pred_check_branch
          %502 = sbr.rel (%p500) target = $region68
        $region67: #{tpu_custom_call.1} parent=11 // pred_region
          _
        $region68: #{tpu_custom_call.1} parent=11 // pred_fallthru
          _
        // Predicated region
        $region69: #{tpu_custom_call.1} parent=11 // pred_check
          %p503 = pneg %p369
        $region70: #{tpu_custom_call.1} parent=11 // pred_check_branch
          %505 = sbr.rel (%p503) target = $region72
        $region71: #{tpu_custom_call.1} parent=11 // pred_region
          _
        $region72: #{tpu_custom_call.1} parent=11 // pred_fallthru
          _
        // Predicated region
        $region73: #{tpu_custom_call.1} parent=11 // pred_check
          %p506 = pneg %p390
        $region74: #{tpu_custom_call.1} parent=11 // pred_check_branch
          %508 = sbr.rel (%p506) target = $region76
        $region75: #{tpu_custom_call.1} parent=11 // pred_region
          _
        $region76: #{tpu_custom_call.1} parent=11 // pred_fallthru
          _
      $region12: #{tpu_custom_call.1} parent=5 // pred_fallthru
        _
      %p509 = scmp.lt.s32.totalorder %s28, 2
      // Predicated region
      $region77: #{tpu_custom_call.1} parent=5 // pred_check
        %p510 = pneg %p509
      $region78: #{tpu_custom_call.1} parent=5 // pred_check_branch
        %512 = sbr.rel (%p510) target = $region80
      $region79: #{tpu_custom_call.1} parent=5 // pred_region
        // Predicated region
        $region81: #{tpu_custom_call.1} parent=79 // pred_check
          %p513 = pneg %p48
        $region82: #{tpu_custom_call.1} parent=79 // pred_check_branch
          %515 = sbr.rel (%p513) target = $region84
        $region83: #{tpu_custom_call.1} parent=79 // pred_region
          %s516 = smul.u32 2, %s28
          %p517 = scmp.lt.s32.totalorder %s516, 3
          %s518 = scalar_select %p517, %s516, 3
          %s519 = smul.addr %s518, 8
          %s520 = scalar_lea.vmem %s0, %s519
          %s521 = smul.u32 2, %s28
        $region84: #{tpu_custom_call.1} parent=79 // pred_fallthru
          _
      $region80: #{tpu_custom_call.1} parent=5 // pred_fallthru
        _
      %p522 = scmp.le.s32.totalorder 1, %s28
      %p523 = scmp.lt.s32.totalorder %s28, 3
      %p524 = pnand %p522, %p523
      %p525 = pneg %p524
      // Predicated region
      $region85: #{tpu_custom_call.1} parent=5 // pred_check
        _
      $region86: #{tpu_custom_call.1} parent=5 // pred_check_branch
        %527 = sbr.rel (%p524) target = $region88
      $region87: #{tpu_custom_call.1} parent=5 // pred_region
        %s528 = ssub.s32 %s28, 1
        // Predicated region
        $region89: #{tpu_custom_call.1} parent=87 // pred_check
          %p529 = pneg %p201
        $region90: #{tpu_custom_call.1} parent=87 // pred_check_branch
          %531 = sbr.rel (%p529) target = $region92
        $region91: #{tpu_custom_call.1} parent=87 // pred_region
          %532 = dma.done [#allocation3], 512
        $region92: #{tpu_custom_call.1} parent=87 // pred_fallthru
          _
        // Predicated region
        $region93: #{tpu_custom_call.1} parent=87 // pred_check
          %p533 = pneg %p243
        $region94: #{tpu_custom_call.1} parent=87 // pred_check_branch
          %535 = sbr.rel (%p533) target = $region96
        $region95: #{tpu_custom_call.1} parent=87 // pred_region
          %536 = dma.done [#allocation6], 512
        $region96: #{tpu_custom_call.1} parent=87 // pred_fallthru
          _
        // Predicated region
        $region97: #{tpu_custom_call.1} parent=87 // pred_check
          %p537 = pneg %p327
        $region98: #{tpu_custom_call.1} parent=87 // pred_check_branch
          %539 = sbr.rel (%p537) target = $region100
        $region99: #{tpu_custom_call.1} parent=87 // pred_region
          %540 = dma.done [#allocation6], 512
        $region100: #{tpu_custom_call.1} parent=87 // pred_fallthru
          _
        %s541 = smul.u32 2, %s33
        %p542 = scmp.lt.s32.totalorder %s541, 3
        %s543 = scalar_select %p542, %s541, 3
        %s544 = smul.addr %s543, 8
        %s545 = scalar_lea.vmem %s0, %s544
        %p546 = pneg %p54
        %p547 = pneg %p51
        %p548 = pneg %p75
        %p549 = pneg %p72
        %p550 = pneg %p96
        %p551 = pneg %p93
        %p552 = pneg %p117
        %p553 = pneg %p114
        %p554 = pneg %p138
        %p555 = pneg %p135
        %p556 = pneg %p159
        %p557 = pneg %p156
        %p558 = pneg %p180
        %p559 = pneg %p177
        %p560 = pneg %p201
        %p561 = pneg %p198
        %p562 = pneg %p222
        %p563 = pneg %p219
        %p564 = pneg %p243
        %p565 = pneg %p240
        %p566 = pneg %p264
        %p567 = pneg %p261
        %p568 = pneg %p285
        %p569 = pneg %p282
        %p570 = pneg %p306
        %p571 = pneg %p303
        %p572 = pneg %p327
        %p573 = pneg %p324
        %p574 = pneg %p348
        %p575 = pneg %p345
        %p576 = pneg %p369
        %p577 = pneg %p366
        %p578 = pneg %p390
        %p579 = pneg %p387
        %p580 = pneg %p416
        %p581 = pneg %p413
        %s582 = sand.u32 %s403, 1
        %s583 = scalar_lea.sflag [#allocation4], %s582
        %s584 = sand.u32 %s403, 1
        %s585 = smul.addr %s584, 16
        %s586 = scalar_lea.vmem [#allocation8], %s585
        %s587 = smul.u32 2, %s33
        %p588 = scmp.lt.s32.totalorder %s587, 3
        %s589 = scalar_select %p588, %s587, 3
        %s590 = smul.addr %s589, 8
        %s591 = scalar_lea.vmem %s0, %s590
        %s592 = smul.u32 2, %s33
        %s593 = smul.u32 2, %s33
        %v594 = vld [vmem:[%s591] sm:$0xff]
        %v595 = vld [vmem:[%s591 + $0x8] sm:$0xff]
        %v596 = vld [vmem:[%s1] sm:$0x1]
        %v597 = vld [vmem:[%s2] sm:$0x1]
        %vm598 = vcmask 261120
        %v599 = vsel %vm598, %v594, 0.0
        %600 = vadd.xlane.f32.xlu0 %v599
        %v601 = vpop.xlane.xlu0 %600
        %v602 = vsel %vm598, %v595, 0.0
        %603 = vadd.xlane.f32.xlu0 %v602
        %v604 = vpop.xlane.xlu0 %603
        %v605 = vrcp.pop 32.0
        %v606 = vmul.f32 %v601, %v605
        %v607 = vmul.f32 %v604, %v605
        %v608 = vsub.f32 %v594, %v606
        %v609 = vsub.f32 %v595, %v607
        %v610 = vmul.f32 %v608, %v608
        %v611 = vmul.f32 %v609, %v609
        %v612 = vsel %vm598, %v610, 0.0
        %613 = vadd.xlane.f32.xlu0 %v612
        %v614 = vpop.xlane.xlu0 %613
        %v615 = vsel %vm598, %v611, 0.0
        %616 = vadd.xlane.f32.xlu0 %v615
        %v617 = vpop.xlane.xlu0 %616
        %v618 = vmul.f32 %v614, %v605
        %v619 = vmul.f32 %v617, %v605
        %v620 = vadd.f32 %v618, 1e-06
        %v621 = vadd.f32 %v619, 1e-06
        %v622 = vrsqrt.pop %v620
        %v623 = vrsqrt.pop %v621
        %v624 = vmul.f32 %v608, %v622
        %v625 = vmul.f32 %v609, %v623
        %v627 = vlaneseq
        %v628 = vshrl.u32 %v627, 7
        %v629 = vsub.s32 0, %v628
        %v630 = vrot.slane %v596, %v629
        %v632 = vmul.f32 %v624, %v630
        %v633 = vmul.f32 %v625, %v630
        %v635 = vlaneseq
        %v636 = vshrl.u32 %v635, 7
        %v637 = vsub.s32 0, %v636
        %v638 = vrot.slane %v597, %v637
        %v640 = vadd.f32 %v632, %v638
        %v641 = vadd.f32 %v633, %v638
        %v642 = vld [vmem:[%s3] sm:$0xff]
        %v643 = vld [vmem:[%s3 + $0x8] sm:$0xff]
        %v644 = vld [vmem:[%s3 + $0x10] sm:$0xff]
        %v645 = vld [vmem:[%s3 + $0x18] sm:$0xff]
        %v646 = vld [vmem:[%s4] sm:$0x1]
        %v648 = vlaneseq
        %v649 = vshrl.u32 %v648, 7
        %v650 = vsub.s32 0, %v649
        %v651 = vrot.slane %v646, %v650
        %v654 = vsel %vm598, %v640, 0
        %v657 = vsel %vm598, %v641, 0
        %659 = vmatprep.subr.mxu0 0.0
        %660 = vmatpush1.msra.mxu0 0.0
        %661 = vmatprep.subr.mxu0 0.0
        %662 = vmatpush1.msra.mxu0 0.0
        %663 = vmatprep.subr.mxu0 0.0
        %664 = vmatpush1.msra.mxu0 0.0
        %665 = vmatprep.subr.mxu0 0.0
        %666 = vmatpush1.msra.mxu0 0.0
        %667 = vmatprep.subr.mxu0 0.0
        %668 = vmatpush1.msra.mxu0 0.0
        %669 = vmatprep.subr.mxu0 0.0
        %670 = vmatpush1.msra.mxu0 0.0
        %671 = vmatprep.subr.mxu0 0.0
        %672 = vmatpush1.msra.mxu0 0.0
        %673 = vmatprep.subr.mxu0 0.0
        %674 = vmatpush1.msra.mxu0 0.0
        %675 = vmatprep.subr.mxu0 0.0
        %676 = vmatpush1.msra.mxu0 0.0
        %677 = vmatprep.subr.mxu0 0.0
        %678 = vmatpush1.msra.mxu0 0.0
        %679 = vmatprep.subr.mxu0 0.0
        %680 = vmatpush1.msra.mxu0 0.0
        %681 = vmatprep.subr.mxu0 0.0
        %682 = vmatpush1.msra.mxu0 0.0
        %683 = vmatprep.subr.mxu0 0.0
        %684 = vmatpush1.msra.mxu0 %v645
        %685 = vmatprep.subr.mxu0 0.0
        %686 = vmatpush1.msra.mxu0 %v644
        %687 = vmatprep.subr.mxu0 0.0
        %688 = vmatpush1.msra.mxu0 %v643
        %689 = vmatprep.subr.mxu0 0.0
        %690 = vmatpush1.msra.mxu0 %v642
        %691 = vmatprep.subr.mxu0 0.0
        %692 = vmatpush2.msra.mxu0 0.0
        %693 = vmatprep.subr.mxu0 0.0
        %694 = vmatpush2.msra.mxu0 0.0
        %695 = vmatprep.subr.mxu0 0.0
        %696 = vmatpush2.msra.mxu0 0.0
        %697 = vmatprep.subr.mxu0 0.0
        %698 = vmatpush2.msra.mxu0 0.0
        %699 = vmatprep.subr.mxu0 0.0
        %700 = vmatpush2.msra.mxu0 0.0
        %701 = vmatprep.subr.mxu0 0.0
        %702 = vmatpush2.msra.mxu0 0.0
        %703 = vmatprep.subr.mxu0 0.0
        %704 = vmatpush2.msra.mxu0 0.0
        %705 = vmatprep.subr.mxu0 0.0
        %706 = vmatpush2.msra.mxu0 0.0
        %707 = vmatprep.subr.mxu0 0.0
        %708 = vmatpush2.msra.mxu0 0.0
        %709 = vmatprep.subr.mxu0 0.0
        %710 = vmatpush2.msra.mxu0 0.0
        %711 = vmatprep.subr.mxu0 0.0
        %712 = vmatpush2.msra.mxu0 0.0
        %713 = vmatprep.subr.mxu0 0.0
        %714 = vmatpush2.msra.mxu0 0.0
        %715 = vmatprep.subr.mxu0 0.0
        %716 = vmatpush2.msra.mxu0 0.0
        %717 = vmatprep.subr.mxu0 0.0
        %718 = vmatpush2.msra.mxu0 0.0
        %719 = vmatprep.subr.mxu0 0.0
        %720 = vmatpush2.msra.mxu0 0.0
        %721 = vmatprep.subr.mxu0 0.0
        %722 = vmatpush2.msra.mxu0 0.0
        %723 = vmatprep.mubr.f32.mxu0 0.0
        %724 = vmatmul.mubr.f32.gmra.mxu0 %v654
        %v725 = vpop.f32.mrf.mxu0
        %v726 = vadd.f32 %v651, %v725
        %v727 = vpop.f32.mrf.mxu0
        %728 = vmatprep.mubr.f32.mxu0 0.0
        %729 = vmatmul.mubr.f32.gmra.mxu0 %v657
        %v730 = vpop.f32.mrf.mxu0
        %v731 = vadd.f32 %v651, %v730
        %v732 = vpop.f32.mrf.mxu0
        %733 = vdwg.mxu0
        %v734 = vmul.f32 %v726, 0.35355338
        %v735 = vmul.f32 %v731, 0.35355338
        %v736 = vld [vmem:[%s5] sm:$0xff]
        %v737 = vld [vmem:[%s5 + $0x8] sm:$0xff]
        %v738 = vld [vmem:[%s5 + $0x10] sm:$0xff]
        %v739 = vld [vmem:[%s5 + $0x18] sm:$0xff]
        %v740 = vld [vmem:[%s6] sm:$0x1]
        %v742 = vlaneseq
        %v743 = vshrl.u32 %v742, 7
        %v744 = vsub.s32 0, %v743
        %v745 = vrot.slane %v740, %v744
        %747 = vmatprep.subr.mxu0 0.0
        %748 = vmatpush1.msra.mxu0 0.0
        %749 = vmatprep.subr.mxu0 0.0
        %750 = vmatpush1.msra.mxu0 0.0
        %751 = vmatprep.subr.mxu0 0.0
        %752 = vmatpush1.msra.mxu0 0.0
        %753 = vmatprep.subr.mxu0 0.0
        %754 = vmatpush1.msra.mxu0 0.0
        %755 = vmatprep.subr.mxu0 0.0
        %756 = vmatpush1.msra.mxu0 0.0
        %757 = vmatprep.subr.mxu0 0.0
        %758 = vmatpush1.msra.mxu0 0.0
        %759 = vmatprep.subr.mxu0 0.0
        %760 = vmatpush1.msra.mxu0 0.0
        %761 = vmatprep.subr.mxu0 0.0
        %762 = vmatpush1.msra.mxu0 0.0
        %763 = vmatprep.subr.mxu0 0.0
        %764 = vmatpush1.msra.mxu0 0.0
        %765 = vmatprep.subr.mxu0 0.0
        %766 = vmatpush1.msra.mxu0 0.0
        %767 = vmatprep.subr.mxu0 0.0
        %768 = vmatpush1.msra.mxu0 0.0
        %769 = vmatprep.subr.mxu0 0.0
        %770 = vmatpush1.msra.mxu0 0.0
        %771 = vmatprep.subr.mxu0 0.0
        %772 = vmatpush1.msra.mxu0 %v739
        %773 = vmatprep.subr.mxu0 0.0
        %774 = vmatpush1.msra.mxu0 %v738
        %775 = vmatprep.subr.mxu0 0.0
        %776 = vmatpush1.msra.mxu0 %v737
        %777 = vmatprep.subr.mxu0 0.0
        %778 = vmatpush1.msra.mxu0 %v736
        %779 = vmatprep.subr.mxu0 0.0
        %780 = vmatpush2.msra.mxu0 0.0
        %781 = vmatprep.subr.mxu0 0.0
        %782 = vmatpush2.msra.mxu0 0.0
        %783 = vmatprep.subr.mxu0 0.0
        %784 = vmatpush2.msra.mxu0 0.0
        %785 = vmatprep.subr.mxu0 0.0
        %786 = vmatpush2.msra.mxu0 0.0
        %787 = vmatprep.subr.mxu0 0.0
        %788 = vmatpush2.msra.mxu0 0.0
        %789 = vmatprep.subr.mxu0 0.0
        %790 = vmatpush2.msra.mxu0 0.0
        %791 = vmatprep.subr.mxu0 0.0
        %792 = vmatpush2.msra.mxu0 0.0
        %793 = vmatprep.subr.mxu0 0.0
        %794 = vmatpush2.msra.mxu0 0.0
        %795 = vmatprep.subr.mxu0 0.0
        %796 = vmatpush2.msra.mxu0 0.0
        %797 = vmatprep.subr.mxu0 0.0
        %798 = vmatpush2.msra.mxu0 0.0
        %799 = vmatprep.subr.mxu0 0.0
        %800 = vmatpush2.msra.mxu0 0.0
        %801 = vmatprep.subr.mxu0 0.0
        %802 = vmatpush2.msra.mxu0 0.0
        %803 = vmatprep.subr.mxu0 0.0
        %804 = vmatpush2.msra.mxu0 0.0
        %805 = vmatprep.subr.mxu0 0.0
        %806 = vmatpush2.msra.mxu0 0.0
        %807 = vmatprep.subr.mxu0 0.0
        %808 = vmatpush2.msra.mxu0 0.0
        %809 = vmatprep.subr.mxu0 0.0
        %810 = vmatpush2.msra.mxu0 0.0
        %811 = vmatprep.mubr.f32.mxu0 0.0
        %812 = vmatmul.mubr.f32.gmra.mxu0 %v654
        %v813 = vpop.f32.mrf.mxu0
        %v814 = vadd.f32 %v745, %v813
        %v815 = vpop.f32.mrf.mxu0
        %816 = vmatprep.mubr.f32.mxu0 0.0
        %817 = vmatmul.mubr.f32.gmra.mxu0 %v657
        %v818 = vpop.f32.mrf.mxu0
        %v819 = vadd.f32 %v745, %v818
        %v820 = vpop.f32.mrf.mxu0
        %821 = vdwg.mxu0
        %v822 = vld [vmem:[#allocation2] sm:$0xff]
        %v823 = vld [vmem:[#allocation2 + $0x8] sm:$0xff]
        %v824 = vld [vmem:[#allocation2 + $0x10] sm:$0xff]
        %v825 = vld [vmem:[#allocation2 + $0x18] sm:$0xff]
        %v826 = vld [vmem:[%s8] sm:$0x1]
        %v828 = vlaneseq
        %v829 = vshrl.u32 %v828, 7
        %v830 = vsub.s32 0, %v829
        %v831 = vrot.slane %v826, %v830
        %833 = vmatprep.subr.mxu0 0.0
        %834 = vmatpush1.msra.mxu0 0.0
        %835 = vmatprep.subr.mxu0 0.0
        %836 = vmatpush1.msra.mxu0 0.0
        %837 = vmatprep.subr.mxu0 0.0
        %838 = vmatpush1.msra.mxu0 0.0
        %839 = vmatprep.subr.mxu0 0.0
        %840 = vmatpush1.msra.mxu0 0.0
        %841 = vmatprep.subr.mxu0 0.0
        %842 = vmatpush1.msra.mxu0 0.0
        %843 = vmatprep.subr.mxu0 0.0
        %844 = vmatpush1.msra.mxu0 0.0
        %845 = vmatprep.subr.mxu0 0.0
        %846 = vmatpush1.msra.mxu0 0.0
        %847 = vmatprep.subr.mxu0 0.0
        %848 = vmatpush1.msra.mxu0 0.0
        %849 = vmatprep.subr.mxu0 0.0
        %850 = vmatpush1.msra.mxu0 0.0
        %851 = vmatprep.subr.mxu0 0.0
        %852 = vmatpush1.msra.mxu0 0.0
        %853 = vmatprep.subr.mxu0 0.0
        %854 = vmatpush1.msra.mxu0 0.0
        %855 = vmatprep.subr.mxu0 0.0
        %856 = vmatpush1.msra.mxu0 0.0
        %857 = vmatprep.subr.mxu0 0.0
        %858 = vmatpush1.msra.mxu0 %v825
        %859 = vmatprep.subr.mxu0 0.0
        %860 = vmatpush1.msra.mxu0 %v824
        %861 = vmatprep.subr.mxu0 0.0
        %862 = vmatpush1.msra.mxu0 %v823
        %863 = vmatprep.subr.mxu0 0.0
        %864 = vmatpush1.msra.mxu0 %v822
        %865 = vmatprep.subr.mxu0 0.0
        %866 = vmatpush2.msra.mxu0 0.0
        %867 = vmatprep.subr.mxu0 0.0
        %868 = vmatpush2.msra.mxu0 0.0
        %869 = vmatprep.subr.mxu0 0.0
        %870 = vmatpush2.msra.mxu0 0.0
        %871 = vmatprep.subr.mxu0 0.0
        %872 = vmatpush2.msra.mxu0 0.0
        %873 = vmatprep.subr.mxu0 0.0
        %874 = vmatpush2.msra.mxu0 0.0
        %875 = vmatprep.subr.mxu0 0.0
        %876 = vmatpush2.msra.mxu0 0.0
        %877 = vmatprep.subr.mxu0 0.0
        %878 = vmatpush2.msra.mxu0 0.0
        %879 = vmatprep.subr.mxu0 0.0
        %880 = vmatpush2.msra.mxu0 0.0
        %881 = vmatprep.subr.mxu0 0.0
        %882 = vmatpush2.msra.mxu0 0.0
        %883 = vmatprep.subr.mxu0 0.0
        %884 = vmatpush2.msra.mxu0 0.0
        %885 = vmatprep.subr.mxu0 0.0
        %886 = vmatpush2.msra.mxu0 0.0
        %887 = vmatprep.subr.mxu0 0.0
        %888 = vmatpush2.msra.mxu0 0.0
        %889 = vmatprep.subr.mxu0 0.0
        %890 = vmatpush2.msra.mxu0 0.0
        %891 = vmatprep.subr.mxu0 0.0
        %892 = vmatpush2.msra.mxu0 0.0
        %893 = vmatprep.subr.mxu0 0.0
        %894 = vmatpush2.msra.mxu0 0.0
        %895 = vmatprep.subr.mxu0 0.0
        %896 = vmatpush2.msra.mxu0 0.0
        %897 = vmatprep.mubr.f32.mxu0 0.0
        %898 = vmatmul.mubr.f32.gmra.mxu0 %v654
        %v899 = vpop.f32.mrf.mxu0
        %v900 = vadd.f32 %v831, %v899
        %v901 = vpop.f32.mrf.mxu0
        %902 = vmatprep.mubr.f32.mxu0 0.0
        %903 = vmatmul.mubr.f32.gmra.mxu0 %v657
        %v904 = vpop.f32.mrf.mxu0
        %v905 = vadd.f32 %v831, %v904
        %v906 = vpop.f32.mrf.mxu0
        %907 = vdwg.mxu0
        %vm908 = vcmask 64512
        %v910 = vsel %vm908, %v734, 0
        %v913 = vsel %vm908, %v814, 0
        %915 = vmatprep.subr.mxu0 0.0
        %916 = vmatpush1.xpose.msra.mxu0 0.0
        %917 = vmatprep.subr.mxu0 0.0
        %918 = vmatpush1.xpose.msra.mxu0 0.0
        %919 = vmatprep.subr.mxu0 0.0
        %920 = vmatpush1.xpose.msra.mxu0 0.0
        %921 = vmatprep.subr.mxu0 0.0
        %922 = vmatpush1.xpose.msra.mxu0 0.0
        %923 = vmatprep.subr.mxu0 0.0
        %924 = vmatpush1.xpose.msra.mxu0 0.0
        %925 = vmatprep.subr.mxu0 0.0
        %926 = vmatpush1.xpose.msra.mxu0 0.0
        %927 = vmatprep.subr.mxu0 0.0
        %928 = vmatpush1.xpose.msra.mxu0 0.0
        %929 = vmatprep.subr.mxu0 0.0
        %930 = vmatpush1.xpose.msra.mxu0 0.0
        %931 = vmatprep.subr.mxu0 0.0
        %932 = vmatpush1.xpose.msra.mxu0 0.0
        %933 = vmatprep.subr.mxu0 0.0
        %934 = vmatpush1.xpose.msra.mxu0 0.0
        %935 = vmatprep.subr.mxu0 0.0
        %936 = vmatpush1.xpose.msra.mxu0 0.0
        %937 = vmatprep.subr.mxu0 0.0
        %938 = vmatpush1.xpose.msra.mxu0 0.0
        %939 = vmatprep.subr.mxu0 0.0
        %940 = vmatpush1.xpose.msra.mxu0 0.0
        %941 = vmatprep.subr.mxu0 0.0
        %942 = vmatpush1.xpose.msra.mxu0 0.0
        %943 = vmatprep.subr.mxu0 0.0
        %944 = vmatpush1.xpose.msra.mxu0 0.0
        %945 = vmatprep.subr.mxu0 0.0
        %946 = vmatpush1.xpose.msra.mxu0 %v913
        %947 = vmatprep.subr.mxu0 0.0
        %948 = vmatpush2.xpose.msra.mxu0 0.0
        %949 = vmatprep.subr.mxu0 0.0
        %950 = vmatpush2.xpose.msra.mxu0 0.0
        %951 = vmatprep.subr.mxu0 0.0
        %952 = vmatpush2.xpose.msra.mxu0 0.0
        %953 = vmatprep.subr.mxu0 0.0
        %954 = vmatpush2.xpose.msra.mxu0 0.0
        %955 = vmatprep.subr.mxu0 0.0
        %956 = vmatpush2.xpose.msra.mxu0 0.0
        %957 = vmatprep.subr.mxu0 0.0
        %958 = vmatpush2.xpose.msra.mxu0 0.0
        %959 = vmatprep.subr.mxu0 0.0
        %960 = vmatpush2.xpose.msra.mxu0 0.0
        %961 = vmatprep.subr.mxu0 0.0
        %962 = vmatpush2.xpose.msra.mxu0 0.0
        %963 = vmatprep.subr.mxu0 0.0
        %964 = vmatpush2.xpose.msra.mxu0 0.0
        %965 = vmatprep.subr.mxu0 0.0
        %966 = vmatpush2.xpose.msra.mxu0 0.0
        %967 = vmatprep.subr.mxu0 0.0
        %968 = vmatpush2.xpose.msra.mxu0 0.0
        %969 = vmatprep.subr.mxu0 0.0
        %970 = vmatpush2.xpose.msra.mxu0 0.0
        %971 = vmatprep.subr.mxu0 0.0
        %972 = vmatpush2.xpose.msra.mxu0 0.0
        %973 = vmatprep.subr.mxu0 0.0
        %974 = vmatpush2.xpose.msra.mxu0 0.0
        %975 = vmatprep.subr.mxu0 0.0
        %976 = vmatpush2.xpose.msra.mxu0 0.0
        %977 = vmatprep.subr.mxu0 0.0
        %978 = vmatpush2.xpose.msra.mxu0 0.0
        %979 = vmatprep.mubr.f32.mxu0 0.0
        %980 = vmatmul.mubr.f32.gmra.mxu0 %v910
        %v981 = vpop.f32.mrf.mxu0
        %v982 = vadd.f32 0.0, %v981
        %v983 = vpop.f32.mrf.mxu0
        %984 = vdwg.mxu0
        %v986 = vsel %vm908, %v735, 0
        %v989 = vsel %vm908, %v819, 0
        %991 = vmatprep.subr.mxu0 0.0
        %992 = vmatpush1.xpose.msra.mxu0 0.0
        %993 = vmatprep.subr.mxu0 0.0
        %994 = vmatpush1.xpose.msra.mxu0 0.0
        %995 = vmatprep.subr.mxu0 0.0
        %996 = vmatpush1.xpose.msra.mxu0 0.0
        %997 = vmatprep.subr.mxu0 0.0
        %998 = vmatpush1.xpose.msra.mxu0 0.0
        %999 = vmatprep.subr.mxu0 0.0
        %1000 = vmatpush1.xpose.msra.mxu0 0.0
        %1001 = vmatprep.subr.mxu0 0.0
        %1002 = vmatpush1.xpose.msra.mxu0 0.0
        %1003 = vmatprep.subr.mxu0 0.0
        %1004 = vmatpush1.xpose.msra.mxu0 0.0
        %1005 = vmatprep.subr.mxu0 0.0
        %1006 = vmatpush1.xpose.msra.mxu0 0.0
        %1007 = vmatprep.subr.mxu0 0.0
        %1008 = vmatpush1.xpose.msra.mxu0 0.0
        %1009 = vmatprep.subr.mxu0 0.0
        %1010 = vmatpush1.xpose.msra.mxu0 0.0
        %1011 = vmatprep.subr.mxu0 0.0
        %1012 = vmatpush1.xpose.msra.mxu0 0.0
        %1013 = vmatprep.subr.mxu0 0.0
        %1014 = vmatpush1.xpose.msra.mxu0 0.0
        %1015 = vmatprep.subr.mxu0 0.0
        %1016 = vmatpush1.xpose.msra.mxu0 0.0
        %1017 = vmatprep.subr.mxu0 0.0
        %1018 = vmatpush1.xpose.msra.mxu0 0.0
        %1019 = vmatprep.subr.mxu0 0.0
        %1020 = vmatpush1.xpose.msra.mxu0 0.0
        %1021 = vmatprep.subr.mxu0 0.0
        %1022 = vmatpush1.xpose.msra.mxu0 %v989
        %1023 = vmatprep.subr.mxu0 0.0
        %1024 = vmatpush2.xpose.msra.mxu0 0.0
        %1025 = vmatprep.subr.mxu0 0.0
        %1026 = vmatpush2.xpose.msra.mxu0 0.0
        %1027 = vmatprep.subr.mxu0 0.0
        %1028 = vmatpush2.xpose.msra.mxu0 0.0
        %1029 = vmatprep.subr.mxu0 0.0
        %1030 = vmatpush2.xpose.msra.mxu0 0.0
        %1031 = vmatprep.subr.mxu0 0.0
        %1032 = vmatpush2.xpose.msra.mxu0 0.0
        %1033 = vmatprep.subr.mxu0 0.0
        %1034 = vmatpush2.xpose.msra.mxu0 0.0
        %1035 = vmatprep.subr.mxu0 0.0
        %1036 = vmatpush2.xpose.msra.mxu0 0.0
        %1037 = vmatprep.subr.mxu0 0.0
        %1038 = vmatpush2.xpose.msra.mxu0 0.0
        %1039 = vmatprep.subr.mxu0 0.0
        %1040 = vmatpush2.xpose.msra.mxu0 0.0
        %1041 = vmatprep.subr.mxu0 0.0
        %1042 = vmatpush2.xpose.msra.mxu0 0.0
        %1043 = vmatprep.subr.mxu0 0.0
        %1044 = vmatpush2.xpose.msra.mxu0 0.0
        %1045 = vmatprep.subr.mxu0 0.0
        %1046 = vmatpush2.xpose.msra.mxu0 0.0
        %1047 = vmatprep.subr.mxu0 0.0
        %1048 = vmatpush2.xpose.msra.mxu0 0.0
        %1049 = vmatprep.subr.mxu0 0.0
        %1050 = vmatpush2.xpose.msra.mxu0 0.0
        %1051 = vmatprep.subr.mxu0 0.0
        %1052 = vmatpush2.xpose.msra.mxu0 0.0
        %1053 = vmatprep.subr.mxu0 0.0
        %1054 = vmatpush2.xpose.msra.mxu0 0.0
        %1055 = vmatprep.mubr.f32.mxu0 0.0
        %1056 = vmatmul.mubr.f32.gmra.mxu0 %v986
        %v1057 = vpop.f32.mrf.mxu0
        %v1058 = vadd.f32 0.0, %v1057
        %v1059 = vpop.f32.mrf.mxu0
        %1060 = vdwg.mxu0
        %v1061 = vsel %vm908, %v982, -inf
        %1062 = vmax.xlane.f32.xlu0 %v1061
        %v1063 = vpop.xlane.xlu0 %1062
        %v1064 = vsel %vm908, %v1058, -inf
        %1065 = vmax.xlane.f32.xlu0 %v1064
        %v1066 = vpop.xlane.xlu0 %1065
        %v1067 = vsub.f32 %v982, %v1063
        %v1068 = vsub.f32 %v1058, %v1066
        %v1069 = vmul.f32 %v1067, 1.442695
        %v1070 = vpow.pop %v1069
        %v1071 = vmul.f32 %v1068, 1.442695
        %v1072 = vpow.pop %v1071
        %v1073 = vsel %vm908, %v1070, 0.0
        %1074 = vadd.xlane.f32.xlu0 %v1073
        %v1075 = vpop.xlane.xlu0 %1074
        %v1076 = vsel %vm908, %v1072, 0.0
        %1077 = vadd.xlane.f32.xlu0 %v1076
        %v1078 = vpop.xlane.xlu0 %1077
        %v1079 = vrcp.pop %v1075
        %v1080 = vrcp.pop %v1078
        %v1081 = vmul.f32 %v1070, %v1079
        %v1082 = vmul.f32 %v1072, %v1080
        %v1084 = vsel %vm908, %v1081, 0
        %1086 = vmatprep.subr.mxu0 0.0
        %1087 = vmatpush1.msra.mxu0 0.0
        %1088 = vmatprep.subr.mxu0 0.0
        %1089 = vmatpush1.msra.mxu0 0.0
        %1090 = vmatprep.subr.mxu0 0.0
        %1091 = vmatpush1.msra.mxu0 0.0
        %1092 = vmatprep.subr.mxu0 0.0
        %1093 = vmatpush1.msra.mxu0 0.0
        %1094 = vmatprep.subr.mxu0 0.0
        %1095 = vmatpush1.msra.mxu0 0.0
        %1096 = vmatprep.subr.mxu0 0.0
        %1097 = vmatpush1.msra.mxu0 0.0
        %1098 = vmatprep.subr.mxu0 0.0
        %1099 = vmatpush1.msra.mxu0 0.0
        %1100 = vmatprep.subr.mxu0 0.0
        %1101 = vmatpush1.msra.mxu0 0.0
        %1102 = vmatprep.subr.mxu0 0.0
        %1103 = vmatpush1.msra.mxu0 0.0
        %1104 = vmatprep.subr.mxu0 0.0
        %1105 = vmatpush1.msra.mxu0 0.0
        %1106 = vmatprep.subr.mxu0 0.0
        %1107 = vmatpush1.msra.mxu0 0.0
        %1108 = vmatprep.subr.mxu0 0.0
        %1109 = vmatpush1.msra.mxu0 0.0
        %1110 = vmatprep.subr.mxu0 0.0
        %1111 = vmatpush1.msra.mxu0 0.0
        %1112 = vmatprep.subr.mxu0 0.0
        %1113 = vmatpush1.msra.mxu0 0.0
        %1114 = vmatprep.subr.mxu0 0.0
        %1115 = vmatpush1.msra.mxu0 0.0
        %1116 = vmatprep.subr.mxu0 0.0
        %1117 = vmatpush1.msra.mxu0 %v900
        %1118 = vmatprep.subr.mxu0 0.0
        %1119 = vmatpush2.msra.mxu0 0.0
        %1120 = vmatprep.subr.mxu0 0.0
        %1121 = vmatpush2.msra.mxu0 0.0
        %1122 = vmatprep.subr.mxu0 0.0
        %1123 = vmatpush2.msra.mxu0 0.0
        %1124 = vmatprep.subr.mxu0 0.0
        %1125 = vmatpush2.msra.mxu0 0.0
        %1126 = vmatprep.subr.mxu0 0.0
        %1127 = vmatpush2.msra.mxu0 0.0
        %1128 = vmatprep.subr.mxu0 0.0
        %1129 = vmatpush2.msra.mxu0 0.0
        %1130 = vmatprep.subr.mxu0 0.0
        %1131 = vmatpush2.msra.mxu0 0.0
        %1132 = vmatprep.subr.mxu0 0.0
        %1133 = vmatpush2.msra.mxu0 0.0
        %1134 = vmatprep.subr.mxu0 0.0
        %1135 = vmatpush2.msra.mxu0 0.0
        %1136 = vmatprep.subr.mxu0 0.0
        %1137 = vmatpush2.msra.mxu0 0.0
        %1138 = vmatprep.subr.mxu0 0.0
        %1139 = vmatpush2.msra.mxu0 0.0
        %1140 = vmatprep.subr.mxu0 0.0
        %1141 = vmatpush2.msra.mxu0 0.0
        %1142 = vmatprep.subr.mxu0 0.0
        %1143 = vmatpush2.msra.mxu0 0.0
        %1144 = vmatprep.subr.mxu0 0.0
        %1145 = vmatpush2.msra.mxu0 0.0
        %1146 = vmatprep.subr.mxu0 0.0
        %1147 = vmatpush2.msra.mxu0 0.0
        %1148 = vmatprep.subr.mxu0 0.0
        %1149 = vmatpush2.msra.mxu0 0.0
        %1150 = vmatprep.mubr.f32.mxu0 0.0
        %1151 = vmatmul.mubr.f32.gmra.mxu0 %v1084
        %v1152 = vpop.f32.mrf.mxu0
        %v1153 = vadd.f32 0.0, %v1152
        %v1154 = vpop.f32.mrf.mxu0
        %1155 = vdwg.mxu0
        %v1157 = vsel %vm908, %v1082, 0
        %1159 = vmatprep.subr.mxu0 0.0
        %1160 = vmatpush1.msra.mxu0 0.0
        %1161 = vmatprep.subr.mxu0 0.0
        %1162 = vmatpush1.msra.mxu0 0.0
        %1163 = vmatprep.subr.mxu0 0.0
        %1164 = vmatpush1.msra.mxu0 0.0
        %1165 = vmatprep.subr.mxu0 0.0
        %1166 = vmatpush1.msra.mxu0 0.0
        %1167 = vmatprep.subr.mxu0 0.0
        %1168 = vmatpush1.msra.mxu0 0.0
        %1169 = vmatprep.subr.mxu0 0.0
        %1170 = vmatpush1.msra.mxu0 0.0
        %1171 = vmatprep.subr.mxu0 0.0
        %1172 = vmatpush1.msra.mxu0 0.0
        %1173 = vmatprep.subr.mxu0 0.0
        %1174 = vmatpush1.msra.mxu0 0.0
        %1175 = vmatprep.subr.mxu0 0.0
        %1176 = vmatpush1.msra.mxu0 0.0
        %1177 = vmatprep.subr.mxu0 0.0
        %1178 = vmatpush1.msra.mxu0 0.0
        %1179 = vmatprep.subr.mxu0 0.0
        %1180 = vmatpush1.msra.mxu0 0.0
        %1181 = vmatprep.subr.mxu0 0.0
        %1182 = vmatpush1.msra.mxu0 0.0
        %1183 = vmatprep.subr.mxu0 0.0
        %1184 = vmatpush1.msra.mxu0 0.0
        %1185 = vmatprep.subr.mxu0 0.0
        %1186 = vmatpush1.msra.mxu0 0.0
        %1187 = vmatprep.subr.mxu0 0.0
        %1188 = vmatpush1.msra.mxu0 0.0
        %1189 = vmatprep.subr.mxu0 0.0
        %1190 = vmatpush1.msra.mxu0 %v905
        %1191 = vmatprep.subr.mxu0 0.0
        %1192 = vmatpush2.msra.mxu0 0.0
        %1193 = vmatprep.subr.mxu0 0.0
        %1194 = vmatpush2.msra.mxu0 0.0
        %1195 = vmatprep.subr.mxu0 0.0
        %1196 = vmatpush2.msra.mxu0 0.0
        %1197 = vmatprep.subr.mxu0 0.0
        %1198 = vmatpush2.msra.mxu0 0.0
        %1199 = vmatprep.subr.mxu0 0.0
        %1200 = vmatpush2.msra.mxu0 0.0
        %1201 = vmatprep.subr.mxu0 0.0
        %1202 = vmatpush2.msra.mxu0 0.0
        %1203 = vmatprep.subr.mxu0 0.0
        %1204 = vmatpush2.msra.mxu0 0.0
        %1205 = vmatprep.subr.mxu0 0.0
        %1206 = vmatpush2.msra.mxu0 0.0
        %1207 = vmatprep.subr.mxu0 0.0
        %1208 = vmatpush2.msra.mxu0 0.0
        %1209 = vmatprep.subr.mxu0 0.0
        %1210 = vmatpush2.msra.mxu0 0.0
        %1211 = vmatprep.subr.mxu0 0.0
        %1212 = vmatpush2.msra.mxu0 0.0
        %1213 = vmatprep.subr.mxu0 0.0
        %1214 = vmatpush2.msra.mxu0 0.0
        %1215 = vmatprep.subr.mxu0 0.0
        %1216 = vmatpush2.msra.mxu0 0.0
        %1217 = vmatprep.subr.mxu0 0.0
        %1218 = vmatpush2.msra.mxu0 0.0
        %1219 = vmatprep.subr.mxu0 0.0
        %1220 = vmatpush2.msra.mxu0 0.0
        %1221 = vmatprep.subr.mxu0 0.0
        %1222 = vmatpush2.msra.mxu0 0.0
        %1223 = vmatprep.mubr.f32.mxu0 0.0
        %1224 = vmatmul.mubr.f32.gmra.mxu0 %v1157
        %v1225 = vpop.f32.mrf.mxu0
        %v1226 = vadd.f32 0.0, %v1225
        %v1227 = vpop.f32.mrf.mxu0
        %1228 = vdwg.mxu0
        %1229 = vrot.lane.b32.xlu0 %v734, 120
        %v1230 = vpop.permute.xlu0 %1229
        %1231 = vrot.lane.b32.xlu0 %v814, 120
        %v1232 = vpop.permute.xlu0 %1231
        %v1233 = vsel %vm908, %v1230, 0
        %v1235 = vsel %vm908, %v1232, 0
        %1237 = vmatprep.subr.mxu0 0.0
        %1238 = vmatpush1.xpose.msra.mxu0 0.0
        %1239 = vmatprep.subr.mxu0 0.0
        %1240 = vmatpush1.xpose.msra.mxu0 0.0
        %1241 = vmatprep.subr.mxu0 0.0
        %1242 = vmatpush1.xpose.msra.mxu0 0.0
        %1243 = vmatprep.subr.mxu0 0.0
        %1244 = vmatpush1.xpose.msra.mxu0 0.0
        %1245 = vmatprep.subr.mxu0 0.0
        %1246 = vmatpush1.xpose.msra.mxu0 0.0
        %1247 = vmatprep.subr.mxu0 0.0
        %1248 = vmatpush1.xpose.msra.mxu0 0.0
        %1249 = vmatprep.subr.mxu0 0.0
        %1250 = vmatpush1.xpose.msra.mxu0 0.0
        %1251 = vmatprep.subr.mxu0 0.0
        %1252 = vmatpush1.xpose.msra.mxu0 0.0
        %1253 = vmatprep.subr.mxu0 0.0
        %1254 = vmatpush1.xpose.msra.mxu0 0.0
        %1255 = vmatprep.subr.mxu0 0.0
        %1256 = vmatpush1.xpose.msra.mxu0 0.0
        %1257 = vmatprep.subr.mxu0 0.0
        %1258 = vmatpush1.xpose.msra.mxu0 0.0
        %1259 = vmatprep.subr.mxu0 0.0
        %1260 = vmatpush1.xpose.msra.mxu0 0.0
        %1261 = vmatprep.subr.mxu0 0.0
        %1262 = vmatpush1.xpose.msra.mxu0 0.0
        %1263 = vmatprep.subr.mxu0 0.0
        %1264 = vmatpush1.xpose.msra.mxu0 0.0
        %1265 = vmatprep.subr.mxu0 0.0
        %1266 = vmatpush1.xpose.msra.mxu0 0.0
        %1267 = vmatprep.subr.mxu0 0.0
        %1268 = vmatpush1.xpose.msra.mxu0 %v1235
        %1269 = vmatprep.subr.mxu0 0.0
        %1270 = vmatpush2.xpose.msra.mxu0 0.0
        %1271 = vmatprep.subr.mxu0 0.0
        %1272 = vmatpush2.xpose.msra.mxu0 0.0
        %1273 = vmatprep.subr.mxu0 0.0
        %1274 = vmatpush2.xpose.msra.mxu0 0.0
        %1275 = vmatprep.subr.mxu0 0.0
        %1276 = vmatpush2.xpose.msra.mxu0 0.0
        %1277 = vmatprep.subr.mxu0 0.0
        %1278 = vmatpush2.xpose.msra.mxu0 0.0
        %1279 = vmatprep.subr.mxu0 0.0
        %1280 = vmatpush2.xpose.msra.mxu0 0.0
        %1281 = vmatprep.subr.mxu0 0.0
        %1282 = vmatpush2.xpose.msra.mxu0 0.0
        %1283 = vmatprep.subr.mxu0 0.0
        %1284 = vmatpush2.xpose.msra.mxu0 0.0
        %1285 = vmatprep.subr.mxu0 0.0
        %1286 = vmatpush2.xpose.msra.mxu0 0.0
        %1287 = vmatprep.subr.mxu0 0.0
        %1288 = vmatpush2.xpose.msra.mxu0 0.0
        %1289 = vmatprep.subr.mxu0 0.0
        %1290 = vmatpush2.xpose.msra.mxu0 0.0
        %1291 = vmatprep.subr.mxu0 0.0
        %1292 = vmatpush2.xpose.msra.mxu0 0.0
        %1293 = vmatprep.subr.mxu0 0.0
        %1294 = vmatpush2.xpose.msra.mxu0 0.0
        %1295 = vmatprep.subr.mxu0 0.0
        %1296 = vmatpush2.xpose.msra.mxu0 0.0
        %1297 = vmatprep.subr.mxu0 0.0
        %1298 = vmatpush2.xpose.msra.mxu0 0.0
        %1299 = vmatprep.subr.mxu0 0.0
        %1300 = vmatpush2.xpose.msra.mxu0 0.0
        %1301 = vmatprep.mubr.f32.mxu0 0.0
        %1302 = vmatmul.mubr.f32.gmra.mxu0 %v1233
        %v1303 = vpop.f32.mrf.mxu0
        %v1304 = vadd.f32 0.0, %v1303
        %v1305 = vpop.f32.mrf.mxu0
        %1306 = vdwg.mxu0
        %1307 = vrot.lane.b32.xlu0 %v735, 120
        %v1308 = vpop.permute.xlu0 %1307
        %1309 = vrot.lane.b32.xlu0 %v819, 120
        %v1310 = vpop.permute.xlu0 %1309
        %v1311 = vsel %vm908, %v1308, 0
        %v1313 = vsel %vm908, %v1310, 0
        %1315 = vmatprep.subr.mxu0 0.0
        %1316 = vmatpush1.xpose.msra.mxu0 0.0
        %1317 = vmatprep.subr.mxu0 0.0
        %1318 = vmatpush1.xpose.msra.mxu0 0.0
        %1319 = vmatprep.subr.mxu0 0.0
        %1320 = vmatpush1.xpose.msra.mxu0 0.0
        %1321 = vmatprep.subr.mxu0 0.0
        %1322 = vmatpush1.xpose.msra.mxu0 0.0
        %1323 = vmatprep.subr.mxu0 0.0
        %1324 = vmatpush1.xpose.msra.mxu0 0.0
        %1325 = vmatprep.subr.mxu0 0.0
        %1326 = vmatpush1.xpose.msra.mxu0 0.0
        %1327 = vmatprep.subr.mxu0 0.0
        %1328 = vmatpush1.xpose.msra.mxu0 0.0
        %1329 = vmatprep.subr.mxu0 0.0
        %1330 = vmatpush1.xpose.msra.mxu0 0.0
        %1331 = vmatprep.subr.mxu0 0.0
        %1332 = vmatpush1.xpose.msra.mxu0 0.0
        %1333 = vmatprep.subr.mxu0 0.0
        %1334 = vmatpush1.xpose.msra.mxu0 0.0
        %1335 = vmatprep.subr.mxu0 0.0
        %1336 = vmatpush1.xpose.msra.mxu0 0.0
        %1337 = vmatprep.subr.mxu0 0.0
        %1338 = vmatpush1.xpose.msra.mxu0 0.0
        %1339 = vmatprep.subr.mxu0 0.0
        %1340 = vmatpush1.xpose.msra.mxu0 0.0
        %1341 = vmatprep.subr.mxu0 0.0
        %1342 = vmatpush1.xpose.msra.mxu0 0.0
        %1343 = vmatprep.subr.mxu0 0.0
        %1344 = vmatpush1.xpose.msra.mxu0 0.0
        %1345 = vmatprep.subr.mxu0 0.0
        %1346 = vmatpush1.xpose.msra.mxu0 %v1313
        %1347 = vmatprep.subr.mxu0 0.0
        %1348 = vmatpush2.xpose.msra.mxu0 0.0
        %1349 = vmatprep.subr.mxu0 0.0
        %1350 = vmatpush2.xpose.msra.mxu0 0.0
        %1351 = vmatprep.subr.mxu0 0.0
        %1352 = vmatpush2.xpose.msra.mxu0 0.0
        %1353 = vmatprep.subr.mxu0 0.0
        %1354 = vmatpush2.xpose.msra.mxu0 0.0
        %1355 = vmatprep.subr.mxu0 0.0
        %1356 = vmatpush2.xpose.msra.mxu0 0.0
        %1357 = vmatprep.subr.mxu0 0.0
        %1358 = vmatpush2.xpose.msra.mxu0 0.0
        %1359 = vmatprep.subr.mxu0 0.0
        %1360 = vmatpush2.xpose.msra.mxu0 0.0
        %1361 = vmatprep.subr.mxu0 0.0
        %1362 = vmatpush2.xpose.msra.mxu0 0.0
        %1363 = vmatprep.subr.mxu0 0.0
        %1364 = vmatpush2.xpose.msra.mxu0 0.0
        %1365 = vmatprep.subr.mxu0 0.0
        %1366 = vmatpush2.xpose.msra.mxu0 0.0
        %1367 = vmatprep.subr.mxu0 0.0
        %1368 = vmatpush2.xpose.msra.mxu0 0.0
        %1369 = vmatprep.subr.mxu0 0.0
        %1370 = vmatpush2.xpose.msra.mxu0 0.0
        %1371 = vmatprep.subr.mxu0 0.0
        %1372 = vmatpush2.xpose.msra.mxu0 0.0
        %1373 = vmatprep.subr.mxu0 0.0
        %1374 = vmatpush2.xpose.msra.mxu0 0.0
        %1375 = vmatprep.subr.mxu0 0.0
        %1376 = vmatpush2.xpose.msra.mxu0 0.0
        %1377 = vmatprep.subr.mxu0 0.0
        %1378 = vmatpush2.xpose.msra.mxu0 0.0
        %1379 = vmatprep.mubr.f32.mxu0 0.0
        %1380 = vmatmul.mubr.f32.gmra.mxu0 %v1311
        %v1381 = vpop.f32.mrf.mxu0
        %v1382 = vadd.f32 0.0, %v1381
        %v1383 = vpop.f32.mrf.mxu0
        %1384 = vdwg.mxu0
        %v1385 = vsel %vm908, %v1304, -inf
        %1386 = vmax.xlane.f32.xlu0 %v1385
        %v1387 = vpop.xlane.xlu0 %1386
        %v1388 = vsel %vm908, %v1382, -inf
        %1389 = vmax.xlane.f32.xlu0 %v1388
        %v1390 = vpop.xlane.xlu0 %1389
        %v1391 = vsub.f32 %v1304, %v1387
        %v1392 = vsub.f32 %v1382, %v1390
        %v1393 = vmul.f32 %v1391, 1.442695
        %v1394 = vpow.pop %v1393
        %v1395 = vmul.f32 %v1392, 1.442695
        %v1396 = vpow.pop %v1395
        %v1397 = vsel %vm908, %v1394, 0.0
        %1398 = vadd.xlane.f32.xlu0 %v1397
        %v1399 = vpop.xlane.xlu0 %1398
        %v1400 = vsel %vm908, %v1396, 0.0
        %1401 = vadd.xlane.f32.xlu0 %v1400
        %v1402 = vpop.xlane.xlu0 %1401
        %v1403 = vrcp.pop %v1399
        %v1404 = vrcp.pop %v1402
        %v1405 = vmul.f32 %v1394, %v1403
        %v1406 = vmul.f32 %v1396, %v1404
        %1408 = vrot.lane.b32.xlu0 %v900, 120
        %v1409 = vpop.permute.xlu0 %1408
        %v1412 = vsel %vm908, %v1405, 0
        %1414 = vmatprep.subr.mxu0 0.0
        %1415 = vmatpush1.msra.mxu0 0.0
        %1416 = vmatprep.subr.mxu0 0.0
        %1417 = vmatpush1.msra.mxu0 0.0
        %1418 = vmatprep.subr.mxu0 0.0
        %1419 = vmatpush1.msra.mxu0 0.0
        %1420 = vmatprep.subr.mxu0 0.0
        %1421 = vmatpush1.msra.mxu0 0.0
        %1422 = vmatprep.subr.mxu0 0.0
        %1423 = vmatpush1.msra.mxu0 0.0
        %1424 = vmatprep.subr.mxu0 0.0
        %1425 = vmatpush1.msra.mxu0 0.0
        %1426 = vmatprep.subr.mxu0 0.0
        %1427 = vmatpush1.msra.mxu0 0.0
        %1428 = vmatprep.subr.mxu0 0.0
        %1429 = vmatpush1.msra.mxu0 0.0
        %1430 = vmatprep.subr.mxu0 0.0
        %1431 = vmatpush1.msra.mxu0 0.0
        %1432 = vmatprep.subr.mxu0 0.0
        %1433 = vmatpush1.msra.mxu0 0.0
        %1434 = vmatprep.subr.mxu0 0.0
        %1435 = vmatpush1.msra.mxu0 0.0
        %1436 = vmatprep.subr.mxu0 0.0
        %1437 = vmatpush1.msra.mxu0 0.0
        %1438 = vmatprep.subr.mxu0 0.0
        %1439 = vmatpush1.msra.mxu0 0.0
        %1440 = vmatprep.subr.mxu0 0.0
        %1441 = vmatpush1.msra.mxu0 0.0
        %1442 = vmatprep.subr.mxu0 0.0
        %1443 = vmatpush1.msra.mxu0 0.0
        %1444 = vmatprep.subr.mxu0 0.0
        %1445 = vmatpush1.msra.mxu0 %v1409
        %1446 = vmatprep.subr.mxu0 0.0
        %1447 = vmatpush2.msra.mxu0 0.0
        %1448 = vmatprep.subr.mxu0 0.0
        %1449 = vmatpush2.msra.mxu0 0.0
        %1450 = vmatprep.subr.mxu0 0.0
        %1451 = vmatpush2.msra.mxu0 0.0
        %1452 = vmatprep.subr.mxu0 0.0
        %1453 = vmatpush2.msra.mxu0 0.0
        %1454 = vmatprep.subr.mxu0 0.0
        %1455 = vmatpush2.msra.mxu0 0.0
        %1456 = vmatprep.subr.mxu0 0.0
        %1457 = vmatpush2.msra.mxu0 0.0
        %1458 = vmatprep.subr.mxu0 0.0
        %1459 = vmatpush2.msra.mxu0 0.0
        %1460 = vmatprep.subr.mxu0 0.0
        %1461 = vmatpush2.msra.mxu0 0.0
        %1462 = vmatprep.subr.mxu0 0.0
        %1463 = vmatpush2.msra.mxu0 0.0
        %1464 = vmatprep.subr.mxu0 0.0
        %1465 = vmatpush2.msra.mxu0 0.0
        %1466 = vmatprep.subr.mxu0 0.0
        %1467 = vmatpush2.msra.mxu0 0.0
        %1468 = vmatprep.subr.mxu0 0.0
        %1469 = vmatpush2.msra.mxu0 0.0
        %1470 = vmatprep.subr.mxu0 0.0
        %1471 = vmatpush2.msra.mxu0 0.0
        %1472 = vmatprep.subr.mxu0 0.0
        %1473 = vmatpush2.msra.mxu0 0.0
        %1474 = vmatprep.subr.mxu0 0.0
        %1475 = vmatpush2.msra.mxu0 0.0
        %1476 = vmatprep.subr.mxu0 0.0
        %1477 = vmatpush2.msra.mxu0 0.0
        %1478 = vmatprep.mubr.f32.mxu0 0.0
        %1479 = vmatmul.mubr.f32.gmra.mxu0 %v1412
        %v1480 = vpop.f32.mrf.mxu0
        %v1481 = vadd.f32 0.0, %v1480
        %v1482 = vpop.f32.mrf.mxu0
        %1483 = vdwg.mxu0
        %1485 = vrot.lane.b32.xlu0 %v905, 120
        %v1486 = vpop.permute.xlu0 %1485
        %v1489 = vsel %vm908, %v1406, 0
        %1491 = vmatprep.subr.mxu0 0.0
        %1492 = vmatpush1.msra.mxu0 0.0
        %1493 = vmatprep.subr.mxu0 0.0
        %1494 = vmatpush1.msra.mxu0 0.0
        %1495 = vmatprep.subr.mxu0 0.0
        %1496 = vmatpush1.msra.mxu0 0.0
        %1497 = vmatprep.subr.mxu0 0.0
        %1498 = vmatpush1.msra.mxu0 0.0
        %1499 = vmatprep.subr.mxu0 0.0
        %1500 = vmatpush1.msra.mxu0 0.0
        %1501 = vmatprep.subr.mxu0 0.0
        %1502 = vmatpush1.msra.mxu0 0.0
        %1503 = vmatprep.subr.mxu0 0.0
        %1504 = vmatpush1.msra.mxu0 0.0
        %1505 = vmatprep.subr.mxu0 0.0
        %1506 = vmatpush1.msra.mxu0 0.0
        %1507 = vmatprep.subr.mxu0 0.0
        %1508 = vmatpush1.msra.mxu0 0.0
        %1509 = vmatprep.subr.mxu0 0.0
        %1510 = vmatpush1.msra.mxu0 0.0
        %1511 = vmatprep.subr.mxu0 0.0
        %1512 = vmatpush1.msra.mxu0 0.0
        %1513 = vmatprep.subr.mxu0 0.0
        %1514 = vmatpush1.msra.mxu0 0.0
        %1515 = vmatprep.subr.mxu0 0.0
        %1516 = vmatpush1.msra.mxu0 0.0
        %1517 = vmatprep.subr.mxu0 0.0
        %1518 = vmatpush1.msra.mxu0 0.0
        %1519 = vmatprep.subr.mxu0 0.0
        %1520 = vmatpush1.msra.mxu0 0.0
        %1521 = vmatprep.subr.mxu0 0.0
        %1522 = vmatpush1.msra.mxu0 %v1486
        %1523 = vmatprep.subr.mxu0 0.0
        %1524 = vmatpush2.msra.mxu0 0.0
        %1525 = vmatprep.subr.mxu0 0.0
        %1526 = vmatpush2.msra.mxu0 0.0
        %1527 = vmatprep.subr.mxu0 0.0
        %1528 = vmatpush2.msra.mxu0 0.0
        %1529 = vmatprep.subr.mxu0 0.0
        %1530 = vmatpush2.msra.mxu0 0.0
        %1531 = vmatprep.subr.mxu0 0.0
        %1532 = vmatpush2.msra.mxu0 0.0
        %1533 = vmatprep.subr.mxu0 0.0
        %1534 = vmatpush2.msra.mxu0 0.0
        %1535 = vmatprep.subr.mxu0 0.0
        %1536 = vmatpush2.msra.mxu0 0.0
        %1537 = vmatprep.subr.mxu0 0.0
        %1538 = vmatpush2.msra.mxu0 0.0
        %1539 = vmatprep.subr.mxu0 0.0
        %1540 = vmatpush2.msra.mxu0 0.0
        %1541 = vmatprep.subr.mxu0 0.0
        %1542 = vmatpush2.msra.mxu0 0.0
        %1543 = vmatprep.subr.mxu0 0.0
        %1544 = vmatpush2.msra.mxu0 0.0
        %1545 = vmatprep.subr.mxu0 0.0
        %1546 = vmatpush2.msra.mxu0 0.0
        %1547 = vmatprep.subr.mxu0 0.0
        %1548 = vmatpush2.msra.mxu0 0.0
        %1549 = vmatprep.subr.mxu0 0.0
        %1550 = vmatpush2.msra.mxu0 0.0
        %1551 = vmatprep.subr.mxu0 0.0
        %1552 = vmatpush2.msra.mxu0 0.0
        %1553 = vmatprep.subr.mxu0 0.0
        %1554 = vmatpush2.msra.mxu0 0.0
        %1555 = vmatprep.mubr.f32.mxu0 0.0
        %1556 = vmatmul.mubr.f32.gmra.mxu0 %v1489
        %v1557 = vpop.f32.mrf.mxu0
        %v1558 = vadd.f32 0.0, %v1557
        %v1559 = vpop.f32.mrf.mxu0
        %1560 = vdwg.mxu0
        %1561 = vrot.lane.b32.xlu0 %v734, 112
        %v1562 = vpop.permute.xlu0 %1561
        %1563 = vrot.lane.b32.xlu0 %v814, 112
        %v1564 = vpop.permute.xlu0 %1563
        %v1565 = vsel %vm908, %v1562, 0
        %v1567 = vsel %vm908, %v1564, 0
        %1569 = vmatprep.subr.mxu0 0.0
        %1570 = vmatpush1.xpose.msra.mxu0 0.0
        %1571 = vmatprep.subr.mxu0 0.0
        %1572 = vmatpush1.xpose.msra.mxu0 0.0
        %1573 = vmatprep.subr.mxu0 0.0
        %1574 = vmatpush1.xpose.msra.mxu0 0.0
        %1575 = vmatprep.subr.mxu0 0.0
        %1576 = vmatpush1.xpose.msra.mxu0 0.0
        %1577 = vmatprep.subr.mxu0 0.0
        %1578 = vmatpush1.xpose.msra.mxu0 0.0
        %1579 = vmatprep.subr.mxu0 0.0
        %1580 = vmatpush1.xpose.msra.mxu0 0.0
        %1581 = vmatprep.subr.mxu0 0.0
        %1582 = vmatpush1.xpose.msra.mxu0 0.0
        %1583 = vmatprep.subr.mxu0 0.0
        %1584 = vmatpush1.xpose.msra.mxu0 0.0
        %1585 = vmatprep.subr.mxu0 0.0
        %1586 = vmatpush1.xpose.msra.mxu0 0.0
        %1587 = vmatprep.subr.mxu0 0.0
        %1588 = vmatpush1.xpose.msra.mxu0 0.0
        %1589 = vmatprep.subr.mxu0 0.0
        %1590 = vmatpush1.xpose.msra.mxu0 0.0
        %1591 = vmatprep.subr.mxu0 0.0
        %1592 = vmatpush1.xpose.msra.mxu0 0.0
        %1593 = vmatprep.subr.mxu0 0.0
        %1594 = vmatpush1.xpose.msra.mxu0 0.0
        %1595 = vmatprep.subr.mxu0 0.0
        %1596 = vmatpush1.xpose.msra.mxu0 0.0
        %1597 = vmatprep.subr.mxu0 0.0
        %1598 = vmatpush1.xpose.msra.mxu0 0.0
        %1599 = vmatprep.subr.mxu0 0.0
        %1600 = vmatpush1.xpose.msra.mxu0 %v1567
        %1601 = vmatprep.subr.mxu0 0.0
        %1602 = vmatpush2.xpose.msra.mxu0 0.0
        %1603 = vmatprep.subr.mxu0 0.0
        %1604 = vmatpush2.xpose.msra.mxu0 0.0
        %1605 = vmatprep.subr.mxu0 0.0
        %1606 = vmatpush2.xpose.msra.mxu0 0.0
        %1607 = vmatprep.subr.mxu0 0.0
        %1608 = vmatpush2.xpose.msra.mxu0 0.0
        %1609 = vmatprep.subr.mxu0 0.0
        %1610 = vmatpush2.xpose.msra.mxu0 0.0
        %1611 = vmatprep.subr.mxu0 0.0
        %1612 = vmatpush2.xpose.msra.mxu0 0.0
        %1613 = vmatprep.subr.mxu0 0.0
        %1614 = vmatpush2.xpose.msra.mxu0 0.0
        %1615 = vmatprep.subr.mxu0 0.0
        %1616 = vmatpush2.xpose.msra.mxu0 0.0
        %1617 = vmatprep.subr.mxu0 0.0
        %1618 = vmatpush2.xpose.msra.mxu0 0.0
        %1619 = vmatprep.subr.mxu0 0.0
        %1620 = vmatpush2.xpose.msra.mxu0 0.0
        %1621 = vmatprep.subr.mxu0 0.0
        %1622 = vmatpush2.xpose.msra.mxu0 0.0
        %1623 = vmatprep.subr.mxu0 0.0
        %1624 = vmatpush2.xpose.msra.mxu0 0.0
        %1625 = vmatprep.subr.mxu0 0.0
        %1626 = vmatpush2.xpose.msra.mxu0 0.0
        %1627 = vmatprep.subr.mxu0 0.0
        %1628 = vmatpush2.xpose.msra.mxu0 0.0
        %1629 = vmatprep.subr.mxu0 0.0
        %1630 = vmatpush2.xpose.msra.mxu0 0.0
        %1631 = vmatprep.subr.mxu0 0.0
        %1632 = vmatpush2.xpose.msra.mxu0 0.0
        %1633 = vmatprep.mubr.f32.mxu0 0.0
        %1634 = vmatmul.mubr.f32.gmra.mxu0 %v1565
        %v1635 = vpop.f32.mrf.mxu0
        %v1636 = vadd.f32 0.0, %v1635
        %v1637 = vpop.f32.mrf.mxu0
        %1638 = vdwg.mxu0
        %1639 = vrot.lane.b32.xlu0 %v735, 112
        %v1640 = vpop.permute.xlu0 %1639
        %1641 = vrot.lane.b32.xlu0 %v819, 112
        %v1642 = vpop.permute.xlu0 %1641
        %v1643 = vsel %vm908, %v1640, 0
        %v1645 = vsel %vm908, %v1642, 0
        %1647 = vmatprep.subr.mxu0 0.0
        %1648 = vmatpush1.xpose.msra.mxu0 0.0
        %1649 = vmatprep.subr.mxu0 0.0
        %1650 = vmatpush1.xpose.msra.mxu0 0.0
        %1651 = vmatprep.subr.mxu0 0.0
        %1652 = vmatpush1.xpose.msra.mxu0 0.0
        %1653 = vmatprep.subr.mxu0 0.0
        %1654 = vmatpush1.xpose.msra.mxu0 0.0
        %1655 = vmatprep.subr.mxu0 0.0
        %1656 = vmatpush1.xpose.msra.mxu0 0.0
        %1657 = vmatprep.subr.mxu0 0.0
        %1658 = vmatpush1.xpose.msra.mxu0 0.0
        %1659 = vmatprep.subr.mxu0 0.0
        %1660 = vmatpush1.xpose.msra.mxu0 0.0
        %1661 = vmatprep.subr.mxu0 0.0
        %1662 = vmatpush1.xpose.msra.mxu0 0.0
        %1663 = vmatprep.subr.mxu0 0.0
        %1664 = vmatpush1.xpose.msra.mxu0 0.0
        %1665 = vmatprep.subr.mxu0 0.0
        %1666 = vmatpush1.xpose.msra.mxu0 0.0
        %1667 = vmatprep.subr.mxu0 0.0
        %1668 = vmatpush1.xpose.msra.mxu0 0.0
        %1669 = vmatprep.subr.mxu0 0.0
        %1670 = vmatpush1.xpose.msra.mxu0 0.0
        %1671 = vmatprep.subr.mxu0 0.0
        %1672 = vmatpush1.xpose.msra.mxu0 0.0
        %1673 = vmatprep.subr.mxu0 0.0
        %1674 = vmatpush1.xpose.msra.mxu0 0.0
        %1675 = vmatprep.subr.mxu0 0.0
        %1676 = vmatpush1.xpose.msra.mxu0 0.0
        %1677 = vmatprep.subr.mxu0 0.0
        %1678 = vmatpush1.xpose.msra.mxu0 %v1645
        %1679 = vmatprep.subr.mxu0 0.0
        %1680 = vmatpush2.xpose.msra.mxu0 0.0
        %1681 = vmatprep.subr.mxu0 0.0
        %1682 = vmatpush2.xpose.msra.mxu0 0.0
        %1683 = vmatprep.subr.mxu0 0.0
        %1684 = vmatpush2.xpose.msra.mxu0 0.0
        %1685 = vmatprep.subr.mxu0 0.0
        %1686 = vmatpush2.xpose.msra.mxu0 0.0
        %1687 = vmatprep.subr.mxu0 0.0
        %1688 = vmatpush2.xpose.msra.mxu0 0.0
        %1689 = vmatprep.subr.mxu0 0.0
        %1690 = vmatpush2.xpose.msra.mxu0 0.0
        %1691 = vmatprep.subr.mxu0 0.0
        %1692 = vmatpush2.xpose.msra.mxu0 0.0
        %1693 = vmatprep.subr.mxu0 0.0
        %1694 = vmatpush2.xpose.msra.mxu0 0.0
        %1695 = vmatprep.subr.mxu0 0.0
        %1696 = vmatpush2.xpose.msra.mxu0 0.0
        %1697 = vmatprep.subr.mxu0 0.0
        %1698 = vmatpush2.xpose.msra.mxu0 0.0
        %1699 = vmatprep.subr.mxu0 0.0
        %1700 = vmatpush2.xpose.msra.mxu0 0.0
        %1701 = vmatprep.subr.mxu0 0.0
        %1702 = vmatpush2.xpose.msra.mxu0 0.0
        %1703 = vmatprep.subr.mxu0 0.0
        %1704 = vmatpush2.xpose.msra.mxu0 0.0
        %1705 = vmatprep.subr.mxu0 0.0
        %1706 = vmatpush2.xpose.msra.mxu0 0.0
        %1707 = vmatprep.subr.mxu0 0.0
        %1708 = vmatpush2.xpose.msra.mxu0 0.0
        %1709 = vmatprep.subr.mxu0 0.0
        %1710 = vmatpush2.xpose.msra.mxu0 0.0
        %1711 = vmatprep.mubr.f32.mxu0 0.0
        %1712 = vmatmul.mubr.f32.gmra.mxu0 %v1643
        %v1713 = vpop.f32.mrf.mxu0
        %v1714 = vadd.f32 0.0, %v1713
        %v1715 = vpop.f32.mrf.mxu0
        %1716 = vdwg.mxu0
        %v1717 = vsel %vm908, %v1636, -inf
        %1718 = vmax.xlane.f32.xlu0 %v1717
        %v1719 = vpop.xlane.xlu0 %1718
        %v1720 = vsel %vm908, %v1714, -inf
        %1721 = vmax.xlane.f32.xlu0 %v1720
        %v1722 = vpop.xlane.xlu0 %1721
        %v1723 = vsub.f32 %v1636, %v1719
        %v1724 = vsub.f32 %v1714, %v1722
        %v1725 = vmul.f32 %v1723, 1.442695
        %v1726 = vpow.pop %v1725
        %v1727 = vmul.f32 %v1724, 1.442695
        %v1728 = vpow.pop %v1727
        %v1729 = vsel %vm908, %v1726, 0.0
        %1730 = vadd.xlane.f32.xlu0 %v1729
        %v1731 = vpop.xlane.xlu0 %1730
        %v1732 = vsel %vm908, %v1728, 0.0
        %1733 = vadd.xlane.f32.xlu0 %v1732
        %v1734 = vpop.xlane.xlu0 %1733
        %v1735 = vrcp.pop %v1731
        %v1736 = vrcp.pop %v1734
        %v1737 = vmul.f32 %v1726, %v1735
        %v1738 = vmul.f32 %v1728, %v1736
        %1739 = vrot.lane.b32.xlu0 %v900, 112
        %v1740 = vpop.permute.xlu0 %1739
        %v1743 = vsel %vm908, %v1737, 0
        %1745 = vmatprep.subr.mxu0 0.0
        %1746 = vmatpush1.msra.mxu0 0.0
        %1747 = vmatprep.subr.mxu0 0.0
        %1748 = vmatpush1.msra.mxu0 0.0
        %1749 = vmatprep.subr.mxu0 0.0
        %1750 = vmatpush1.msra.mxu0 0.0
        %1751 = vmatprep.subr.mxu0 0.0
        %1752 = vmatpush1.msra.mxu0 0.0
        %1753 = vmatprep.subr.mxu0 0.0
        %1754 = vmatpush1.msra.mxu0 0.0
        %1755 = vmatprep.subr.mxu0 0.0
        %1756 = vmatpush1.msra.mxu0 0.0
        %1757 = vmatprep.subr.mxu0 0.0
        %1758 = vmatpush1.msra.mxu0 0.0
        %1759 = vmatprep.subr.mxu0 0.0
        %1760 = vmatpush1.msra.mxu0 0.0
        %1761 = vmatprep.subr.mxu0 0.0
        %1762 = vmatpush1.msra.mxu0 0.0
        %1763 = vmatprep.subr.mxu0 0.0
        %1764 = vmatpush1.msra.mxu0 0.0
        %1765 = vmatprep.subr.mxu0 0.0
        %1766 = vmatpush1.msra.mxu0 0.0
        %1767 = vmatprep.subr.mxu0 0.0
        %1768 = vmatpush1.msra.mxu0 0.0
        %1769 = vmatprep.subr.mxu0 0.0
        %1770 = vmatpush1.msra.mxu0 0.0
        %1771 = vmatprep.subr.mxu0 0.0
        %1772 = vmatpush1.msra.mxu0 0.0
        %1773 = vmatprep.subr.mxu0 0.0
        %1774 = vmatpush1.msra.mxu0 0.0
        %1775 = vmatprep.subr.mxu0 0.0
        %1776 = vmatpush1.msra.mxu0 %v1740
        %1777 = vmatprep.subr.mxu0 0.0
        %1778 = vmatpush2.msra.mxu0 0.0
        %1779 = vmatprep.subr.mxu0 0.0
        %1780 = vmatpush2.msra.mxu0 0.0
        %1781 = vmatprep.subr.mxu0 0.0
        %1782 = vmatpush2.msra.mxu0 0.0
        %1783 = vmatprep.subr.mxu0 0.0
        %1784 = vmatpush2.msra.mxu0 0.0
        %1785 = vmatprep.subr.mxu0 0.0
        %1786 = vmatpush2.msra.mxu0 0.0
        %1787 = vmatprep.subr.mxu0 0.0
        %1788 = vmatpush2.msra.mxu0 0.0
        %1789 = vmatprep.subr.mxu0 0.0
        %1790 = vmatpush2.msra.mxu0 0.0
        %1791 = vmatprep.subr.mxu0 0.0
        %1792 = vmatpush2.msra.mxu0 0.0
        %1793 = vmatprep.subr.mxu0 0.0
        %1794 = vmatpush2.msra.mxu0 0.0
        %1795 = vmatprep.subr.mxu0 0.0
        %1796 = vmatpush2.msra.mxu0 0.0
        %1797 = vmatprep.subr.mxu0 0.0
        %1798 = vmatpush2.msra.mxu0 0.0
        %1799 = vmatprep.subr.mxu0 0.0
        %1800 = vmatpush2.msra.mxu0 0.0
        %1801 = vmatprep.subr.mxu0 0.0
        %1802 = vmatpush2.msra.mxu0 0.0
        %1803 = vmatprep.subr.mxu0 0.0
        %1804 = vmatpush2.msra.mxu0 0.0
        %1805 = vmatprep.subr.mxu0 0.0
        %1806 = vmatpush2.msra.mxu0 0.0
        %1807 = vmatprep.subr.mxu0 0.0
        %1808 = vmatpush2.msra.mxu0 0.0
        %1809 = vmatprep.mubr.f32.mxu0 0.0
        %1810 = vmatmul.mubr.f32.gmra.mxu0 %v1743
        %v1811 = vpop.f32.mrf.mxu0
        %v1812 = vadd.f32 0.0, %v1811
        %v1813 = vpop.f32.mrf.mxu0
        %1814 = vdwg.mxu0
        %1815 = vrot.lane.b32.xlu0 %v905, 112
        %v1816 = vpop.permute.xlu0 %1815
        %v1819 = vsel %vm908, %v1738, 0
        %1821 = vmatprep.subr.mxu0 0.0
        %1822 = vmatpush1.msra.mxu0 0.0
        %1823 = vmatprep.subr.mxu0 0.0
        %1824 = vmatpush1.msra.mxu0 0.0
        %1825 = vmatprep.subr.mxu0 0.0
        %1826 = vmatpush1.msra.mxu0 0.0
        %1827 = vmatprep.subr.mxu0 0.0
        %1828 = vmatpush1.msra.mxu0 0.0
        %1829 = vmatprep.subr.mxu0 0.0
        %1830 = vmatpush1.msra.mxu0 0.0
        %1831 = vmatprep.subr.mxu0 0.0
        %1832 = vmatpush1.msra.mxu0 0.0
        %1833 = vmatprep.subr.mxu0 0.0
        %1834 = vmatpush1.msra.mxu0 0.0
        %1835 = vmatprep.subr.mxu0 0.0
        %1836 = vmatpush1.msra.mxu0 0.0
        %1837 = vmatprep.subr.mxu0 0.0
        %1838 = vmatpush1.msra.mxu0 0.0
        %1839 = vmatprep.subr.mxu0 0.0
        %1840 = vmatpush1.msra.mxu0 0.0
        %1841 = vmatprep.subr.mxu0 0.0
        %1842 = vmatpush1.msra.mxu0 0.0
        %1843 = vmatprep.subr.mxu0 0.0
        %1844 = vmatpush1.msra.mxu0 0.0
        %1845 = vmatprep.subr.mxu0 0.0
        %1846 = vmatpush1.msra.mxu0 0.0
        %1847 = vmatprep.subr.mxu0 0.0
        %1848 = vmatpush1.msra.mxu0 0.0
        %1849 = vmatprep.subr.mxu0 0.0
        %1850 = vmatpush1.msra.mxu0 0.0
        %1851 = vmatprep.subr.mxu0 0.0
        %1852 = vmatpush1.msra.mxu0 %v1816
        %1853 = vmatprep.subr.mxu0 0.0
        %1854 = vmatpush2.msra.mxu0 0.0
        %1855 = vmatprep.subr.mxu0 0.0
        %1856 = vmatpush2.msra.mxu0 0.0
        %1857 = vmatprep.subr.mxu0 0.0
        %1858 = vmatpush2.msra.mxu0 0.0
        %1859 = vmatprep.subr.mxu0 0.0
        %1860 = vmatpush2.msra.mxu0 0.0
        %1861 = vmatprep.subr.mxu0 0.0
        %1862 = vmatpush2.msra.mxu0 0.0
        %1863 = vmatprep.subr.mxu0 0.0
        %1864 = vmatpush2.msra.mxu0 0.0
        %1865 = vmatprep.subr.mxu0 0.0
        %1866 = vmatpush2.msra.mxu0 0.0
        %1867 = vmatprep.subr.mxu0 0.0
        %1868 = vmatpush2.msra.mxu0 0.0
        %1869 = vmatprep.subr.mxu0 0.0
        %1870 = vmatpush2.msra.mxu0 0.0
        %1871 = vmatprep.subr.mxu0 0.0
        %1872 = vmatpush2.msra.mxu0 0.0
        %1873 = vmatprep.subr.mxu0 0.0
        %1874 = vmatpush2.msra.mxu0 0.0
        %1875 = vmatprep.subr.mxu0 0.0
        %1876 = vmatpush2.msra.mxu0 0.0
        %1877 = vmatprep.subr.mxu0 0.0
        %1878 = vmatpush2.msra.mxu0 0.0
        %1879 = vmatprep.subr.mxu0 0.0
        %1880 = vmatpush2.msra.mxu0 0.0
        %1881 = vmatprep.subr.mxu0 0.0
        %1882 = vmatpush2.msra.mxu0 0.0
        %1883 = vmatprep.subr.mxu0 0.0
        %1884 = vmatpush2.msra.mxu0 0.0
        %1885 = vmatprep.mubr.f32.mxu0 0.0
        %1886 = vmatmul.mubr.f32.gmra.mxu0 %v1819
        %v1887 = vpop.f32.mrf.mxu0
        %v1888 = vadd.f32 0.0, %v1887
        %v1889 = vpop.f32.mrf.mxu0
        %1890 = vdwg.mxu0
        %1891 = vrot.lane.b32.xlu0 %v734, 104
        %v1892 = vpop.permute.xlu0 %1891
        %1893 = vrot.lane.b32.xlu0 %v814, 104
        %v1894 = vpop.permute.xlu0 %1893
        %v1895 = vsel %vm908, %v1892, 0
        %v1897 = vsel %vm908, %v1894, 0
        %1899 = vmatprep.subr.mxu0 0.0
        %1900 = vmatpush1.xpose.msra.mxu0 0.0
        %1901 = vmatprep.subr.mxu0 0.0
        %1902 = vmatpush1.xpose.msra.mxu0 0.0
        %1903 = vmatprep.subr.mxu0 0.0
        %1904 = vmatpush1.xpose.msra.mxu0 0.0
        %1905 = vmatprep.subr.mxu0 0.0
        %1906 = vmatpush1.xpose.msra.mxu0 0.0
        %1907 = vmatprep.subr.mxu0 0.0
        %1908 = vmatpush1.xpose.msra.mxu0 0.0
        %1909 = vmatprep.subr.mxu0 0.0
        %1910 = vmatpush1.xpose.msra.mxu0 0.0
        %1911 = vmatprep.subr.mxu0 0.0
        %1912 = vmatpush1.xpose.msra.mxu0 0.0
        %1913 = vmatprep.subr.mxu0 0.0
        %1914 = vmatpush1.xpose.msra.mxu0 0.0
        %1915 = vmatprep.subr.mxu0 0.0
        %1916 = vmatpush1.xpose.msra.mxu0 0.0
        %1917 = vmatprep.subr.mxu0 0.0
        %1918 = vmatpush1.xpose.msra.mxu0 0.0
        %1919 = vmatprep.subr.mxu0 0.0
        %1920 = vmatpush1.xpose.msra.mxu0 0.0
        %1921 = vmatprep.subr.mxu0 0.0
        %1922 = vmatpush1.xpose.msra.mxu0 0.0
        %1923 = vmatprep.subr.mxu0 0.0
        %1924 = vmatpush1.xpose.msra.mxu0 0.0
        %1925 = vmatprep.subr.mxu0 0.0
        %1926 = vmatpush1.xpose.msra.mxu0 0.0
        %1927 = vmatprep.subr.mxu0 0.0
        %1928 = vmatpush1.xpose.msra.mxu0 0.0
        %1929 = vmatprep.subr.mxu0 0.0
        %1930 = vmatpush1.xpose.msra.mxu0 %v1897
        %1931 = vmatprep.subr.mxu0 0.0
        %1932 = vmatpush2.xpose.msra.mxu0 0.0
        %1933 = vmatprep.subr.mxu0 0.0
        %1934 = vmatpush2.xpose.msra.mxu0 0.0
        %1935 = vmatprep.subr.mxu0 0.0
        %1936 = vmatpush2.xpose.msra.mxu0 0.0
        %1937 = vmatprep.subr.mxu0 0.0
        %1938 = vmatpush2.xpose.msra.mxu0 0.0
        %1939 = vmatprep.subr.mxu0 0.0
        %1940 = vmatpush2.xpose.msra.mxu0 0.0
        %1941 = vmatprep.subr.mxu0 0.0
        %1942 = vmatpush2.xpose.msra.mxu0 0.0
        %1943 = vmatprep.subr.mxu0 0.0
        %1944 = vmatpush2.xpose.msra.mxu0 0.0
        %1945 = vmatprep.subr.mxu0 0.0
        %1946 = vmatpush2.xpose.msra.mxu0 0.0
        %1947 = vmatprep.subr.mxu0 0.0
        %1948 = vmatpush2.xpose.msra.mxu0 0.0
        %1949 = vmatprep.subr.mxu0 0.0
        %1950 = vmatpush2.xpose.msra.mxu0 0.0
        %1951 = vmatprep.subr.mxu0 0.0
        %1952 = vmatpush2.xpose.msra.mxu0 0.0
        %1953 = vmatprep.subr.mxu0 0.0
        %1954 = vmatpush2.xpose.msra.mxu0 0.0
        %1955 = vmatprep.subr.mxu0 0.0
        %1956 = vmatpush2.xpose.msra.mxu0 0.0
        %1957 = vmatprep.subr.mxu0 0.0
        %1958 = vmatpush2.xpose.msra.mxu0 0.0
        %1959 = vmatprep.subr.mxu0 0.0
        %1960 = vmatpush2.xpose.msra.mxu0 0.0
        %1961 = vmatprep.subr.mxu0 0.0
        %1962 = vmatpush2.xpose.msra.mxu0 0.0
        %1963 = vmatprep.mubr.f32.mxu0 0.0
        %1964 = vmatmul.mubr.f32.gmra.mxu0 %v1895
        %v1965 = vpop.f32.mrf.mxu0
        %v1966 = vadd.f32 0.0, %v1965
        %v1967 = vpop.f32.mrf.mxu0
        %1968 = vdwg.mxu0
        %1969 = vrot.lane.b32.xlu0 %v735, 104
        %v1970 = vpop.permute.xlu0 %1969
        %1971 = vrot.lane.b32.xlu0 %v819, 104
        %v1972 = vpop.permute.xlu0 %1971
        %v1973 = vsel %vm908, %v1970, 0
        %v1975 = vsel %vm908, %v1972, 0
        %1977 = vmatprep.subr.mxu0 0.0
        %1978 = vmatpush1.xpose.msra.mxu0 0.0
        %1979 = vmatprep.subr.mxu0 0.0
        %1980 = vmatpush1.xpose.msra.mxu0 0.0
        %1981 = vmatprep.subr.mxu0 0.0
        %1982 = vmatpush1.xpose.msra.mxu0 0.0
        %1983 = vmatprep.subr.mxu0 0.0
        %1984 = vmatpush1.xpose.msra.mxu0 0.0
        %1985 = vmatprep.subr.mxu0 0.0
        %1986 = vmatpush1.xpose.msra.mxu0 0.0
        %1987 = vmatprep.subr.mxu0 0.0
        %1988 = vmatpush1.xpose.msra.mxu0 0.0
        %1989 = vmatprep.subr.mxu0 0.0
        %1990 = vmatpush1.xpose.msra.mxu0 0.0
        %1991 = vmatprep.subr.mxu0 0.0
        %1992 = vmatpush1.xpose.msra.mxu0 0.0
        %1993 = vmatprep.subr.mxu0 0.0
        %1994 = vmatpush1.xpose.msra.mxu0 0.0
        %1995 = vmatprep.subr.mxu0 0.0
        %1996 = vmatpush1.xpose.msra.mxu0 0.0
        %1997 = vmatprep.subr.mxu0 0.0
        %1998 = vmatpush1.xpose.msra.mxu0 0.0
        %1999 = vmatprep.subr.mxu0 0.0
        %2000 = vmatpush1.xpose.msra.mxu0 0.0
        %2001 = vmatprep.subr.mxu0 0.0
        %2002 = vmatpush1.xpose.msra.mxu0 0.0
        %2003 = vmatprep.subr.mxu0 0.0
        %2004 = vmatpush1.xpose.msra.mxu0 0.0
        %2005 = vmatprep.subr.mxu0 0.0
        %2006 = vmatpush1.xpose.msra.mxu0 0.0
        %2007 = vmatprep.subr.mxu0 0.0
        %2008 = vmatpush1.xpose.msra.mxu0 %v1975
        %2009 = vmatprep.subr.mxu0 0.0
        %2010 = vmatpush2.xpose.msra.mxu0 0.0
        %2011 = vmatprep.subr.mxu0 0.0
        %2012 = vmatpush2.xpose.msra.mxu0 0.0
        %2013 = vmatprep.subr.mxu0 0.0
        %2014 = vmatpush2.xpose.msra.mxu0 0.0
        %2015 = vmatprep.subr.mxu0 0.0
        %2016 = vmatpush2.xpose.msra.mxu0 0.0
        %2017 = vmatprep.subr.mxu0 0.0
        %2018 = vmatpush2.xpose.msra.mxu0 0.0
        %2019 = vmatprep.subr.mxu0 0.0
        %2020 = vmatpush2.xpose.msra.mxu0 0.0
        %2021 = vmatprep.subr.mxu0 0.0
        %2022 = vmatpush2.xpose.msra.mxu0 0.0
        %2023 = vmatprep.subr.mxu0 0.0
        %2024 = vmatpush2.xpose.msra.mxu0 0.0
        %2025 = vmatprep.subr.mxu0 0.0
        %2026 = vmatpush2.xpose.msra.mxu0 0.0
        %2027 = vmatprep.subr.mxu0 0.0
        %2028 = vmatpush2.xpose.msra.mxu0 0.0
        %2029 = vmatprep.subr.mxu0 0.0
        %2030 = vmatpush2.xpose.msra.mxu0 0.0
        %2031 = vmatprep.subr.mxu0 0.0
        %2032 = vmatpush2.xpose.msra.mxu0 0.0
        %2033 = vmatprep.subr.mxu0 0.0
        %2034 = vmatpush2.xpose.msra.mxu0 0.0
        %2035 = vmatprep.subr.mxu0 0.0
        %2036 = vmatpush2.xpose.msra.mxu0 0.0
        %2037 = vmatprep.subr.mxu0 0.0
        %2038 = vmatpush2.xpose.msra.mxu0 0.0
        %2039 = vmatprep.subr.mxu0 0.0
        %2040 = vmatpush2.xpose.msra.mxu0 0.0
        %2041 = vmatprep.mubr.f32.mxu0 0.0
        %2042 = vmatmul.mubr.f32.gmra.mxu0 %v1973
        %v2043 = vpop.f32.mrf.mxu0
        %v2044 = vadd.f32 0.0, %v2043
        %v2045 = vpop.f32.mrf.mxu0
        %2046 = vdwg.mxu0
        %v2047 = vsel %vm908, %v1966, -inf
        %2048 = vmax.xlane.f32.xlu0 %v2047
        %v2049 = vpop.xlane.xlu0 %2048
        %v2050 = vsel %vm908, %v2044, -inf
        %2051 = vmax.xlane.f32.xlu0 %v2050
        %v2052 = vpop.xlane.xlu0 %2051
        %v2053 = vsub.f32 %v1966, %v2049
        %v2054 = vsub.f32 %v2044, %v2052
        %v2055 = vmul.f32 %v2053, 1.442695
        %v2056 = vpow.pop %v2055
        %v2057 = vmul.f32 %v2054, 1.442695
        %v2058 = vpow.pop %v2057
        %v2059 = vsel %vm908, %v2056, 0.0
        %2060 = vadd.xlane.f32.xlu0 %v2059
        %v2061 = vpop.xlane.xlu0 %2060
        %v2062 = vsel %vm908, %v2058, 0.0
        %2063 = vadd.xlane.f32.xlu0 %v2062
        %v2064 = vpop.xlane.xlu0 %2063
        %v2065 = vrcp.pop %v2061
        %v2066 = vrcp.pop %v2064
        %v2067 = vmul.f32 %v2056, %v2065
        %v2068 = vmul.f32 %v2058, %v2066
        %2069 = vrot.lane.b32.xlu0 %v900, 104
        %v2070 = vpop.permute.xlu0 %2069
        %v2073 = vsel %vm908, %v2067, 0
        %2075 = vmatprep.subr.mxu0 0.0
        %2076 = vmatpush1.msra.mxu0 0.0
        %2077 = vmatprep.subr.mxu0 0.0
        %2078 = vmatpush1.msra.mxu0 0.0
        %2079 = vmatprep.subr.mxu0 0.0
        %2080 = vmatpush1.msra.mxu0 0.0
        %2081 = vmatprep.subr.mxu0 0.0
        %2082 = vmatpush1.msra.mxu0 0.0
        %2083 = vmatprep.subr.mxu0 0.0
        %2084 = vmatpush1.msra.mxu0 0.0
        %2085 = vmatprep.subr.mxu0 0.0
        %2086 = vmatpush1.msra.mxu0 0.0
        %2087 = vmatprep.subr.mxu0 0.0
        %2088 = vmatpush1.msra.mxu0 0.0
        %2089 = vmatprep.subr.mxu0 0.0
        %2090 = vmatpush1.msra.mxu0 0.0
        %2091 = vmatprep.subr.mxu0 0.0
        %2092 = vmatpush1.msra.mxu0 0.0
        %2093 = vmatprep.subr.mxu0 0.0
        %2094 = vmatpush1.msra.mxu0 0.0
        %2095 = vmatprep.subr.mxu0 0.0
        %2096 = vmatpush1.msra.mxu0 0.0
        %2097 = vmatprep.subr.mxu0 0.0
        %2098 = vmatpush1.msra.mxu0 0.0
        %2099 = vmatprep.subr.mxu0 0.0
        %2100 = vmatpush1.msra.mxu0 0.0
        %2101 = vmatprep.subr.mxu0 0.0
        %2102 = vmatpush1.msra.mxu0 0.0
        %2103 = vmatprep.subr.mxu0 0.0
        %2104 = vmatpush1.msra.mxu0 0.0
        %2105 = vmatprep.subr.mxu0 0.0
        %2106 = vmatpush1.msra.mxu0 %v2070
        %2107 = vmatprep.subr.mxu0 0.0
        %2108 = vmatpush2.msra.mxu0 0.0
        %2109 = vmatprep.subr.mxu0 0.0
        %2110 = vmatpush2.msra.mxu0 0.0
        %2111 = vmatprep.subr.mxu0 0.0
        %2112 = vmatpush2.msra.mxu0 0.0
        %2113 = vmatprep.subr.mxu0 0.0
        %2114 = vmatpush2.msra.mxu0 0.0
        %2115 = vmatprep.subr.mxu0 0.0
        %2116 = vmatpush2.msra.mxu0 0.0
        %2117 = vmatprep.subr.mxu0 0.0
        %2118 = vmatpush2.msra.mxu0 0.0
        %2119 = vmatprep.subr.mxu0 0.0
        %2120 = vmatpush2.msra.mxu0 0.0
        %2121 = vmatprep.subr.mxu0 0.0
        %2122 = vmatpush2.msra.mxu0 0.0
        %2123 = vmatprep.subr.mxu0 0.0
        %2124 = vmatpush2.msra.mxu0 0.0
        %2125 = vmatprep.subr.mxu0 0.0
        %2126 = vmatpush2.msra.mxu0 0.0
        %2127 = vmatprep.subr.mxu0 0.0
        %2128 = vmatpush2.msra.mxu0 0.0
        %2129 = vmatprep.subr.mxu0 0.0
        %2130 = vmatpush2.msra.mxu0 0.0
        %2131 = vmatprep.subr.mxu0 0.0
        %2132 = vmatpush2.msra.mxu0 0.0
        %2133 = vmatprep.subr.mxu0 0.0
        %2134 = vmatpush2.msra.mxu0 0.0
        %2135 = vmatprep.subr.mxu0 0.0
        %2136 = vmatpush2.msra.mxu0 0.0
        %2137 = vmatprep.subr.mxu0 0.0
        %2138 = vmatpush2.msra.mxu0 0.0
        %2139 = vmatprep.mubr.f32.mxu0 0.0
        %2140 = vmatmul.mubr.f32.gmra.mxu0 %v2073
        %v2141 = vpop.f32.mrf.mxu0
        %v2142 = vadd.f32 0.0, %v2141
        %v2143 = vpop.f32.mrf.mxu0
        %2144 = vdwg.mxu0
        %2145 = vrot.lane.b32.xlu0 %v905, 104
        %v2146 = vpop.permute.xlu0 %2145
        %v2149 = vsel %vm908, %v2068, 0
        %2151 = vmatprep.subr.mxu0 0.0
        %2152 = vmatpush1.msra.mxu0 0.0
        %2153 = vmatprep.subr.mxu0 0.0
        %2154 = vmatpush1.msra.mxu0 0.0
        %2155 = vmatprep.subr.mxu0 0.0
        %2156 = vmatpush1.msra.mxu0 0.0
        %2157 = vmatprep.subr.mxu0 0.0
        %2158 = vmatpush1.msra.mxu0 0.0
        %2159 = vmatprep.subr.mxu0 0.0
        %2160 = vmatpush1.msra.mxu0 0.0
        %2161 = vmatprep.subr.mxu0 0.0
        %2162 = vmatpush1.msra.mxu0 0.0
        %2163 = vmatprep.subr.mxu0 0.0
        %2164 = vmatpush1.msra.mxu0 0.0
        %2165 = vmatprep.subr.mxu0 0.0
        %2166 = vmatpush1.msra.mxu0 0.0
        %2167 = vmatprep.subr.mxu0 0.0
        %2168 = vmatpush1.msra.mxu0 0.0
        %2169 = vmatprep.subr.mxu0 0.0
        %2170 = vmatpush1.msra.mxu0 0.0
        %2171 = vmatprep.subr.mxu0 0.0
        %2172 = vmatpush1.msra.mxu0 0.0
        %2173 = vmatprep.subr.mxu0 0.0
        %2174 = vmatpush1.msra.mxu0 0.0
        %2175 = vmatprep.subr.mxu0 0.0
        %2176 = vmatpush1.msra.mxu0 0.0
        %2177 = vmatprep.subr.mxu0 0.0
        %2178 = vmatpush1.msra.mxu0 0.0
        %2179 = vmatprep.subr.mxu0 0.0
        %2180 = vmatpush1.msra.mxu0 0.0
        %2181 = vmatprep.subr.mxu0 0.0
        %2182 = vmatpush1.msra.mxu0 %v2146
        %2183 = vmatprep.subr.mxu0 0.0
        %2184 = vmatpush2.msra.mxu0 0.0
        %2185 = vmatprep.subr.mxu0 0.0
        %2186 = vmatpush2.msra.mxu0 0.0
        %2187 = vmatprep.subr.mxu0 0.0
        %2188 = vmatpush2.msra.mxu0 0.0
        %2189 = vmatprep.subr.mxu0 0.0
        %2190 = vmatpush2.msra.mxu0 0.0
        %2191 = vmatprep.subr.mxu0 0.0
        %2192 = vmatpush2.msra.mxu0 0.0
        %2193 = vmatprep.subr.mxu0 0.0
        %2194 = vmatpush2.msra.mxu0 0.0
        %2195 = vmatprep.subr.mxu0 0.0
        %2196 = vmatpush2.msra.mxu0 0.0
        %2197 = vmatprep.subr.mxu0 0.0
        %2198 = vmatpush2.msra.mxu0 0.0
        %2199 = vmatprep.subr.mxu0 0.0
        %2200 = vmatpush2.msra.mxu0 0.0
        %2201 = vmatprep.subr.mxu0 0.0
        %2202 = vmatpush2.msra.mxu0 0.0
        %2203 = vmatprep.subr.mxu0 0.0
        %2204 = vmatpush2.msra.mxu0 0.0
        %2205 = vmatprep.subr.mxu0 0.0
        %2206 = vmatpush2.msra.mxu0 0.0
        %2207 = vmatprep.subr.mxu0 0.0
        %2208 = vmatpush2.msra.mxu0 0.0
        %2209 = vmatprep.subr.mxu0 0.0
        %2210 = vmatpush2.msra.mxu0 0.0
        %2211 = vmatprep.subr.mxu0 0.0
        %2212 = vmatpush2.msra.mxu0 0.0
        %2213 = vmatprep.subr.mxu0 0.0
        %2214 = vmatpush2.msra.mxu0 0.0
        %2215 = vmatprep.mubr.f32.mxu0 0.0
        %2216 = vmatmul.mubr.f32.gmra.mxu0 %v2149
        %v2217 = vpop.f32.mrf.mxu0
        %v2218 = vadd.f32 0.0, %v2217
        %v2219 = vpop.f32.mrf.mxu0
        %2220 = vdwg.mxu0
        %2223 = vrot.lane.b32.xlu0 %v1481, 8
        %v2224 = vpop.permute.xlu0 %2223
        %2225 = vrot.lane.b32.xlu0 %v1558, 8
        %v2226 = vpop.permute.xlu0 %2225
        %2231 = vrot.lane.b32.xlu0 %v1812, 16
        %v2232 = vpop.permute.xlu0 %2231
        %2233 = vrot.lane.b32.xlu0 %v1888, 16
        %v2234 = vpop.permute.xlu0 %2233
        %2239 = vrot.lane.b32.xlu0 %v2142, 24
        %v2240 = vpop.permute.xlu0 %2239
        %2241 = vrot.lane.b32.xlu0 %v2218, 24
        %v2242 = vpop.permute.xlu0 %2241
        %v2245 = vsel %vm908, %v1153, %v2224
        %v2246 = vsel %vm908, %v1226, %v2226
        %vm2247 = vcmask 130048
        %v2248 = vsel %vm2247, %v2245, %v2232
        %v2249 = vsel %vm2247, %v2246, %v2234
        %vm2250 = vcmask 195584
        %v2251 = vsel %vm2250, %v2248, %v2240
        %v2252 = vsel %vm2250, %v2249, %v2242
        %v2253 = vld [vmem:[#allocation5] sm:$0xff]
        %v2254 = vld [vmem:[#allocation5 + $0x8] sm:$0xff]
        %v2255 = vld [vmem:[#allocation5 + $0x10] sm:$0xff]
        %v2256 = vld [vmem:[#allocation5 + $0x18] sm:$0xff]
        %v2257 = vld [vmem:[%s10] sm:$0x1]
        %v2259 = vlaneseq
        %v2260 = vshrl.u32 %v2259, 7
        %v2261 = vsub.s32 0, %v2260
        %v2262 = vrot.slane %v2257, %v2261
        %v2265 = vsel %vm598, %v2251, 0
        %v2268 = vsel %vm598, %v2252, 0
        %2270 = vmatprep.subr.mxu0 0.0
        %2271 = vmatpush1.msra.mxu0 0.0
        %2272 = vmatprep.subr.mxu0 0.0
        %2273 = vmatpush1.msra.mxu0 0.0
        %2274 = vmatprep.subr.mxu0 0.0
        %2275 = vmatpush1.msra.mxu0 0.0
        %2276 = vmatprep.subr.mxu0 0.0
        %2277 = vmatpush1.msra.mxu0 0.0
        %2278 = vmatprep.subr.mxu0 0.0
        %2279 = vmatpush1.msra.mxu0 0.0
        %2280 = vmatprep.subr.mxu0 0.0
        %2281 = vmatpush1.msra.mxu0 0.0
        %2282 = vmatprep.subr.mxu0 0.0
        %2283 = vmatpush1.msra.mxu0 0.0
        %2284 = vmatprep.subr.mxu0 0.0
        %2285 = vmatpush1.msra.mxu0 0.0
        %2286 = vmatprep.subr.mxu0 0.0
        %2287 = vmatpush1.msra.mxu0 0.0
        %2288 = vmatprep.subr.mxu0 0.0
        %2289 = vmatpush1.msra.mxu0 0.0
        %2290 = vmatprep.subr.mxu0 0.0
        %2291 = vmatpush1.msra.mxu0 0.0
        %2292 = vmatprep.subr.mxu0 0.0
        %2293 = vmatpush1.msra.mxu0 0.0
        %2294 = vmatprep.subr.mxu0 0.0
        %2295 = vmatpush1.msra.mxu0 %v2256
        %2296 = vmatprep.subr.mxu0 0.0
        %2297 = vmatpush1.msra.mxu0 %v2255
        %2298 = vmatprep.subr.mxu0 0.0
        %2299 = vmatpush1.msra.mxu0 %v2254
        %2300 = vmatprep.subr.mxu0 0.0
        %2301 = vmatpush1.msra.mxu0 %v2253
        %2302 = vmatprep.subr.mxu0 0.0
        %2303 = vmatpush2.msra.mxu0 0.0
        %2304 = vmatprep.subr.mxu0 0.0
        %2305 = vmatpush2.msra.mxu0 0.0
        %2306 = vmatprep.subr.mxu0 0.0
        %2307 = vmatpush2.msra.mxu0 0.0
        %2308 = vmatprep.subr.mxu0 0.0
        %2309 = vmatpush2.msra.mxu0 0.0
        %2310 = vmatprep.subr.mxu0 0.0
        %2311 = vmatpush2.msra.mxu0 0.0
        %2312 = vmatprep.subr.mxu0 0.0
        %2313 = vmatpush2.msra.mxu0 0.0
        %2314 = vmatprep.subr.mxu0 0.0
        %2315 = vmatpush2.msra.mxu0 0.0
        %2316 = vmatprep.subr.mxu0 0.0
        %2317 = vmatpush2.msra.mxu0 0.0
        %2318 = vmatprep.subr.mxu0 0.0
        %2319 = vmatpush2.msra.mxu0 0.0
        %2320 = vmatprep.subr.mxu0 0.0
        %2321 = vmatpush2.msra.mxu0 0.0
        %2322 = vmatprep.subr.mxu0 0.0
        %2323 = vmatpush2.msra.mxu0 0.0
        %2324 = vmatprep.subr.mxu0 0.0
        %2325 = vmatpush2.msra.mxu0 0.0
        %2326 = vmatprep.subr.mxu0 0.0
        %2327 = vmatpush2.msra.mxu0 0.0
        %2328 = vmatprep.subr.mxu0 0.0
        %2329 = vmatpush2.msra.mxu0 0.0
        %2330 = vmatprep.subr.mxu0 0.0
        %2331 = vmatpush2.msra.mxu0 0.0
        %2332 = vmatprep.subr.mxu0 0.0
        %2333 = vmatpush2.msra.mxu0 0.0
        %2334 = vmatprep.mubr.f32.mxu0 0.0
        %2335 = vmatmul.mubr.f32.gmra.mxu0 %v2265
        %v2336 = vpop.f32.mrf.mxu0
        %v2337 = vadd.f32 %v2262, %v2336
        %v2338 = vpop.f32.mrf.mxu0
        %2339 = vmatprep.mubr.f32.mxu0 0.0
        %2340 = vmatmul.mubr.f32.gmra.mxu0 %v2268
        %v2341 = vpop.f32.mrf.mxu0
        %v2342 = vadd.f32 %v2262, %v2341
        %v2343 = vpop.f32.mrf.mxu0
        %2344 = vdwg.mxu0
        %v2345 = vadd.f32 %v594, %v2337
        %v2346 = vadd.f32 %v595, %v2342
        %v2347 = vld [vmem:[%s11] sm:$0x1]
        %v2348 = vld [vmem:[%s12] sm:$0x1]
        %v2349 = vsel %vm598, %v2345, 0.0
        %2350 = vadd.xlane.f32.xlu0 %v2349
        %v2351 = vpop.xlane.xlu0 %2350
        %v2352 = vsel %vm598, %v2346, 0.0
        %2353 = vadd.xlane.f32.xlu0 %v2352
        %v2354 = vpop.xlane.xlu0 %2353
        %v2355 = vmul.f32 %v2351, %v605
        %v2356 = vmul.f32 %v2354, %v605
        %v2357 = vsub.f32 %v2345, %v2355
        %v2358 = vsub.f32 %v2346, %v2356
        %v2359 = vmul.f32 %v2357, %v2357
        %v2360 = vmul.f32 %v2358, %v2358
        %v2361 = vsel %vm598, %v2359, 0.0
        %2362 = vadd.xlane.f32.xlu0 %v2361
        %v2363 = vpop.xlane.xlu0 %2362
        %v2364 = vsel %vm598, %v2360, 0.0
        %2365 = vadd.xlane.f32.xlu0 %v2364
        %v2366 = vpop.xlane.xlu0 %2365
        %v2367 = vmul.f32 %v2363, %v605
        %v2368 = vmul.f32 %v2366, %v605
        %v2369 = vadd.f32 %v2367, 1e-06
        %v2370 = vadd.f32 %v2368, 1e-06
        %v2371 = vrsqrt.pop %v2369
        %v2372 = vrsqrt.pop %v2370
        %v2373 = vmul.f32 %v2357, %v2371
        %v2374 = vmul.f32 %v2358, %v2372
        %v2376 = vlaneseq
        %v2377 = vshrl.u32 %v2376, 7
        %v2378 = vsub.s32 0, %v2377
        %v2379 = vrot.slane %v2347, %v2378
        %v2381 = vmul.f32 %v2373, %v2379
        %v2382 = vmul.f32 %v2374, %v2379
        %v2384 = vlaneseq
        %v2385 = vshrl.u32 %v2384, 7
        %v2386 = vsub.s32 0, %v2385
        %v2387 = vrot.slane %v2348, %v2386
        %v2389 = vadd.f32 %v2381, %v2387
        %v2390 = vadd.f32 %v2382, %v2387
        %v2391 = vld [vmem:[#allocation7] sm:$0xff]
        %v2392 = vld [vmem:[#allocation7 + $0x8] sm:$0xff]
        %v2393 = vld [vmem:[#allocation7 + $0x10] sm:$0xff]
        %v2394 = vld [vmem:[#allocation7 + $0x18] sm:$0xff]
        %v2395 = vld [vmem:[%s14] sm:$0x1]
        %v2397 = vlaneseq
        %v2398 = vshrl.u32 %v2397, 7
        %v2399 = vsub.s32 0, %v2398
        %v2400 = vrot.slane %v2395, %v2399
        %v2403 = vsel %vm598, %v2389, 0
        %v2406 = vsel %vm598, %v2390, 0
        %2408 = vmatprep.subr.mxu0 0.0
        %2409 = vmatpush1.msra.mxu0 0.0
        %2410 = vmatprep.subr.mxu0 0.0
        %2411 = vmatpush1.msra.mxu0 0.0
        %2412 = vmatprep.subr.mxu0 0.0
        %2413 = vmatpush1.msra.mxu0 0.0
        %2414 = vmatprep.subr.mxu0 0.0
        %2415 = vmatpush1.msra.mxu0 0.0
        %2416 = vmatprep.subr.mxu0 0.0
        %2417 = vmatpush1.msra.mxu0 0.0
        %2418 = vmatprep.subr.mxu0 0.0
        %2419 = vmatpush1.msra.mxu0 0.0
        %2420 = vmatprep.subr.mxu0 0.0
        %2421 = vmatpush1.msra.mxu0 0.0
        %2422 = vmatprep.subr.mxu0 0.0
        %2423 = vmatpush1.msra.mxu0 0.0
        %2424 = vmatprep.subr.mxu0 0.0
        %2425 = vmatpush1.msra.mxu0 0.0
        %2426 = vmatprep.subr.mxu0 0.0
        %2427 = vmatpush1.msra.mxu0 0.0
        %2428 = vmatprep.subr.mxu0 0.0
        %2429 = vmatpush1.msra.mxu0 0.0
        %2430 = vmatprep.subr.mxu0 0.0
        %2431 = vmatpush1.msra.mxu0 0.0
        %2432 = vmatprep.subr.mxu0 0.0
        %2433 = vmatpush1.msra.mxu0 %v2394
        %2434 = vmatprep.subr.mxu0 0.0
        %2435 = vmatpush1.msra.mxu0 %v2393
        %2436 = vmatprep.subr.mxu0 0.0
        %2437 = vmatpush1.msra.mxu0 %v2392
        %2438 = vmatprep.subr.mxu0 0.0
        %2439 = vmatpush1.msra.mxu0 %v2391
        %2440 = vmatprep.subr.mxu0 0.0
        %2441 = vmatpush2.msra.mxu0 0.0
        %2442 = vmatprep.subr.mxu0 0.0
        %2443 = vmatpush2.msra.mxu0 0.0
        %2444 = vmatprep.subr.mxu0 0.0
        %2445 = vmatpush2.msra.mxu0 0.0
        %2446 = vmatprep.subr.mxu0 0.0
        %2447 = vmatpush2.msra.mxu0 0.0
        %2448 = vmatprep.subr.mxu0 0.0
        %2449 = vmatpush2.msra.mxu0 0.0
        %2450 = vmatprep.subr.mxu0 0.0
        %2451 = vmatpush2.msra.mxu0 0.0
        %2452 = vmatprep.subr.mxu0 0.0
        %2453 = vmatpush2.msra.mxu0 0.0
        %2454 = vmatprep.subr.mxu0 0.0
        %2455 = vmatpush2.msra.mxu0 0.0
        %2456 = vmatprep.subr.mxu0 0.0
        %2457 = vmatpush2.msra.mxu0 0.0
        %2458 = vmatprep.subr.mxu0 0.0
        %2459 = vmatpush2.msra.mxu0 0.0
        %2460 = vmatprep.subr.mxu0 0.0
        %2461 = vmatpush2.msra.mxu0 0.0
        %2462 = vmatprep.subr.mxu0 0.0
        %2463 = vmatpush2.msra.mxu0 0.0
        %2464 = vmatprep.subr.mxu0 0.0
        %2465 = vmatpush2.msra.mxu0 0.0
        %2466 = vmatprep.subr.mxu0 0.0
        %2467 = vmatpush2.msra.mxu0 0.0
        %2468 = vmatprep.subr.mxu0 0.0
        %2469 = vmatpush2.msra.mxu0 0.0
        %2470 = vmatprep.subr.mxu0 0.0
        %2471 = vmatpush2.msra.mxu0 0.0
        %2472 = vmatprep.mubr.f32.mxu0 0.0
        %2473 = vmatmul.mubr.f32.gmra.mxu0 %v2403
        %v2474 = vpop.f32.mrf.mxu0
        %v2475 = vadd.f32 %v2400, %v2474
        %v2476 = vpop.f32.mrf.mxu0
        %2477 = vmatprep.mubr.f32.mxu0 0.0
        %2478 = vmatmul.mubr.f32.gmra.mxu0 %v2406
        %v2479 = vpop.f32.mrf.mxu0
        %v2480 = vadd.f32 %v2400, %v2479
        %v2481 = vpop.f32.mrf.mxu0
        %2482 = vdwg.mxu0
        %v2483 = vmul.f32 %v2475, 0.5
        %v2484 = vmul.f32 %v2480, 0.5
        %v2485 = vmul.f32 %v2475, 0.044715
        %v2486 = vmul.f32 %v2480, 0.044715
        %v2487 = vmul.f32 %v2485, %v2475
        %v2488 = vmul.f32 %v2486, %v2480
        %v2489 = vmul.f32 %v2487, %v2475
        %v2490 = vmul.f32 %v2488, %v2480
        %v2491 = vadd.f32 %v2475, %v2489
        %v2492 = vadd.f32 %v2480, %v2490
        %v2493 = vmul.f32 %v2491, 0.7978846
        %v2494 = vmul.f32 %v2492, 0.7978846
        %v2495 = vtanh.pop %v2493
        %v2496 = vtanh.pop %v2494
        %v2497 = vadd.f32 %v2495, 1.0
        %v2498 = vadd.f32 %v2496, 1.0
        %v2499 = vmul.f32 %v2483, %v2497
        %v2500 = vmul.f32 %v2484, %v2498
        %v2501 = vld [vmem:[%s15] sm:$0xff]
        %v2502 = vld [vmem:[%s15 + $0x8] sm:$0xff]
        %v2503 = vld [vmem:[%s15 + $0x10] sm:$0xff]
        %v2504 = vld [vmem:[%s15 + $0x18] sm:$0xff]
        %v2505 = vld [vmem:[%s15 + $0x20] sm:$0xff]
        %v2506 = vld [vmem:[%s15 + $0x28] sm:$0xff]
        %v2507 = vld [vmem:[%s15 + $0x30] sm:$0xff]
        %v2508 = vld [vmem:[%s15 + $0x38] sm:$0xff]
        %v2509 = vld [vmem:[%s16] sm:$0x1]
        %v2511 = vlaneseq
        %v2512 = vshrl.u32 %v2511, 7
        %v2513 = vsub.s32 0, %v2512
        %v2514 = vrot.slane %v2509, %v2513
        %vm2516 = vcmask 523264
        %v2518 = vsel %vm2516, %v2499, 0
        %v2521 = vsel %vm2516, %v2500, 0
        %2523 = vmatprep.subr.mxu0 0.0
        %2524 = vmatpush1.msra.mxu0 0.0
        %2525 = vmatprep.subr.mxu0 0.0
        %2526 = vmatpush1.msra.mxu0 0.0
        %2527 = vmatprep.subr.mxu0 0.0
        %2528 = vmatpush1.msra.mxu0 0.0
        %2529 = vmatprep.subr.mxu0 0.0
        %2530 = vmatpush1.msra.mxu0 0.0
        %2531 = vmatprep.subr.mxu0 0.0
        %2532 = vmatpush1.msra.mxu0 0.0
        %2533 = vmatprep.subr.mxu0 0.0
        %2534 = vmatpush1.msra.mxu0 0.0
        %2535 = vmatprep.subr.mxu0 0.0
        %2536 = vmatpush1.msra.mxu0 0.0
        %2537 = vmatprep.subr.mxu0 0.0
        %2538 = vmatpush1.msra.mxu0 0.0
        %2539 = vmatprep.subr.mxu0 0.0
        %2540 = vmatpush1.msra.mxu0 %v2508
        %2541 = vmatprep.subr.mxu0 0.0
        %2542 = vmatpush1.msra.mxu0 %v2507
        %2543 = vmatprep.subr.mxu0 0.0
        %2544 = vmatpush1.msra.mxu0 %v2506
        %2545 = vmatprep.subr.mxu0 0.0
        %2546 = vmatpush1.msra.mxu0 %v2505
        %2547 = vmatprep.subr.mxu0 0.0
        %2548 = vmatpush1.msra.mxu0 %v2504
        %2549 = vmatprep.subr.mxu0 0.0
        %2550 = vmatpush1.msra.mxu0 %v2503
        %2551 = vmatprep.subr.mxu0 0.0
        %2552 = vmatpush1.msra.mxu0 %v2502
        %2553 = vmatprep.subr.mxu0 0.0
        %2554 = vmatpush1.msra.mxu0 %v2501
        %2555 = vmatprep.subr.mxu0 0.0
        %2556 = vmatpush2.msra.mxu0 0.0
        %2557 = vmatprep.subr.mxu0 0.0
        %2558 = vmatpush2.msra.mxu0 0.0
        %2559 = vmatprep.subr.mxu0 0.0
        %2560 = vmatpush2.msra.mxu0 0.0
        %2561 = vmatprep.subr.mxu0 0.0
        %2562 = vmatpush2.msra.mxu0 0.0
        %2563 = vmatprep.subr.mxu0 0.0
        %2564 = vmatpush2.msra.mxu0 0.0
        %2565 = vmatprep.subr.mxu0 0.0
        %2566 = vmatpush2.msra.mxu0 0.0
        %2567 = vmatprep.subr.mxu0 0.0
        %2568 = vmatpush2.msra.mxu0 0.0
        %2569 = vmatprep.subr.mxu0 0.0
        %2570 = vmatpush2.msra.mxu0 0.0
        %2571 = vmatprep.subr.mxu0 0.0
        %2572 = vmatpush2.msra.mxu0 0.0
        %2573 = vmatprep.subr.mxu0 0.0
        %2574 = vmatpush2.msra.mxu0 0.0
        %2575 = vmatprep.subr.mxu0 0.0
        %2576 = vmatpush2.msra.mxu0 0.0
        %2577 = vmatprep.subr.mxu0 0.0
        %2578 = vmatpush2.msra.mxu0 0.0
        %2579 = vmatprep.subr.mxu0 0.0
        %2580 = vmatpush2.msra.mxu0 0.0
        %2581 = vmatprep.subr.mxu0 0.0
        %2582 = vmatpush2.msra.mxu0 0.0
        %2583 = vmatprep.subr.mxu0 0.0
        %2584 = vmatpush2.msra.mxu0 0.0
        %2585 = vmatprep.subr.mxu0 0.0
        %2586 = vmatpush2.msra.mxu0 0.0
        %2587 = vmatprep.mubr.f32.mxu0 0.0
        %2588 = vmatmul.mubr.f32.gmra.mxu0 %v2518
        %v2589 = vpop.f32.mrf.mxu0
        %v2590 = vadd.f32 %v2514, %v2589
        %v2591 = vpop.f32.mrf.mxu0
        %2592 = vmatprep.mubr.f32.mxu0 0.0
        %2593 = vmatmul.mubr.f32.gmra.mxu0 %v2521
        %v2594 = vpop.f32.mrf.mxu0
        %v2595 = vadd.f32 %v2514, %v2594
        %v2596 = vpop.f32.mrf.mxu0
        %2597 = vdwg.mxu0
        %v2598 = vadd.f32 %v2345, %v2590
        %v2599 = vadd.f32 %v2346, %v2595
        %2600 = vst.msk [vmem:[%s586] sm:$0xff] %vm598, %v2598
        %2601 = vst.msk [vmem:[%s586 + $0x8] sm:$0xff] %vm598, %v2599
        %s2602 = sand.u32 %s403, 1
        %s2603 = scalar_lea.sflag [#allocation4], %s2602
        %s2604 = sand.u32 %s403, 1
        %s2605 = smul.addr %s2604, 16
        %s2606 = scalar_lea.vmem [#allocation8], %s2605
        // Predicated region
        $region101: #{tpu_custom_call.1} parent=87 // pred_check
          %p2607 = pneg %p413
        $region102: #{tpu_custom_call.1} parent=87 // pred_check_branch
          %2609 = sbr.rel (%p2607) target = $region104
        $region103: #{tpu_custom_call.1} parent=87 // pred_region
          %s2610 = smul.u32 2, %s33
          %s2612 = ssub.s32 256, 256
          %2613 = vsyncadd %s2603, %s2612
          %s2614 = smul.addr %s2610, 128
          %s2615 = scalar_lea.hbm %s17, %s2614
          %s2616 = sshll.u32 %s2606, 4
          %s2617 = int_to_ptr.vmem [resolvable:$true] %s2616
          %2622 = dma.vmem_to_hbm [thread:$0]  %s2617, 256, %s2615, %s2603, 128, 128, 8
        $region104: #{tpu_custom_call.1} parent=87 // pred_fallthru
          _
      $region88: #{tpu_custom_call.1} parent=5 // pred_fallthru
        _
      %p2623 = scmp.le.s32.totalorder 2, %s28
      // Predicated region
      $region105: #{tpu_custom_call.1} parent=5 // pred_check
        %p2624 = pneg %p2623
      $region106: #{tpu_custom_call.1} parent=5 // pred_check_branch
        %2626 = sbr.rel (%p2624) target = $region108
      $region107: #{tpu_custom_call.1} parent=5 // pred_region
        %s2627 = ssub.s32 %s28, 2
        // Predicated region
        $region109: #{tpu_custom_call.1} parent=107 // pred_check
          %p2628 = pneg %p419
        $region110: #{tpu_custom_call.1} parent=107 // pred_check_branch
          %2630 = sbr.rel (%p2628) target = $region112
        $region111: #{tpu_custom_call.1} parent=107 // pred_region
          %s2631 = sand.u32 %s404, 1
          %s2632 = scalar_lea.sflag [#allocation4], %s2631
          %s2633 = sand.u32 %s404, 1
          %s2634 = smul.addr %s2633, 16
          %s2635 = scalar_lea.vmem [#allocation8], %s2634
          %2636 = dma.done %s2632, 256
        $region112: #{tpu_custom_call.1} parent=107 // pred_fallthru
          _
      $region108: #{tpu_custom_call.1} parent=5 // pred_fallthru
        _
    $region6: #{tpu_custom_call.1} parent=1 // loop_footer
      %s32 = sadd.s32 1, %s28
    $region7: #{tpu_custom_call.1} parent=1 // loop_footer_branch
      %27 = sbr.rel target = $region3
    $region8: #{tpu_custom_call.1} parent=1 // loop_exit
      _
    %2637 = vsyncpa [#allocation3], 1
    %s2638 = scalar_lea.sflag [#allocation3], 1
    %2639 = vsyncpa %s2638, 1
    %2640 = vsyncpa [#allocation6], 1
    %2641 = vsyncpa [#allocation4], 1
    %s2642 = scalar_lea.sflag [#allocation4], 1
    %2643 = vsyncpa %s2642, 1

</llo_original>
